<compile_context>
chip_gen: v6e
topology: v6e:2x2x1
jax: 0.10.0
libtpu: 0.0.40
codegen_flags: <defaults>
</compile_context>

<pallas_src>
import functools

import jax
import jax.numpy as jnp
from jax.experimental import pallas as pl
from jax.experimental.pallas import tpu as pltpu

EPS = 1e-5
LANE = 128


def _ceil_to(x, m):
    return (x + m - 1) // m * m


def _default_vmem_limit():
    # v5e/v6e: 128 MiB VMEM per TensorCore; v7x: 64 MiB. Derive the scoped limit
    # from the chip, with a conservative fallback that is safe everywhere.
    try:
        cap = int(pltpu.get_tpu_info().vmem_capacity_bytes)
    except Exception:
        cap = 64 * 1024 * 1024
    return min(cap * 3 // 4, 100 * 1024 * 1024)


_VMEM_LIMIT = _default_vmem_limit()


# ---------------------------------------------------------------------------
# Conv kernel: in-kernel halo + patches, bf16 MXU matmul, f32 BN partial stats.
# Optionally fuses a preceding  y*scale + shift ; ReLU  (bn1 apply) in front.
# ---------------------------------------------------------------------------
def _make_conv_kernel(h, w, fuse):
    def kernel(*args):
        if fuse:
            x_ref, sc_ref, sh_ref, w_ref, y_ref, st_ref, pad_ref = args
        else:
            x_ref, w_ref, y_ref, st_ref, pad_ref = args
        cin = x_ref.shape[-1]

        a = x_ref[0]                                            # (H, W, Cin)
        if fuse:
            # Fused bn1-apply + ReLU on the incoming (bf16) conv1 output.
            a2 = a.reshape(h * w, cin).astype(jnp.float32)
            a2 = jnp.maximum(a2 * sc_ref[...] + sh_ref[...], 0.0)
            a = a2.reshape(h, w, cin)

        # Zero-halo tile in VMEM: the border rows/cols are the conv's padding=1.
        pad_ref[...] = jnp.zeros_like(pad_ref)
        pad_ref[1:h + 1, 1:w + 1, :] = a.astype(pad_ref.dtype)
        xp = pad_ref[...]                                       # (H+2, W+2, Cin)

        # 3x3 patches built in-register: tap-major, channel-minor (matches the
        # weight layout produced by _prep_weight).
        taps = [xp[ky:ky + h, kx:kx + w, :]
                for ky in range(3) for kx in range(3)]
        p = jnp.concatenate(taps, axis=-1).reshape(h * w, 9 * cin)   # bf16

        y = jnp.dot(p, w_ref[...], preferred_element_type=jnp.float32)  # (HW, Cp)
        y_ref[0] = y.reshape(h, w, y.shape[-1]).astype(y_ref.dtype)     # bf16 store

        # Per-image BN partials from the f32 accumulator:
        # row 0 = sum(y), row 1 = centered sum-of-squares (for Chan's combine).
        s1 = jnp.sum(y, axis=0, keepdims=True)
        mu = s1 * (1.0 / (h * w))
        d = y - mu
        m2 = jnp.sum(d * d, axis=0, keepdims=True)
        st_ref[0] = jnp.concatenate([s1, m2], axis=0)
    return kernel


def _conv3x3_stats(x4, w_mat, cp, scale=None, shift=None):
    """3x3 / stride-1 / pad-1 conv of an NHWC activation, one image per step."""
    n, h, w, cin = x4.shape
    fuse = scale is not None
    kernel = _make_conv_kernel(h, w, fuse)

    in_specs = [pl.BlockSpec((1, h, w, cin), lambda i: (i, 0, 0, 0))]
    operands = [x4]
    if fuse:
        chan = pl.BlockSpec((1, cp), lambda i: (0, 0))
        in_specs += [chan, chan]
        operands += [scale, shift]
    in_specs.append(pl.BlockSpec((9 * cin, cp), lambda i: (0, 0)))
    operands.append(w_mat)

    flops = 2 * n * h * w * 9 * cin * cp
    bytes_accessed = (x4.size * x4.dtype.itemsize          # activation read
                      + w_mat.size * 2                     # bf16 weights
                      + n * h * w * cp * 2                 # bf16 y write
                      + n * 2 * cp * 4)                    # stats write

    return pl.pallas_call(
        kernel,
        out_shape=(jax.ShapeDtypeStruct((n, h, w, cp), jnp.bfloat16),
                   jax.ShapeDtypeStruct((n, 2, cp), jnp.float32)),
        grid=(n,),
        in_specs=in_specs,
        out_specs=(pl.BlockSpec((1, h, w, cp), lambda i: (i, 0, 0, 0)),
                   pl.BlockSpec((1, 2, cp), lambda i: (i, 0, 0))),
        scratch_shapes=[pltpu.VMEM((h + 2, w + 2, cin), jnp.bfloat16)],
        compiler_params=pltpu.CompilerParams(
            dimension_semantics=("parallel",),      # independent images -> 2 TCs on v7x
            vmem_limit_bytes=_VMEM_LIMIT),
        cost_estimate=pl.CostEstimate(flops=flops, transcendentals=0,
                                      bytes_accessed=bytes_accessed),
    )(*operands)


# ---------------------------------------------------------------------------
# Final elementwise pass: bn2-apply + residual add + ReLU, big row tiles.
# ---------------------------------------------------------------------------
def _make_bn_add_relu_kernel(c_out):
    def kernel(y_ref, sc_ref, sh_ref, r_ref, o_ref):
        z = y_ref[...].astype(jnp.float32) * sc_ref[...] + sh_ref[...]
        o_ref[...] = jnp.maximum(z[:, :c_out] + r_ref[...], 0.0).astype(o_ref.dtype)
    return kernel


def _bn_add_relu(y2, scale, shift, identity, c_out):
    m, cp = y2.shape
    tm = min(2048, _ceil_to(m, 8))          # mem-bound pass: biggest easy tile
    mp = _ceil_to(m, tm)
    if mp != m:
        y2 = jnp.pad(y2, ((0, mp - m), (0, 0)))
        identity = jnp.pad(identity, ((0, mp - m), (0, 0)))
    out = pl.pallas_call(
        _make_bn_add_relu_kernel(c_out),
        out_shape=jax.ShapeDtypeStruct((mp, c_out), jnp.float32),
        grid=(mp // tm,),
        in_specs=[pl.BlockSpec((tm, cp), lambda i: (i, 0)),
                  pl.BlockSpec((1, cp), lambda i: (0, 0)),
                  pl.BlockSpec((1, cp), lambda i: (0, 0)),
                  pl.BlockSpec((tm, c_out), lambda i: (i, 0))],
        out_specs=pl.BlockSpec((tm, c_out), lambda i: (i, 0)),
        compiler_params=pltpu.CompilerParams(
            dimension_semantics=("parallel",),
            vmem_limit_bytes=_VMEM_LIMIT),
    )(y2, scale, shift, identity)
    return out[:m]


# ---------------------------------------------------------------------------
# XLA glue: weight layout and BN stat finalization.
# ---------------------------------------------------------------------------
def _prep_weight(w_oihw, cin_pad, cout_pad):
    """torch (Cout, Cin, 3, 3) -> bf16 (9*cin_pad, cout_pad), tap-major rows."""
    c_out, c_in = w_oihw.shape[0], w_oihw.shape[1]
    wt = jnp.transpose(w_oihw, (2, 3, 1, 0))                 # (3, 3, Cin, Cout)
    wt = jnp.pad(wt, ((0, 0), (0, 0),
                      (0, cin_pad - c_in), (0, cout_pad - c_out)))
    return wt.reshape(9 * cin_pad, cout_pad).astype(jnp.bfloat16)


def _scale_shift(stats, gamma, beta, hw, cp):
    """Exact global batch mean/var via Chan's parallel combine, folded with
    gamma/beta into per-channel scale/shift (train-mode, biased variance)."""
    t = stats.shape[0]
    m_total = t * hw
    s1 = stats[:, 0, :]                                      # (T, Cp) sums
    m2 = stats[:, 1, :]                                      # (T, Cp) centered SS
    mean = jnp.sum(s1, axis=0) / m_total
    tmean = s1 / hw
    var = (jnp.sum(m2, axis=0)
           + hw * jnp.sum((tmean - mean) ** 2, axis=0)) / m_total
    var = jnp.maximum(var, 0.0)                              # guard f32 round-off
    inv = jax.lax.rsqrt(var + EPS)
    g = jnp.zeros((cp,), jnp.float32).at[:gamma.size].set(
        gamma.reshape(-1).astype(jnp.float32))
    b = jnp.zeros((cp,), jnp.float32).at[:beta.size].set(
        beta.reshape(-1).astype(jnp.float32))
    scale = g * inv                                          # padded channels -> 0
    shift = b - mean * scale
    return scale.reshape(1, cp), shift.reshape(1, cp)


# ---------------------------------------------------------------------------
# Full BasicBlock forward
# ---------------------------------------------------------------------------
@jax.jit
def basic_block_forward(x_nchw, params):
    """BasicBlock forward (stride=1, downsample=None => inplanes == planes)."""
    n, c, h, w = x_nchw.shape
    planes = params["w1"].shape[0]
    assert planes == c, "residual path requires inplanes == planes"
    cp = _ceil_to(planes, LANE)
    m = n * h * w

    x_nhwc = jnp.transpose(x_nchw, (0, 2, 3, 1))
    x_bf16 = x_nhwc.astype(jnp.bfloat16)

    w1 = _prep_weight(params["w1"], c, cp)           # (9*C,  Cp)
    w2 = _prep_weight(params["w2"], cp, cp)          # (9*Cp, Cp)

    # conv1 -> per-image BN partials
    y1, st1 = _conv3x3_stats(x_bf16, w1, cp)
    sc1, sh1 = _scale_shift(st1, params["g1"], params["b1"], h * w, cp)

    # bn1-apply + relu fused into conv2's pass -> per-image BN partials
    y2, st2 = _conv3x3_stats(y1, w2, cp, scale=sc1, shift=sh1)
    sc2, sh2 = _scale_shift(st2, params["g2"], params["b2"], h * w, cp)

    # bn2-apply + identity add + relu (lane-elementwise, big row tiles)
    out = _bn_add_relu(y2.reshape(m, cp), sc2, sh2,
                       x_nhwc.reshape(m, c).astype(jnp.float32), planes)
    return jnp.transpose(out.reshape(n, h, w, planes), (0, 3, 1, 2))


# ---------------------------------------------------------------------------
# Pure-JAX f32 reference (PyTorch BasicBlock semantics, fresh BN in train mode)
# ---------------------------------------------------------------------------
def _ref_conv_bn(x_nhwc, w_oihw, gamma, beta):
    w_hwio = jnp.transpose(w_oihw, (2, 3, 1, 0))
    y = jax.lax.conv_general_dilated(
        x_nhwc, w_hwio, window_strides=(1, 1), padding=((1, 1), (1, 1)),
        dimension_numbers=("NHWC", "HWIO", "NHWC"),
        precision=jax.lax.Precision.HIGHEST)
    mean = jnp.mean(y, axis=(0, 1, 2), keepdims=True)
    var = jnp.mean((y - mean) ** 2, axis=(0, 1, 2), keepdims=True)
    return ((y - mean) * jax.lax.rsqrt(var + EPS) * gamma.reshape(1, 1, 1, -1)
            + beta.reshape(1, 1, 1, -1))


def _ref_basic_block(x_nchw, params):
    x = jnp.transpose(x_nchw, (0, 2, 3, 1))
    out = jnp.maximum(_ref_conv_bn(x, params["w1"], params["g1"], params["b1"]), 0.0)
    out = _ref_conv_bn(out, params["w2"], params["g2"], params["b2"]) + x
    return jnp.transpose(jnp.maximum(out, 0.0), (0, 3, 1, 2))


# ---------------------------------------------------------------------------
if __name__ == "__main__":
    key = jax.random.PRNGKey(0)
    k_x, k_w1, k_w2 = jax.random.split(key, 3)

    # batch=2, inplanes=planes=8 (residual requires equal), 16x16 spatial
    N, C, H, W = 2, 8, 16, 16
    planes = C
    x = jax.random.normal(k_x, (N, C, H, W), dtype=jnp.float32)

    fan_in = C * 9
    params = {
        "w1": jax.random.normal(k_w1, (planes, C, 3, 3), jnp.float32)
              * (2.0 / fan_in) ** 0.5,
        "g1": jnp.ones((planes,), jnp.float32),
        "b1": jnp.zeros((planes,), jnp.float32),
        "w2": jax.random.normal(k_w2, (planes, planes, 3, 3), jnp.float32)
              * (2.0 / (planes * 9)) ** 0.5,
        "g2": jnp.ones((planes,), jnp.float32),
        "b2": jnp.zeros((planes,), jnp.float32),
    }

    out = jax.block_until_ready(basic_block_forward(x, params))
    ref = jax.block_until_ready(_ref_basic_block(x, params))

    assert out.shape == (N, planes, H, W), out.shape
    max_err = float(jnp.max(jnp.abs(out - ref)))
    # bf16 MXU operands + bf16 intermediates (f32 accumulation & stats)
    # -> relaxed tolerance vs the f32 reference.
    assert jnp.allclose(out, ref, rtol=3e-2, atol=5e-2), max_err

    print("KERNEL_OK")
</pallas_src>

<mosaic_0001>
module attributes {stable_mosaic.version = 11 : i64} {
  func.func @kernel(%arg0: i32, %arg1: memref<512x128xbf16, #tpu.memory_space<vmem>>, %arg2: memref<1x128xf32, #tpu.memory_space<vmem>>, %arg3: memref<1x128xf32, #tpu.memory_space<vmem>>, %arg4: memref<512x8xf32, #tpu.memory_space<vmem>>, %arg5: memref<512x8xf32, #tpu.memory_space<vmem>>) attributes {dimension_semantics = [#tpu.dimension_semantics<parallel>], iteration_bounds = array<i64: 1>, scalar_prefetch = 0 : i64, scratch_operands = 0 : i64, tpu.core_type = #tpu.core_type<tc>, window_params = [{transform_indices = @transform_0, window_bounds = array<i64: 512, 128>}, {pipeline_mode = #tpu.pipeline_mode<synchronous>, transform_indices = @transform_1, window_bounds = array<i64: 1, 128>}, {pipeline_mode = #tpu.pipeline_mode<synchronous>, transform_indices = @transform_2, window_bounds = array<i64: 1, 128>}, {transform_indices = @transform_3, window_bounds = array<i64: 512, 8>}, {transform_indices = @transform_4, window_bounds = array<i64: 512, 8>}]} {
    %c0 = arith.constant 0 : index
    %c0_0 = arith.constant 0 : index
    %0 = vector.load %arg1[%c0, %c0_0] : memref<512x128xbf16, #tpu.memory_space<vmem>>, vector<512x128xbf16>
    %1 = arith.extf %0 : vector<512x128xbf16> to vector<512x128xf32>
    %c0_1 = arith.constant 0 : index
    %c0_2 = arith.constant 0 : index
    %2 = vector.load %arg2[%c0_1, %c0_2] : memref<1x128xf32, #tpu.memory_space<vmem>>, vector<1x128xf32>
    %3 = vector.broadcast %2 : vector<1x128xf32> to vector<512x128xf32>
    %4 = arith.mulf %1, %3 : vector<512x128xf32>
    %c0_3 = arith.constant 0 : index
    %c0_4 = arith.constant 0 : index
    %5 = vector.load %arg3[%c0_3, %c0_4] : memref<1x128xf32, #tpu.memory_space<vmem>>, vector<1x128xf32>
    %6 = vector.broadcast %5 : vector<1x128xf32> to vector<512x128xf32>
    %7 = arith.addf %4, %6 : vector<512x128xf32>
    %8 = vector.extract_strided_slice %7 {offsets = [0, 0], sizes = [512, 8], strides = [1, 1]} : vector<512x128xf32> to vector<512x8xf32>
    %c0_5 = arith.constant 0 : index
    %c0_6 = arith.constant 0 : index
    %9 = vector.load %arg4[%c0_5, %c0_6] : memref<512x8xf32, #tpu.memory_space<vmem>>, vector<512x8xf32>
    %10 = arith.addf %8, %9 : vector<512x8xf32>
    %cst = arith.constant 0.000000e+00 : f32
    %11 = vector.broadcast %cst : f32 to vector<512x8xf32>
    %12 = arith.maximumf %10, %11 : vector<512x8xf32>
    %c0_7 = arith.constant 0 : index
    %c0_8 = arith.constant 0 : index
    %13 = vector.load %arg5[%c0_7, %c0_8] : memref<512x8xf32, #tpu.memory_space<vmem>>, vector<512x8xf32>
    tpu.vector_store %arg5[%c0_7, %c0_8], %12 {strides = array<i32>} : memref<512x8xf32, #tpu.memory_space<vmem>>, vector<512x8xf32>,
    return
  }
  func.func @transform_0(%arg0: i32) -> (i32, i32) {
    %c0_i32 = arith.constant 0 : i32
    %c0_i32_0 = arith.constant 0 : i32
    return %arg0, %c0_i32 : i32, i32
  }
  func.func @transform_1(%arg0: i32) -> (i32, i32) {
    %c0_i32 = arith.constant 0 : i32
    %c0_i32_0 = arith.constant 0 : i32
    %c0_i32_1 = arith.constant 0 : i32
    return %c0_i32, %c0_i32_0 : i32, i32
  }
  func.func @transform_2(%arg0: i32) -> (i32, i32) {
    %c0_i32 = arith.constant 0 : i32
    %c0_i32_0 = arith.constant 0 : i32
    %c0_i32_1 = arith.constant 0 : i32
    return %c0_i32, %c0_i32_0 : i32, i32
  }
  func.func @transform_3(%arg0: i32) -> (i32, i32) {
    %c0_i32 = arith.constant 0 : i32
    %c0_i32_0 = arith.constant 0 : i32
    return %arg0, %c0_i32 : i32, i32
  }
  func.func @transform_4(%arg0: i32) -> (i32, i32) {
    %c0_i32 = arith.constant 0 : i32
    %c0_i32_0 = arith.constant 0 : i32
    return %arg0, %c0_i32 : i32, i32
  }
}

module attributes {stable_mosaic.version = 11 : i64} {
  func.func @kernel(%arg0: i32, %arg1: memref<1x16x16x128xbf16, #tpu.memory_space<vmem>>, %arg2: memref<1x128xf32, #tpu.memory_space<vmem>>, %arg3: memref<1x128xf32, #tpu.memory_space<vmem>>, %arg4: memref<1152x128xbf16, #tpu.memory_space<vmem>>, %arg5: memref<1x16x16x128xbf16, #tpu.memory_space<vmem>>, %arg6: memref<1x2x128xf32, #tpu.memory_space<vmem>>, %arg7: memref<18x18x128xbf16, #tpu.memory_space<vmem>>) attributes {dimension_semantics = [#tpu.dimension_semantics<parallel>], iteration_bounds = array<i64: 2>, scalar_prefetch = 0 : i64, scratch_operands = 1 : i64, tpu.core_type = #tpu.core_type<tc>, window_params = [{transform_indices = @transform_0, window_bounds = array<i64: 1, 16, 16, 128>}, {pipeline_mode = #tpu.pipeline_mode<synchronous>, transform_indices = @transform_1, window_bounds = array<i64: 1, 128>}, {pipeline_mode = #tpu.pipeline_mode<synchronous>, transform_indices = @transform_2, window_bounds = array<i64: 1, 128>}, {pipeline_mode = #tpu.pipeline_mode<synchronous>, transform_indices = @transform_3, window_bounds = array<i64: 1152, 128>}, {transform_indices = @transform_4, window_bounds = array<i64: 1, 16, 16, 128>}, {transform_indices = @transform_5, window_bounds = array<i64: 1, 2, 128>}]} {
    %c0 = arith.constant 0 : index
    %c0_0 = arith.constant 0 : index
    %c0_1 = arith.constant 0 : index
    %c0_2 = arith.constant 0 : index
    %0 = vector.load %arg1[%c0, %c0_0, %c0_1, %c0_2] : memref<1x16x16x128xbf16, #tpu.memory_space<vmem>>, vector<1x16x16x128xbf16>
    %1 = vector.shape_cast %0 : vector<1x16x16x128xbf16> to vector<16x16x128xbf16>
    %2 = vector.shape_cast %1 : vector<16x16x128xbf16> to vector<256x128xbf16>
    %3 = arith.extf %2 : vector<256x128xbf16> to vector<256x128xf32>
    %c0_3 = arith.constant 0 : index
    %c0_4 = arith.constant 0 : index
    %4 = vector.load %arg2[%c0_3, %c0_4] : memref<1x128xf32, #tpu.memory_space<vmem>>, vector<1x128xf32>
    %5 = vector.broadcast %4 : vector<1x128xf32> to vector<256x128xf32>
    %6 = arith.mulf %3, %5 : vector<256x128xf32>
    %c0_5 = arith.constant 0 : index
    %c0_6 = arith.constant 0 : index
    %7 = vector.load %arg3[%c0_5, %c0_6] : memref<1x128xf32, #tpu.memory_space<vmem>>, vector<1x128xf32>
    %8 = vector.broadcast %7 : vector<1x128xf32> to vector<256x128xf32>
    %9 = arith.addf %6, %8 : vector<256x128xf32>
    %cst = arith.constant 0.000000e+00 : f32
    %10 = vector.broadcast %cst : f32 to vector<256x128xf32>
    %11 = arith.maximumf %9, %10 : vector<256x128xf32>
    %12 = vector.shape_cast %11 : vector<256x128xf32> to vector<16x16x128xf32>
    %cst_7 = arith.constant 0.000000e+00 : bf16
    %13 = vector.broadcast %cst_7 : bf16 to vector<18x18x128xbf16>
    %c0_8 = arith.constant 0 : index
    %c0_9 = arith.constant 0 : index
    %c0_10 = arith.constant 0 : index
    %14 = vector.load %arg7[%c0_8, %c0_9, %c0_10] : memref<18x18x128xbf16, #tpu.memory_space<vmem>>, vector<18x18x128xbf16>
    tpu.vector_store %arg7[%c0_8, %c0_9, %c0_10], %13 {strides = array<i32>} : memref<18x18x128xbf16, #tpu.memory_space<vmem>>, vector<18x18x128xbf16>,
    %15 = arith.truncf %12 : vector<16x16x128xf32> to vector<16x16x128xbf16>
    %c1 = arith.constant 1 : index
    %c1_11 = arith.constant 1 : index
    %c0_12 = arith.constant 0 : index
    %16 = vector.load %arg7[%c1, %c1_11, %c0_12] : memref<18x18x128xbf16, #tpu.memory_space<vmem>>, vector<16x16x128xbf16>
    tpu.vector_store %arg7[%c1, %c1_11, %c0_12], %15 {strides = array<i32>} : memref<18x18x128xbf16, #tpu.memory_space<vmem>>, vector<16x16x128xbf16>,
    %c0_13 = arith.constant 0 : index
    %c0_14 = arith.constant 0 : index
    %c0_15 = arith.constant 0 : index
    %17 = vector.load %arg7[%c0_13, %c0_14, %c0_15] : memref<18x18x128xbf16, #tpu.memory_space<vmem>>, vector<18x18x128xbf16>
    %18 = vector.extract_strided_slice %17 {offsets = [0, 0, 0], sizes = [16, 16, 128], strides = [1, 1, 1]} : vector<18x18x128xbf16> to vector<16x16x128xbf16>
    %19 = vector.extract_strided_slice %17 {offsets = [0, 1, 0], sizes = [16, 16, 128], strides = [1, 1, 1]} : vector<18x18x128xbf16> to vector<16x16x128xbf16>
    %20 = vector.extract_strided_slice %17 {offsets = [0, 2, 0], sizes = [16, 16, 128], strides = [1, 1, 1]} : vector<18x18x128xbf16> to vector<16x16x128xbf16>
    %21 = vector.extract_strided_slice %17 {offsets = [1, 0, 0], sizes = [16, 16, 128], strides = [1, 1, 1]} : vector<18x18x128xbf16> to vector<16x16x128xbf16>
    %22 = vector.extract_strided_slice %17 {offsets = [1, 1, 0], sizes = [16, 16, 128], strides = [1, 1, 1]} : vector<18x18x128xbf16> to vector<16x16x128xbf16>
    %23 = vector.extract_strided_slice %17 {offsets = [1, 2, 0], sizes = [16, 16, 128], strides = [1, 1, 1]} : vector<18x18x128xbf16> to vector<16x16x128xbf16>
    %24 = vector.extract_strided_slice %17 {offsets = [2, 0, 0], sizes = [16, 16, 128], strides = [1, 1, 1]} : vector<18x18x128xbf16> to vector<16x16x128xbf16>
    %25 = vector.extract_strided_slice %17 {offsets = [2, 1, 0], sizes = [16, 16, 128], strides = [1, 1, 1]} : vector<18x18x128xbf16> to vector<16x16x128xbf16>
    %26 = vector.extract_strided_slice %17 {offsets = [2, 2, 0], sizes = [16, 16, 128], strides = [1, 1, 1]} : vector<18x18x128xbf16> to vector<16x16x128xbf16>
    %27 = tpu.concatenate %18, %19, %20, %21, %22, %23, %24, %25, %26 in 2 : vector<16x16x128xbf16>, vector<16x16x128xbf16>, vector<16x16x128xbf16>, vector<16x16x128xbf16>, vector<16x16x128xbf16>, vector<16x16x128xbf16>, vector<16x16x128xbf16>, vector<16x16x128xbf16>, vector<16x16x128xbf16> -> vector<16x16x1152xbf16>
    %28 = vector.shape_cast %27 : vector<16x16x1152xbf16> to vector<256x1152xbf16>
    %c0_16 = arith.constant 0 : index
    %c0_17 = arith.constant 0 : index
    %29 = vector.load %arg4[%c0_16, %c0_17] : memref<1152x128xbf16, #tpu.memory_space<vmem>>, vector<1152x128xbf16>
    %cst_18 = arith.constant dense<0.000000e+00> : vector<256x128xf32>
    %30 = tpu.matmul %28, %29, %cst_18 {dimension_numbers = #tpu.dot_dimension_numbers<[1], [0], [0], [1], [0, 0, 1, 1], [], []>} : vector<256x1152xbf16>, vector<1152x128xbf16>, vector<256x128xf32> -> vector<256x128xf32>
    %31 = vector.shape_cast %30 : vector<256x128xf32> to vector<16x16x128xf32>
    %32 = arith.truncf %31 : vector<16x16x128xf32> to vector<16x16x128xbf16>
    %c0_19 = arith.constant 0 : index
    %c0_20 = arith.constant 0 : index
    %c0_21 = arith.constant 0 : index
    %c0_22 = arith.constant 0 : index
    %33 = vector.load %arg5[%c0_19, %c0_20, %c0_21, %c0_22] : memref<1x16x16x128xbf16, #tpu.memory_space<vmem>>, vector<1x16x16x128xbf16>
    %34 = vector.shape_cast %33 : vector<1x16x16x128xbf16> to vector<16x16x128xbf16>
    %35 = vector.shape_cast %32 : vector<16x16x128xbf16> to vector<1x16x16x128xbf16>
    tpu.vector_store %arg5[%c0_19, %c0_20, %c0_21, %c0_22], %35 {strides = array<i32>} : memref<1x16x16x128xbf16, #tpu.memory_space<vmem>>, vector<1x16x16x128xbf16>,
    %cst_23 = arith.constant dense<0.000000e+00> : vector<128xf32>
    %36 = vector.multi_reduction <add>, %30, %cst_23 [0] : vector<256x128xf32> to vector<128xf32>
    %37 = vector.shape_cast %36 : vector<128xf32> to vector<1x128xf32>
    %cst_24 = arith.constant 3.906250e-03 : f32
    %38 = vector.broadcast %cst_24 : f32 to vector<1x128xf32>
    %39 = arith.mulf %37, %38 : vector<1x128xf32>
    %40 = vector.broadcast %39 : vector<1x128xf32> to vector<256x128xf32>
    %41 = arith.subf %30, %40 : vector<256x128xf32>
    %42 = arith.mulf %41, %41 : vector<256x128xf32>
    %cst_25 = arith.constant dense<0.000000e+00> : vector<128xf32>
    %43 = vector.multi_reduction <add>, %42, %cst_25 [0] : vector<256x128xf32> to vector<128xf32>
    %44 = vector.shape_cast %43 : vector<128xf32> to vector<1x128xf32>
    %45 = tpu.concatenate %37, %44 in 0 : vector<1x128xf32>, vector<1x128xf32> -> vector<2x128xf32>
    %c0_26 = arith.constant 0 : index
    %c0_27 = arith.constant 0 : index
    %c0_28 = arith.constant 0 : index
    %46 = vector.load %arg6[%c0_26, %c0_27, %c0_28] : memref<1x2x128xf32, #tpu.memory_space<vmem>>, vector<1x2x128xf32>
    %47 = vector.shape_cast %46 : vector<1x2x128xf32> to vector<2x128xf32>
    %48 = vector.shape_cast %45 : vector<2x128xf32> to vector<1x2x128xf32>
    tpu.vector_store %arg6[%c0_26, %c0_27, %c0_28], %48 {strides = array<i32>} : memref<1x2x128xf32, #tpu.memory_space<vmem>>, vector<1x2x128xf32>,
    return
  }
  func.func @transform_0(%arg0: i32) -> (i32, i32, i32, i32) {
    %c0_i32 = arith.constant 0 : i32
    %c0_i32_0 = arith.constant 0 : i32
    %c0_i32_1 = arith.constant 0 : i32
    %c0_i32_2 = arith.constant 0 : i32
    return %arg0, %c0_i32, %c0_i32_0, %c0_i32_1 : i32, i32, i32, i32
  }
  func.func @transform_1(%arg0: i32) -> (i32, i32) {
    %c0_i32 = arith.constant 0 : i32
    %c0_i32_0 = arith.constant 0 : i32
    %c0_i32_1 = arith.constant 0 : i32
    return %c0_i32, %c0_i32_0 : i32, i32
  }
  func.func @transform_2(%arg0: i32) -> (i32, i32) {
    %c0_i32 = arith.constant 0 : i32
    %c0_i32_0 = arith.constant 0 : i32
    %c0_i32_1 = arith.constant 0 : i32
    return %c0_i32, %c0_i32_0 : i32, i32
  }
  func.func @transform_3(%arg0: i32) -> (i32, i32) {
    %c0_i32 = arith.constant 0 : i32
    %c0_i32_0 = arith.constant 0 : i32
    %c0_i32_1 = arith.constant 0 : i32
    return %c0_i32, %c0_i32_0 : i32, i32
  }
  func.func @transform_4(%arg0: i32) -> (i32, i32, i32, i32) {
    %c0_i32 = arith.constant 0 : i32
    %c0_i32_0 = arith.constant 0 : i32
    %c0_i32_1 = arith.constant 0 : i32
    %c0_i32_2 = arith.constant 0 : i32
    return %arg0, %c0_i32, %c0_i32_0, %c0_i32_1 : i32, i32, i32, i32
  }
  func.func @transform_5(%arg0: i32) -> (i32, i32, i32) {
    %c0_i32 = arith.constant 0 : i32
    %c0_i32_0 = arith.constant 0 : i32
    %c0_i32_1 = arith.constant 0 : i32
    return %arg0, %c0_i32, %c0_i32_0 : i32, i32, i32
  }
}

module attributes {stable_mosaic.version = 11 : i64} {
  func.func @kernel(%arg0: i32, %arg1: memref<1x16x16x8xbf16, #tpu.memory_space<vmem>>, %arg2: memref<72x128xbf16, #tpu.memory_space<vmem>>, %arg3: memref<1x16x16x128xbf16, #tpu.memory_space<vmem>>, %arg4: memref<1x2x128xf32, #tpu.memory_space<vmem>>, %arg5: memref<18x18x8xbf16, #tpu.memory_space<vmem>>) attributes {dimension_semantics = [#tpu.dimension_semantics<parallel>], iteration_bounds = array<i64: 2>, scalar_prefetch = 0 : i64, scratch_operands = 1 : i64, tpu.core_type = #tpu.core_type<tc>, window_params = [{transform_indices = @transform_0, window_bounds = array<i64: 1, 16, 16, 8>}, {pipeline_mode = #tpu.pipeline_mode<synchronous>, transform_indices = @transform_1, window_bounds = array<i64: 72, 128>}, {transform_indices = @transform_2, window_bounds = array<i64: 1, 16, 16, 128>}, {transform_indices = @transform_3, window_bounds = array<i64: 1, 2, 128>}]} {
    %c0 = arith.constant 0 : index
    %c0_0 = arith.constant 0 : index
    %c0_1 = arith.constant 0 : index
    %c0_2 = arith.constant 0 : index
    %0 = vector.load %arg1[%c0, %c0_0, %c0_1, %c0_2] : memref<1x16x16x8xbf16, #tpu.memory_space<vmem>>, vector<1x16x16x8xbf16>
    %1 = vector.shape_cast %0 : vector<1x16x16x8xbf16> to vector<16x16x8xbf16>
    %cst = arith.constant 0.000000e+00 : bf16
    %2 = vector.broadcast %cst : bf16 to vector<18x18x8xbf16>
    %c0_3 = arith.constant 0 : index
    %c0_4 = arith.constant 0 : index
    %c0_5 = arith.constant 0 : index
    %3 = vector.load %arg5[%c0_3, %c0_4, %c0_5] : memref<18x18x8xbf16, #tpu.memory_space<vmem>>, vector<18x18x8xbf16>
    tpu.vector_store %arg5[%c0_3, %c0_4, %c0_5], %2 {strides = array<i32>} : memref<18x18x8xbf16, #tpu.memory_space<vmem>>, vector<18x18x8xbf16>,
    %c1 = arith.constant 1 : index
    %c1_6 = arith.constant 1 : index
    %c0_7 = arith.constant 0 : index
    %4 = vector.load %arg5[%c1, %c1_6, %c0_7] : memref<18x18x8xbf16, #tpu.memory_space<vmem>>, vector<16x16x8xbf16>
    tpu.vector_store %arg5[%c1, %c1_6, %c0_7], %1 {strides = array<i32>} : memref<18x18x8xbf16, #tpu.memory_space<vmem>>, vector<16x16x8xbf16>,
    %c0_8 = arith.constant 0 : index
    %c0_9 = arith.constant 0 : index
    %c0_10 = arith.constant 0 : index
    %5 = vector.load %arg5[%c0_8, %c0_9, %c0_10] : memref<18x18x8xbf16, #tpu.memory_space<vmem>>, vector<18x18x8xbf16>
    %6 = vector.extract_strided_slice %5 {offsets = [0, 0, 0], sizes = [16, 16, 8], strides = [1, 1, 1]} : vector<18x18x8xbf16> to vector<16x16x8xbf16>
    %7 = vector.extract_strided_slice %5 {offsets = [0, 1, 0], sizes = [16, 16, 8], strides = [1, 1, 1]} : vector<18x18x8xbf16> to vector<16x16x8xbf16>
    %8 = vector.extract_strided_slice %5 {offsets = [0, 2, 0], sizes = [16, 16, 8], strides = [1, 1, 1]} : vector<18x18x8xbf16> to vector<16x16x8xbf16>
    %9 = vector.extract_strided_slice %5 {offsets = [1, 0, 0], sizes = [16, 16, 8], strides = [1, 1, 1]} : vector<18x18x8xbf16> to vector<16x16x8xbf16>
    %10 = vector.extract_strided_slice %5 {offsets = [1, 1, 0], sizes = [16, 16, 8], strides = [1, 1, 1]} : vector<18x18x8xbf16> to vector<16x16x8xbf16>
    %11 = vector.extract_strided_slice %5 {offsets = [1, 2, 0], sizes = [16, 16, 8], strides = [1, 1, 1]} : vector<18x18x8xbf16> to vector<16x16x8xbf16>
    %12 = vector.extract_strided_slice %5 {offsets = [2, 0, 0], sizes = [16, 16, 8], strides = [1, 1, 1]} : vector<18x18x8xbf16> to vector<16x16x8xbf16>
    %13 = vector.extract_strided_slice %5 {offsets = [2, 1, 0], sizes = [16, 16, 8], strides = [1, 1, 1]} : vector<18x18x8xbf16> to vector<16x16x8xbf16>
    %14 = vector.extract_strided_slice %5 {offsets = [2, 2, 0], sizes = [16, 16, 8], strides = [1, 1, 1]} : vector<18x18x8xbf16> to vector<16x16x8xbf16>
    %15 = tpu.concatenate %6, %7, %8, %9, %10, %11, %12, %13, %14 in 2 : vector<16x16x8xbf16>, vector<16x16x8xbf16>, vector<16x16x8xbf16>, vector<16x16x8xbf16>, vector<16x16x8xbf16>, vector<16x16x8xbf16>, vector<16x16x8xbf16>, vector<16x16x8xbf16>, vector<16x16x8xbf16> -> vector<16x16x72xbf16>
    %16 = vector.shape_cast %15 : vector<16x16x72xbf16> to vector<256x72xbf16>
    %c0_11 = arith.constant 0 : index
    %c0_12 = arith.constant 0 : index
    %17 = vector.load %arg2[%c0_11, %c0_12] : memref<72x128xbf16, #tpu.memory_space<vmem>>, vector<72x128xbf16>
    %cst_13 = arith.constant dense<0.000000e+00> : vector<256x128xf32>
    %18 = tpu.matmul %16, %17, %cst_13 {dimension_numbers = #tpu.dot_dimension_numbers<[1], [0], [0], [1], [0, 0, 1, 1], [], []>} : vector<256x72xbf16>, vector<72x128xbf16>, vector<256x128xf32> -> vector<256x128xf32>
    %19 = vector.shape_cast %18 : vector<256x128xf32> to vector<16x16x128xf32>
    %20 = arith.truncf %19 : vector<16x16x128xf32> to vector<16x16x128xbf16>
    %c0_14 = arith.constant 0 : index
    %c0_15 = arith.constant 0 : index
    %c0_16 = arith.constant 0 : index
    %c0_17 = arith.constant 0 : index
    %21 = vector.load %arg3[%c0_14, %c0_15, %c0_16, %c0_17] : memref<1x16x16x128xbf16, #tpu.memory_space<vmem>>, vector<1x16x16x128xbf16>
    %22 = vector.shape_cast %21 : vector<1x16x16x128xbf16> to vector<16x16x128xbf16>
    %23 = vector.shape_cast %20 : vector<16x16x128xbf16> to vector<1x16x16x128xbf16>
    tpu.vector_store %arg3[%c0_14, %c0_15, %c0_16, %c0_17], %23 {strides = array<i32>} : memref<1x16x16x128xbf16, #tpu.memory_space<vmem>>, vector<1x16x16x128xbf16>,
    %cst_18 = arith.constant dense<0.000000e+00> : vector<128xf32>
    %24 = vector.multi_reduction <add>, %18, %cst_18 [0] : vector<256x128xf32> to vector<128xf32>
    %25 = vector.shape_cast %24 : vector<128xf32> to vector<1x128xf32>
    %cst_19 = arith.constant 3.906250e-03 : f32
    %26 = vector.broadcast %cst_19 : f32 to vector<1x128xf32>
    %27 = arith.mulf %25, %26 : vector<1x128xf32>
    %28 = vector.broadcast %27 : vector<1x128xf32> to vector<256x128xf32>
    %29 = arith.subf %18, %28 : vector<256x128xf32>
    %30 = arith.mulf %29, %29 : vector<256x128xf32>
    %cst_20 = arith.constant dense<0.000000e+00> : vector<128xf32>
    %31 = vector.multi_reduction <add>, %30, %cst_20 [0] : vector<256x128xf32> to vector<128xf32>
    %32 = vector.shape_cast %31 : vector<128xf32> to vector<1x128xf32>
    %33 = tpu.concatenate %25, %32 in 0 : vector<1x128xf32>, vector<1x128xf32> -> vector<2x128xf32>
    %c0_21 = arith.constant 0 : index
    %c0_22 = arith.constant 0 : index
    %c0_23 = arith.constant 0 : index
    %34 = vector.load %arg4[%c0_21, %c0_22, %c0_23] : memref<1x2x128xf32, #tpu.memory_space<vmem>>, vector<1x2x128xf32>
    %35 = vector.shape_cast %34 : vector<1x2x128xf32> to vector<2x128xf32>
    %36 = vector.shape_cast %33 : vector<2x128xf32> to vector<1x2x128xf32>
    tpu.vector_store %arg4[%c0_21, %c0_22, %c0_23], %36 {strides = array<i32>} : memref<1x2x128xf32, #tpu.memory_space<vmem>>, vector<1x2x128xf32>,
    return
  }
  func.func @transform_0(%arg0: i32) -> (i32, i32, i32, i32) {
    %c0_i32 = arith.constant 0 : i32
    %c0_i32_0 = arith.constant 0 : i32
    %c0_i32_1 = arith.constant 0 : i32
    %c0_i32_2 = arith.constant 0 : i32
    return %arg0, %c0_i32, %c0_i32_0, %c0_i32_1 : i32, i32, i32, i32
  }
  func.func @transform_1(%arg0: i32) -> (i32, i32) {
    %c0_i32 = arith.constant 0 : i32
    %c0_i32_0 = arith.constant 0 : i32
    %c0_i32_1 = arith.constant 0 : i32
    return %c0_i32, %c0_i32_0 : i32, i32
  }
  func.func @transform_2(%arg0: i32) -> (i32, i32, i32, i32) {
    %c0_i32 = arith.constant 0 : i32
    %c0_i32_0 = arith.constant 0 : i32
    %c0_i32_1 = arith.constant 0 : i32
    %c0_i32_2 = arith.constant 0 : i32
    return %arg0, %c0_i32, %c0_i32_0, %c0_i32_1 : i32, i32, i32, i32
  }
  func.func @transform_3(%arg0: i32) -> (i32, i32, i32) {
    %c0_i32 = arith.constant 0 : i32
    %c0_i32_0 = arith.constant 0 : i32
    %c0_i32_1 = arith.constant 0 : i32
    return %arg0, %c0_i32, %c0_i32_0 : i32, i32, i32
  }
}

</mosaic_0001>

<llo_original>
// kernel: basic_block_forward.5
$region0: #{basic_block_forward.5}
  #allocation0 [shape = 'u32[]', space=smem, size = 0x4, offset = 0x4, fixed_abs, tag = 'smem constant byte address 0x4 - core index']
  #allocation1 [shape = 'u32[144,128]{1,0:T(1,128)}', space=vmem, size = 0x12000, scoped, tag = 'internal scratch']
  %s0 = inlined_call_operand.vmem [shape: bf16[512,128], index: 0, kind: input, shape index: {}]
  %s1 = inlined_call_operand.vmem [shape: f32[1,128], index: 1, kind: input, shape index: {}]
  %s2 = inlined_call_operand.vmem [shape: f32[1,128], index: 2, kind: input, shape index: {}]
  %s3 = inlined_call_operand.vmem [shape: f32[512,8], index: 3, kind: input, shape index: {}]
  %s4 = inlined_call_operand.vmem [shape: f32[512,8], index: 4, kind: output, shape index: {}]
  %s5 = sld [smem:[#allocation0]]
  $region26: #{basic_block_forward.5} parent=0
    _
  %s7 = ssub.s32 1, %s5
  %s8 = scalar_select 0, %s7, %s5
  // Predicated region
  $region2: #{basic_block_forward.5} parent=0 // pred_check
    _
  $region3: #{basic_block_forward.5} parent=0 // pred_check_branch
    %10 = sbr.rel (0) target = $region5
  $region4: #{basic_block_forward.5} parent=0 // pred_region
    _
  $region5: #{basic_block_forward.5} parent=0 // pred_fallthru
    _
  // Predicated region
  $region6: #{basic_block_forward.5} parent=0 // pred_check
    _
  $region7: #{basic_block_forward.5} parent=0 // pred_check_branch
    %12 = sbr.rel (0) target = $region9
  $region8: #{basic_block_forward.5} parent=0 // pred_region
    _
  $region9: #{basic_block_forward.5} parent=0 // pred_fallthru
    _
  // Predicated region
  $region10: #{basic_block_forward.5} parent=0 // pred_check
    _
  $region11: #{basic_block_forward.5} parent=0 // pred_check_branch
    %14 = sbr.rel (0) target = $region13
  $region12: #{basic_block_forward.5} parent=0 // pred_region
    _
  $region13: #{basic_block_forward.5} parent=0 // pred_fallthru
    _
  // Predicated region
  $region14: #{basic_block_forward.5} parent=0 // pred_check
    _
  $region15: #{basic_block_forward.5} parent=0 // pred_check_branch
    %16 = sbr.rel (0) target = $region17
  $region16: #{basic_block_forward.5} parent=0 // pred_region
    _
  $region17: #{basic_block_forward.5} parent=0 // pred_fallthru
    _
  %v17 = vld [vmem:[%s0] sm:$0xf]
  %v18 = vld [vmem:[%s0 + $0x4] sm:$0xf]
  %v19 = vld [vmem:[%s0 + $0x8] sm:$0xf]
  %v20 = vld [vmem:[%s0 + $0xc] sm:$0xf]
  %v21 = vld [vmem:[%s0 + $0x10] sm:$0xf]
  %v22 = vld [vmem:[%s0 + $0x14] sm:$0xf]
  %v23 = vld [vmem:[%s0 + $0x18] sm:$0xf]
  %v24 = vld [vmem:[%s0 + $0x1c] sm:$0xf]
  %v25 = vld [vmem:[%s0 + $0x20] sm:$0xf]
  %v26 = vld [vmem:[%s0 + $0x24] sm:$0xf]
  %v27 = vld [vmem:[%s0 + $0x28] sm:$0xf]
  %v28 = vld [vmem:[%s0 + $0x2c] sm:$0xf]
  %v29 = vld [vmem:[%s0 + $0x30] sm:$0xf]
  %v30 = vld [vmem:[%s0 + $0x34] sm:$0xf]
  %v31 = vld [vmem:[%s0 + $0x38] sm:$0xf]
  %v32 = vld [vmem:[%s0 + $0x3c] sm:$0xf]
  %v33 = vld [vmem:[%s0 + $0x40] sm:$0xf]
  %v34 = vld [vmem:[%s0 + $0x44] sm:$0xf]
  %v35 = vld [vmem:[%s0 + $0x48] sm:$0xf]
  %v36 = vld [vmem:[%s0 + $0x4c] sm:$0xf]
  %v37 = vld [vmem:[%s0 + $0x50] sm:$0xf]
  %v38 = vld [vmem:[%s0 + $0x54] sm:$0xf]
  %v39 = vld [vmem:[%s0 + $0x58] sm:$0xf]
  %v40 = vld [vmem:[%s0 + $0x5c] sm:$0xf]
  %v41 = vld [vmem:[%s0 + $0x60] sm:$0xf]
  %v42 = vld [vmem:[%s0 + $0x64] sm:$0xf]
  %v43 = vld [vmem:[%s0 + $0x68] sm:$0xf]
  %v44 = vld [vmem:[%s0 + $0x6c] sm:$0xf]
  %v45 = vld [vmem:[%s0 + $0x70] sm:$0xf]
  %v46 = vld [vmem:[%s0 + $0x74] sm:$0xf]
  %v47 = vld [vmem:[%s0 + $0x78] sm:$0xf]
  %v48 = vld [vmem:[%s0 + $0x7c] sm:$0xf]
  %v49 = vld [vmem:[%s0 + $0x80] sm:$0xf]
  %v50 = vld [vmem:[%s0 + $0x84] sm:$0xf]
  %v51 = vld [vmem:[%s0 + $0x88] sm:$0xf]
  %v52 = vld [vmem:[%s0 + $0x8c] sm:$0xf]
  %v53 = vld [vmem:[%s0 + $0x90] sm:$0xf]
  %v54 = vld [vmem:[%s0 + $0x94] sm:$0xf]
  %v55 = vld [vmem:[%s0 + $0x98] sm:$0xf]
  %v56 = vld [vmem:[%s0 + $0x9c] sm:$0xf]
  %v57 = vld [vmem:[%s0 + $0xa0] sm:$0xf]
  %v58 = vld [vmem:[%s0 + $0xa4] sm:$0xf]
  %v59 = vld [vmem:[%s0 + $0xa8] sm:$0xf]
  %v60 = vld [vmem:[%s0 + $0xac] sm:$0xf]
  %v61 = vld [vmem:[%s0 + $0xb0] sm:$0xf]
  %v62 = vld [vmem:[%s0 + $0xb4] sm:$0xf]
  %v63 = vld [vmem:[%s0 + $0xb8] sm:$0xf]
  %v64 = vld [vmem:[%s0 + $0xbc] sm:$0xf]
  %v65 = vld [vmem:[%s0 + $0xc0] sm:$0xf]
  %v66 = vld [vmem:[%s0 + $0xc4] sm:$0xf]
  %v67 = vld [vmem:[%s0 + $0xc8] sm:$0xf]
  %v68 = vld [vmem:[%s0 + $0xcc] sm:$0xf]
  %v69 = vld [vmem:[%s0 + $0xd0] sm:$0xf]
  %v70 = vld [vmem:[%s0 + $0xd4] sm:$0xf]
  %v71 = vld [vmem:[%s0 + $0xd8] sm:$0xf]
  %v72 = vld [vmem:[%s0 + $0xdc] sm:$0xf]
  %v73 = vld [vmem:[%s0 + $0xe0] sm:$0xf]
  %v74 = vld [vmem:[%s0 + $0xe4] sm:$0xf]
  %v75 = vld [vmem:[%s0 + $0xe8] sm:$0xf]
  %v76 = vld [vmem:[%s0 + $0xec] sm:$0xf]
  %v77 = vld [vmem:[%s0 + $0xf0] sm:$0xf]
  %v78 = vld [vmem:[%s0 + $0xf4] sm:$0xf]
  %v79 = vld [vmem:[%s0 + $0xf8] sm:$0xf]
  %v80 = vld [vmem:[%s0 + $0xfc] sm:$0xf]
  %v81 = vunpack.c.l.bf16 %v17
  %v82 = vunpack.c.l.bf16 %v18
  %v83 = vunpack.c.l.bf16 %v19
  %v84 = vunpack.c.l.bf16 %v20
  %v85 = vunpack.c.l.bf16 %v21
  %v86 = vunpack.c.l.bf16 %v22
  %v87 = vunpack.c.l.bf16 %v23
  %v88 = vunpack.c.l.bf16 %v24
  %v89 = vunpack.c.l.bf16 %v25
  %v90 = vunpack.c.l.bf16 %v26
  %v91 = vunpack.c.l.bf16 %v27
  %v92 = vunpack.c.l.bf16 %v28
  %v93 = vunpack.c.l.bf16 %v29
  %v94 = vunpack.c.l.bf16 %v30
  %v95 = vunpack.c.l.bf16 %v31
  %v96 = vunpack.c.l.bf16 %v32
  %v97 = vunpack.c.l.bf16 %v33
  %v98 = vunpack.c.l.bf16 %v34
  %v99 = vunpack.c.l.bf16 %v35
  %v100 = vunpack.c.l.bf16 %v36
  %v101 = vunpack.c.l.bf16 %v37
  %v102 = vunpack.c.l.bf16 %v38
  %v103 = vunpack.c.l.bf16 %v39
  %v104 = vunpack.c.l.bf16 %v40
  %v105 = vunpack.c.l.bf16 %v41
  %v106 = vunpack.c.l.bf16 %v42
  %v107 = vunpack.c.l.bf16 %v43
  %v108 = vunpack.c.l.bf16 %v44
  %v109 = vunpack.c.l.bf16 %v45
  %v110 = vunpack.c.l.bf16 %v46
  %v111 = vunpack.c.l.bf16 %v47
  %v112 = vunpack.c.l.bf16 %v48
  %v113 = vunpack.c.l.bf16 %v49
  %v114 = vunpack.c.l.bf16 %v50
  %v115 = vunpack.c.l.bf16 %v51
  %v116 = vunpack.c.l.bf16 %v52
  %v117 = vunpack.c.l.bf16 %v53
  %v118 = vunpack.c.l.bf16 %v54
  %v119 = vunpack.c.l.bf16 %v55
  %v120 = vunpack.c.l.bf16 %v56
  %v121 = vunpack.c.l.bf16 %v57
  %v122 = vunpack.c.l.bf16 %v58
  %v123 = vunpack.c.l.bf16 %v59
  %v124 = vunpack.c.l.bf16 %v60
  %v125 = vunpack.c.l.bf16 %v61
  %v126 = vunpack.c.l.bf16 %v62
  %v127 = vunpack.c.l.bf16 %v63
  %v128 = vunpack.c.l.bf16 %v64
  %v129 = vunpack.c.l.bf16 %v65
  %v130 = vunpack.c.l.bf16 %v66
  %v131 = vunpack.c.l.bf16 %v67
  %v132 = vunpack.c.l.bf16 %v68
  %v133 = vunpack.c.l.bf16 %v69
  %v134 = vunpack.c.l.bf16 %v70
  %v135 = vunpack.c.l.bf16 %v71
  %v136 = vunpack.c.l.bf16 %v72
  %v137 = vunpack.c.l.bf16 %v73
  %v138 = vunpack.c.l.bf16 %v74
  %v139 = vunpack.c.l.bf16 %v75
  %v140 = vunpack.c.l.bf16 %v76
  %v141 = vunpack.c.l.bf16 %v77
  %v142 = vunpack.c.l.bf16 %v78
  %v143 = vunpack.c.l.bf16 %v79
  %v144 = vunpack.c.l.bf16 %v80
  %v145 = vld [vmem:[%s1] sm:$0x1]
  %v147 = vlaneseq
  %v148 = vshrl.u32 %v147, 7
  %v149 = vsub.s32 0, %v148
  %v150 = vrot.slane %v145, %v149
  %v152 = vmul.f32 %v81, %v150
  %v153 = vmul.f32 %v82, %v150
  %v154 = vmul.f32 %v83, %v150
  %v155 = vmul.f32 %v84, %v150
  %v156 = vmul.f32 %v85, %v150
  %v157 = vmul.f32 %v86, %v150
  %v158 = vmul.f32 %v87, %v150
  %v159 = vmul.f32 %v88, %v150
  %v160 = vmul.f32 %v89, %v150
  %v161 = vmul.f32 %v90, %v150
  %v162 = vmul.f32 %v91, %v150
  %v163 = vmul.f32 %v92, %v150
  %v164 = vmul.f32 %v93, %v150
  %v165 = vmul.f32 %v94, %v150
  %v166 = vmul.f32 %v95, %v150
  %v167 = vmul.f32 %v96, %v150
  %v168 = vmul.f32 %v97, %v150
  %v169 = vmul.f32 %v98, %v150
  %v170 = vmul.f32 %v99, %v150
  %v171 = vmul.f32 %v100, %v150
  %v172 = vmul.f32 %v101, %v150
  %v173 = vmul.f32 %v102, %v150
  %v174 = vmul.f32 %v103, %v150
  %v175 = vmul.f32 %v104, %v150
  %v176 = vmul.f32 %v105, %v150
  %v177 = vmul.f32 %v106, %v150
  %v178 = vmul.f32 %v107, %v150
  %v179 = vmul.f32 %v108, %v150
  %v180 = vmul.f32 %v109, %v150
  %v181 = vmul.f32 %v110, %v150
  %v182 = vmul.f32 %v111, %v150
  %v183 = vmul.f32 %v112, %v150
  %v184 = vmul.f32 %v113, %v150
  %v185 = vmul.f32 %v114, %v150
  %v186 = vmul.f32 %v115, %v150
  %v187 = vmul.f32 %v116, %v150
  %v188 = vmul.f32 %v117, %v150
  %v189 = vmul.f32 %v118, %v150
  %v190 = vmul.f32 %v119, %v150
  %v191 = vmul.f32 %v120, %v150
  %v192 = vmul.f32 %v121, %v150
  %v193 = vmul.f32 %v122, %v150
  %v194 = vmul.f32 %v123, %v150
  %v195 = vmul.f32 %v124, %v150
  %v196 = vmul.f32 %v125, %v150
  %v197 = vmul.f32 %v126, %v150
  %v198 = vmul.f32 %v127, %v150
  %v199 = vmul.f32 %v128, %v150
  %v200 = vmul.f32 %v129, %v150
  %v201 = vmul.f32 %v130, %v150
  %v202 = vmul.f32 %v131, %v150
  %v203 = vmul.f32 %v132, %v150
  %v204 = vmul.f32 %v133, %v150
  %v205 = vmul.f32 %v134, %v150
  %v206 = vmul.f32 %v135, %v150
  %v207 = vmul.f32 %v136, %v150
  %v208 = vmul.f32 %v137, %v150
  %v209 = vmul.f32 %v138, %v150
  %v210 = vmul.f32 %v139, %v150
  %v211 = vmul.f32 %v140, %v150
  %v212 = vmul.f32 %v141, %v150
  %v213 = vmul.f32 %v142, %v150
  %v214 = vmul.f32 %v143, %v150
  %v215 = vmul.f32 %v144, %v150
  %v216 = vld [vmem:[%s2] sm:$0x1]
  %v218 = vlaneseq
  %v219 = vshrl.u32 %v218, 7
  %v220 = vsub.s32 0, %v219
  %v221 = vrot.slane %v216, %v220
  %v223 = vadd.f32 %v152, %v221
  %v224 = vadd.f32 %v153, %v221
  %v225 = vadd.f32 %v154, %v221
  %v226 = vadd.f32 %v155, %v221
  %v227 = vadd.f32 %v156, %v221
  %v228 = vadd.f32 %v157, %v221
  %v229 = vadd.f32 %v158, %v221
  %v230 = vadd.f32 %v159, %v221
  %v231 = vadd.f32 %v160, %v221
  %v232 = vadd.f32 %v161, %v221
  %v233 = vadd.f32 %v162, %v221
  %v234 = vadd.f32 %v163, %v221
  %v235 = vadd.f32 %v164, %v221
  %v236 = vadd.f32 %v165, %v221
  %v237 = vadd.f32 %v166, %v221
  %v238 = vadd.f32 %v167, %v221
  %v239 = vadd.f32 %v168, %v221
  %v240 = vadd.f32 %v169, %v221
  %v241 = vadd.f32 %v170, %v221
  %v242 = vadd.f32 %v171, %v221
  %v243 = vadd.f32 %v172, %v221
  %v244 = vadd.f32 %v173, %v221
  %v245 = vadd.f32 %v174, %v221
  %v246 = vadd.f32 %v175, %v221
  %v247 = vadd.f32 %v176, %v221
  %v248 = vadd.f32 %v177, %v221
  %v249 = vadd.f32 %v178, %v221
  %v250 = vadd.f32 %v179, %v221
  %v251 = vadd.f32 %v180, %v221
  %v252 = vadd.f32 %v181, %v221
  %v253 = vadd.f32 %v182, %v221
  %v254 = vadd.f32 %v183, %v221
  %v255 = vadd.f32 %v184, %v221
  %v256 = vadd.f32 %v185, %v221
  %v257 = vadd.f32 %v186, %v221
  %v258 = vadd.f32 %v187, %v221
  %v259 = vadd.f32 %v188, %v221
  %v260 = vadd.f32 %v189, %v221
  %v261 = vadd.f32 %v190, %v221
  %v262 = vadd.f32 %v191, %v221
  %v263 = vadd.f32 %v192, %v221
  %v264 = vadd.f32 %v193, %v221
  %v265 = vadd.f32 %v194, %v221
  %v266 = vadd.f32 %v195, %v221
  %v267 = vadd.f32 %v196, %v221
  %v268 = vadd.f32 %v197, %v221
  %v269 = vadd.f32 %v198, %v221
  %v270 = vadd.f32 %v199, %v221
  %v271 = vadd.f32 %v200, %v221
  %v272 = vadd.f32 %v201, %v221
  %v273 = vadd.f32 %v202, %v221
  %v274 = vadd.f32 %v203, %v221
  %v275 = vadd.f32 %v204, %v221
  %v276 = vadd.f32 %v205, %v221
  %v277 = vadd.f32 %v206, %v221
  %v278 = vadd.f32 %v207, %v221
  %v279 = vadd.f32 %v208, %v221
  %v280 = vadd.f32 %v209, %v221
  %v281 = vadd.f32 %v210, %v221
  %v282 = vadd.f32 %v211, %v221
  %v283 = vadd.f32 %v212, %v221
  %v284 = vadd.f32 %v213, %v221
  %v285 = vadd.f32 %v214, %v221
  %v286 = vadd.f32 %v215, %v221
  %v287 = vld [vmem:[%s3] sm:$0xff]
  %v288 = vld [vmem:[%s3 + $0x8] sm:$0xff]
  %v289 = vld [vmem:[%s3 + $0x10] sm:$0xff]
  %v290 = vld [vmem:[%s3 + $0x18] sm:$0xff]
  %v291 = vld [vmem:[%s3 + $0x20] sm:$0xff]
  %v292 = vld [vmem:[%s3 + $0x28] sm:$0xff]
  %v293 = vld [vmem:[%s3 + $0x30] sm:$0xff]
  %v294 = vld [vmem:[%s3 + $0x38] sm:$0xff]
  %v295 = vld [vmem:[%s3 + $0x40] sm:$0xff]
  %v296 = vld [vmem:[%s3 + $0x48] sm:$0xff]
  %v297 = vld [vmem:[%s3 + $0x50] sm:$0xff]
  %v298 = vld [vmem:[%s3 + $0x58] sm:$0xff]
  %v299 = vld [vmem:[%s3 + $0x60] sm:$0xff]
  %v300 = vld [vmem:[%s3 + $0x68] sm:$0xff]
  %v301 = vld [vmem:[%s3 + $0x70] sm:$0xff]
  %v302 = vld [vmem:[%s3 + $0x78] sm:$0xff]
  %v303 = vld [vmem:[%s3 + $0x80] sm:$0xff]
  %v304 = vld [vmem:[%s3 + $0x88] sm:$0xff]
  %v305 = vld [vmem:[%s3 + $0x90] sm:$0xff]
  %v306 = vld [vmem:[%s3 + $0x98] sm:$0xff]
  %v307 = vld [vmem:[%s3 + $0xa0] sm:$0xff]
  %v308 = vld [vmem:[%s3 + $0xa8] sm:$0xff]
  %v309 = vld [vmem:[%s3 + $0xb0] sm:$0xff]
  %v310 = vld [vmem:[%s3 + $0xb8] sm:$0xff]
  %v311 = vld [vmem:[%s3 + $0xc0] sm:$0xff]
  %v312 = vld [vmem:[%s3 + $0xc8] sm:$0xff]
  %v313 = vld [vmem:[%s3 + $0xd0] sm:$0xff]
  %v314 = vld [vmem:[%s3 + $0xd8] sm:$0xff]
  %v315 = vld [vmem:[%s3 + $0xe0] sm:$0xff]
  %v316 = vld [vmem:[%s3 + $0xe8] sm:$0xff]
  %v317 = vld [vmem:[%s3 + $0xf0] sm:$0xff]
  %v318 = vld [vmem:[%s3 + $0xf8] sm:$0xff]
  %v319 = vld [vmem:[%s3 + $0x100] sm:$0xff]
  %v320 = vld [vmem:[%s3 + $0x108] sm:$0xff]
  %v321 = vld [vmem:[%s3 + $0x110] sm:$0xff]
  %v322 = vld [vmem:[%s3 + $0x118] sm:$0xff]
  %v323 = vld [vmem:[%s3 + $0x120] sm:$0xff]
  %v324 = vld [vmem:[%s3 + $0x128] sm:$0xff]
  %v325 = vld [vmem:[%s3 + $0x130] sm:$0xff]
  %v326 = vld [vmem:[%s3 + $0x138] sm:$0xff]
  %v327 = vld [vmem:[%s3 + $0x140] sm:$0xff]
  %v328 = vld [vmem:[%s3 + $0x148] sm:$0xff]
  %v329 = vld [vmem:[%s3 + $0x150] sm:$0xff]
  %v330 = vld [vmem:[%s3 + $0x158] sm:$0xff]
  %v331 = vld [vmem:[%s3 + $0x160] sm:$0xff]
  %v332 = vld [vmem:[%s3 + $0x168] sm:$0xff]
  %v333 = vld [vmem:[%s3 + $0x170] sm:$0xff]
  %v334 = vld [vmem:[%s3 + $0x178] sm:$0xff]
  %v335 = vld [vmem:[%s3 + $0x180] sm:$0xff]
  %v336 = vld [vmem:[%s3 + $0x188] sm:$0xff]
  %v337 = vld [vmem:[%s3 + $0x190] sm:$0xff]
  %v338 = vld [vmem:[%s3 + $0x198] sm:$0xff]
  %v339 = vld [vmem:[%s3 + $0x1a0] sm:$0xff]
  %v340 = vld [vmem:[%s3 + $0x1a8] sm:$0xff]
  %v341 = vld [vmem:[%s3 + $0x1b0] sm:$0xff]
  %v342 = vld [vmem:[%s3 + $0x1b8] sm:$0xff]
  %v343 = vld [vmem:[%s3 + $0x1c0] sm:$0xff]
  %v344 = vld [vmem:[%s3 + $0x1c8] sm:$0xff]
  %v345 = vld [vmem:[%s3 + $0x1d0] sm:$0xff]
  %v346 = vld [vmem:[%s3 + $0x1d8] sm:$0xff]
  %v347 = vld [vmem:[%s3 + $0x1e0] sm:$0xff]
  %v348 = vld [vmem:[%s3 + $0x1e8] sm:$0xff]
  %v349 = vld [vmem:[%s3 + $0x1f0] sm:$0xff]
  %v350 = vld [vmem:[%s3 + $0x1f8] sm:$0xff]
  %v351 = vadd.f32 %v223, %v287
  %v352 = vadd.f32 %v224, %v288
  %v353 = vadd.f32 %v225, %v289
  %v354 = vadd.f32 %v226, %v290
  %v355 = vadd.f32 %v227, %v291
  %v356 = vadd.f32 %v228, %v292
  %v357 = vadd.f32 %v229, %v293
  %v358 = vadd.f32 %v230, %v294
  %v359 = vadd.f32 %v231, %v295
  %v360 = vadd.f32 %v232, %v296
  %v361 = vadd.f32 %v233, %v297
  %v362 = vadd.f32 %v234, %v298
  %v363 = vadd.f32 %v235, %v299
  %v364 = vadd.f32 %v236, %v300
  %v365 = vadd.f32 %v237, %v301
  %v366 = vadd.f32 %v238, %v302
  %v367 = vadd.f32 %v239, %v303
  %v368 = vadd.f32 %v240, %v304
  %v369 = vadd.f32 %v241, %v305
  %v370 = vadd.f32 %v242, %v306
  %v371 = vadd.f32 %v243, %v307
  %v372 = vadd.f32 %v244, %v308
  %v373 = vadd.f32 %v245, %v309
  %v374 = vadd.f32 %v246, %v310
  %v375 = vadd.f32 %v247, %v311
  %v376 = vadd.f32 %v248, %v312
  %v377 = vadd.f32 %v249, %v313
  %v378 = vadd.f32 %v250, %v314
  %v379 = vadd.f32 %v251, %v315
  %v380 = vadd.f32 %v252, %v316
  %v381 = vadd.f32 %v253, %v317
  %v382 = vadd.f32 %v254, %v318
  %v383 = vadd.f32 %v255, %v319
  %v384 = vadd.f32 %v256, %v320
  %v385 = vadd.f32 %v257, %v321
  %v386 = vadd.f32 %v258, %v322
  %v387 = vadd.f32 %v259, %v323
  %v388 = vadd.f32 %v260, %v324
  %v389 = vadd.f32 %v261, %v325
  %v390 = vadd.f32 %v262, %v326
  %v391 = vadd.f32 %v263, %v327
  %v392 = vadd.f32 %v264, %v328
  %v393 = vadd.f32 %v265, %v329
  %v394 = vadd.f32 %v266, %v330
  %v395 = vadd.f32 %v267, %v331
  %v396 = vadd.f32 %v268, %v332
  %v397 = vadd.f32 %v269, %v333
  %v398 = vadd.f32 %v270, %v334
  %v399 = vadd.f32 %v271, %v335
  %v400 = vadd.f32 %v272, %v336
  %v401 = vadd.f32 %v273, %v337
  %v402 = vadd.f32 %v274, %v338
  %v403 = vadd.f32 %v275, %v339
  %v404 = vadd.f32 %v276, %v340
  %v405 = vadd.f32 %v277, %v341
  %v406 = vadd.f32 %v278, %v342
  %v407 = vadd.f32 %v279, %v343
  %v408 = vadd.f32 %v280, %v344
  %v409 = vadd.f32 %v281, %v345
  %v410 = vadd.f32 %v282, %v346
  %v411 = vadd.f32 %v283, %v347
  %v412 = vadd.f32 %v284, %v348
  %v413 = vadd.f32 %v285, %v349
  %v414 = vadd.f32 %v286, %v350
  %v415 = vmax.f32 %v351, 0.0
  %v416 = vmax.f32 %v352, 0.0
  %v417 = vmax.f32 %v353, 0.0
  %v418 = vmax.f32 %v354, 0.0
  %v419 = vmax.f32 %v355, 0.0
  %v420 = vmax.f32 %v356, 0.0
  %v421 = vmax.f32 %v357, 0.0
  %v422 = vmax.f32 %v358, 0.0
  %v423 = vmax.f32 %v359, 0.0
  %v424 = vmax.f32 %v360, 0.0
  %v425 = vmax.f32 %v361, 0.0
  %v426 = vmax.f32 %v362, 0.0
  %v427 = vmax.f32 %v363, 0.0
  %v428 = vmax.f32 %v364, 0.0
  %v429 = vmax.f32 %v365, 0.0
  %v430 = vmax.f32 %v366, 0.0
  %v431 = vmax.f32 %v367, 0.0
  %v432 = vmax.f32 %v368, 0.0
  %v433 = vmax.f32 %v369, 0.0
  %v434 = vmax.f32 %v370, 0.0
  %v435 = vmax.f32 %v371, 0.0
  %v436 = vmax.f32 %v372, 0.0
  %v437 = vmax.f32 %v373, 0.0
  %v438 = vmax.f32 %v374, 0.0
  %v439 = vmax.f32 %v375, 0.0
  %v440 = vmax.f32 %v376, 0.0
  %v441 = vmax.f32 %v377, 0.0
  %v442 = vmax.f32 %v378, 0.0
  %v443 = vmax.f32 %v379, 0.0
  %v444 = vmax.f32 %v380, 0.0
  %v445 = vmax.f32 %v381, 0.0
  %v446 = vmax.f32 %v382, 0.0
  %v447 = vmax.f32 %v383, 0.0
  %v448 = vmax.f32 %v384, 0.0
  %v449 = vmax.f32 %v385, 0.0
  %v450 = vmax.f32 %v386, 0.0
  %v451 = vmax.f32 %v387, 0.0
  %v452 = vmax.f32 %v388, 0.0
  %v453 = vmax.f32 %v389, 0.0
  %v454 = vmax.f32 %v390, 0.0
  %v455 = vmax.f32 %v391, 0.0
  %v456 = vmax.f32 %v392, 0.0
  %v457 = vmax.f32 %v393, 0.0
  %v458 = vmax.f32 %v394, 0.0
  %v459 = vmax.f32 %v395, 0.0
  %v460 = vmax.f32 %v396, 0.0
  %v461 = vmax.f32 %v397, 0.0
  %v462 = vmax.f32 %v398, 0.0
  %v463 = vmax.f32 %v399, 0.0
  %v464 = vmax.f32 %v400, 0.0
  %v465 = vmax.f32 %v401, 0.0
  %v466 = vmax.f32 %v402, 0.0
  %v467 = vmax.f32 %v403, 0.0
  %v468 = vmax.f32 %v404, 0.0
  %v469 = vmax.f32 %v405, 0.0
  %v470 = vmax.f32 %v406, 0.0
  %v471 = vmax.f32 %v407, 0.0
  %v472 = vmax.f32 %v408, 0.0
  %v473 = vmax.f32 %v409, 0.0
  %v474 = vmax.f32 %v410, 0.0
  %v475 = vmax.f32 %v411, 0.0
  %v476 = vmax.f32 %v412, 0.0
  %v477 = vmax.f32 %v413, 0.0
  %v478 = vmax.f32 %v414, 0.0
  %vm479 = vcmask 64512
  %480 = vst.msk [vmem:[%s4] sm:$0xff] %vm479, %v415
  %481 = vst.msk [vmem:[%s4 + $0x8] sm:$0xff] %vm479, %v416
  %482 = vst.msk [vmem:[%s4 + $0x10] sm:$0xff] %vm479, %v417
  %483 = vst.msk [vmem:[%s4 + $0x18] sm:$0xff] %vm479, %v418
  %484 = vst.msk [vmem:[%s4 + $0x20] sm:$0xff] %vm479, %v419
  %485 = vst.msk [vmem:[%s4 + $0x28] sm:$0xff] %vm479, %v420
  %486 = vst.msk [vmem:[%s4 + $0x30] sm:$0xff] %vm479, %v421
  %487 = vst.msk [vmem:[%s4 + $0x38] sm:$0xff] %vm479, %v422
  %488 = vst.msk [vmem:[%s4 + $0x40] sm:$0xff] %vm479, %v423
  %489 = vst.msk [vmem:[%s4 + $0x48] sm:$0xff] %vm479, %v424
  %490 = vst.msk [vmem:[%s4 + $0x50] sm:$0xff] %vm479, %v425
  %491 = vst.msk [vmem:[%s4 + $0x58] sm:$0xff] %vm479, %v426
  %492 = vst.msk [vmem:[%s4 + $0x60] sm:$0xff] %vm479, %v427
  %493 = vst.msk [vmem:[%s4 + $0x68] sm:$0xff] %vm479, %v428
  %494 = vst.msk [vmem:[%s4 + $0x70] sm:$0xff] %vm479, %v429
  %495 = vst.msk [vmem:[%s4 + $0x78] sm:$0xff] %vm479, %v430
  %496 = vst.msk [vmem:[%s4 + $0x80] sm:$0xff] %vm479, %v431
  %497 = vst.msk [vmem:[%s4 + $0x88] sm:$0xff] %vm479, %v432
  %498 = vst.msk [vmem:[%s4 + $0x90] sm:$0xff] %vm479, %v433
  %499 = vst.msk [vmem:[%s4 + $0x98] sm:$0xff] %vm479, %v434
  %500 = vst.msk [vmem:[%s4 + $0xa0] sm:$0xff] %vm479, %v435
  %501 = vst.msk [vmem:[%s4 + $0xa8] sm:$0xff] %vm479, %v436
  %502 = vst.msk [vmem:[%s4 + $0xb0] sm:$0xff] %vm479, %v437
  %503 = vst.msk [vmem:[%s4 + $0xb8] sm:$0xff] %vm479, %v438
  %504 = vst.msk [vmem:[%s4 + $0xc0] sm:$0xff] %vm479, %v439
  %505 = vst.msk [vmem:[%s4 + $0xc8] sm:$0xff] %vm479, %v440
  %506 = vst.msk [vmem:[%s4 + $0xd0] sm:$0xff] %vm479, %v441
  %507 = vst.msk [vmem:[%s4 + $0xd8] sm:$0xff] %vm479, %v442
  %508 = vst.msk [vmem:[%s4 + $0xe0] sm:$0xff] %vm479, %v443
  %509 = vst.msk [vmem:[%s4 + $0xe8] sm:$0xff] %vm479, %v444
  %510 = vst.msk [vmem:[%s4 + $0xf0] sm:$0xff] %vm479, %v445
  %511 = vst.msk [vmem:[%s4 + $0xf8] sm:$0xff] %vm479, %v446
  %512 = vst.msk [vmem:[%s4 + $0x100] sm:$0xff] %vm479, %v447
  %513 = vst.msk [vmem:[%s4 + $0x108] sm:$0xff] %vm479, %v448
  %514 = vst.msk [vmem:[%s4 + $0x110] sm:$0xff] %vm479, %v449
  %515 = vst.msk [vmem:[%s4 + $0x118] sm:$0xff] %vm479, %v450
  %516 = vst.msk [vmem:[%s4 + $0x120] sm:$0xff] %vm479, %v451
  %517 = vst.msk [vmem:[%s4 + $0x128] sm:$0xff] %vm479, %v452
  %518 = vst.msk [vmem:[%s4 + $0x130] sm:$0xff] %vm479, %v453
  %519 = vst.msk [vmem:[%s4 + $0x138] sm:$0xff] %vm479, %v454
  %520 = vst.msk [vmem:[%s4 + $0x140] sm:$0xff] %vm479, %v455
  %521 = vst.msk [vmem:[%s4 + $0x148] sm:$0xff] %vm479, %v456
  %522 = vst.msk [vmem:[%s4 + $0x150] sm:$0xff] %vm479, %v457
  %523 = vst.msk [vmem:[%s4 + $0x158] sm:$0xff] %vm479, %v458
  %524 = vst.msk [vmem:[%s4 + $0x160] sm:$0xff] %vm479, %v459
  %525 = vst.msk [vmem:[%s4 + $0x168] sm:$0xff] %vm479, %v460
  %526 = vst.msk [vmem:[%s4 + $0x170] sm:$0xff] %vm479, %v461
  %527 = vst.msk [vmem:[%s4 + $0x178] sm:$0xff] %vm479, %v462
  %528 = vst.msk [vmem:[%s4 + $0x180] sm:$0xff] %vm479, %v463
  %529 = vst.msk [vmem:[%s4 + $0x188] sm:$0xff] %vm479, %v464
  %530 = vst.msk [vmem:[%s4 + $0x190] sm:$0xff] %vm479, %v465
  %531 = vst.msk [vmem:[%s4 + $0x198] sm:$0xff] %vm479, %v466
  %532 = vst.msk [vmem:[%s4 + $0x1a0] sm:$0xff] %vm479, %v467
  %533 = vst.msk [vmem:[%s4 + $0x1a8] sm:$0xff] %vm479, %v468
  %534 = vst.msk [vmem:[%s4 + $0x1b0] sm:$0xff] %vm479, %v469
  %535 = vst.msk [vmem:[%s4 + $0x1b8] sm:$0xff] %vm479, %v470
  %536 = vst.msk [vmem:[%s4 + $0x1c0] sm:$0xff] %vm479, %v471
  %537 = vst.msk [vmem:[%s4 + $0x1c8] sm:$0xff] %vm479, %v472
  %538 = vst.msk [vmem:[%s4 + $0x1d0] sm:$0xff] %vm479, %v473
  %539 = vst.msk [vmem:[%s4 + $0x1d8] sm:$0xff] %vm479, %v474
  %540 = vst.msk [vmem:[%s4 + $0x1e0] sm:$0xff] %vm479, %v475
  %541 = vst.msk [vmem:[%s4 + $0x1e8] sm:$0xff] %vm479, %v476
  %542 = vst.msk [vmem:[%s4 + $0x1f0] sm:$0xff] %vm479, %v477
  %543 = vst.msk [vmem:[%s4 + $0x1f8] sm:$0xff] %vm479, %v478
  // Predicated region
  $region18: #{basic_block_forward.5} parent=0 // pred_check
    _
  $region19: #{basic_block_forward.5} parent=0 // pred_check_branch
    %545 = sbr.rel (0) target = $region21
  $region20: #{basic_block_forward.5} parent=0 // pred_region
    _
  $region21: #{basic_block_forward.5} parent=0 // pred_fallthru
    _
  // Predicated region
  $region22: #{basic_block_forward.5} parent=0 // pred_check
    _
  $region23: #{basic_block_forward.5} parent=0 // pred_check_branch
    %547 = sbr.rel (0) target = $region25
  $region24: #{basic_block_forward.5} parent=0 // pred_region
    _
  $region25: #{basic_block_forward.5} parent=0 // pred_fallthru
    _

// kernel: basic_block_forward.3
$region0: #{basic_block_forward.3}
  #allocation0 [shape = 'u32[]', space=smem, size = 0x4, offset = 0x4, fixed_abs, tag = 'smem constant byte address 0x4 - core index']
  #allocation1 [shape = 'u32[144,128]{1,0:T(1,128)}', space=vmem, size = 0x12000, scoped, tag = 'internal scratch']
  #allocation2 [shape = 'bf16[18,18,8]{2,1,0:T(8,128)(2,1)}', space=vmem, size = 0x1b000, scoped, tag = 'scratch operand']
  %s0 = inlined_call_operand.vmem [shape: bf16[2,16,16,8], index: 0, kind: input, shape index: {}]
  %s1 = inlined_call_operand.vmem [shape: bf16[72,128], index: 1, kind: input, shape index: {}]
  %s2 = inlined_call_operand.vmem [shape: bf16[2,16,16,128], index: 2, kind: output, shape index: {0}]
  %s3 = inlined_call_operand.vmem [shape: f32[2,2,128], index: 3, kind: output, shape index: {1}]
  %4 = xla_tuple %s2, %s3
  %s5 = sld [smem:[#allocation0]]
  $region49: #{basic_block_forward.3} parent=0
    _
  %s7 = ssub.s32 1, %s5
  %s8 = scalar_select 0, %s7, %s5
  loop: start=0, step=1, limit=4
  $region2: #{basic_block_forward.3} parent=0 // loop_pre_header
    _
  $region3: #{basic_block_forward.3} parent=0 // loop_header
    %s10 = sphi 0, %s14
    %p11 = scmp.ge.s32.totalorder %s10, 4
    %s20 = sphi 0, %s22
    %s23 = sphi 0, %s20
    %s24 = sphi 0, %s23
    %s40 = sphi 0, %s24
    %s44 = sphi 0, %s44
    %s46 = sphi 0, %s44
    %s47 = sphi 0, %s46
    %s61 = sphi 0, %s47
    %s67 = sphi 0, %s69
    %s70 = sphi 0, %s67
    %s71 = sphi 0, %s70
    %s87 = sphi 0, %s71
    %s93 = sphi 0, %s95
    %s96 = sphi 0, %s93
    %s97 = sphi 0, %s96
    %s113 = sphi 0, %s97
  $region4: #{basic_block_forward.3} parent=0 // loop_header_branch
    %13 = sbr.rel (%p11) target = $region8
  $region5: #{basic_block_forward.3} parent=0 // loop_body
    %s15 = ssub.s32 %s10, 1
    %s16 = ssub.s32 %s10, 2
    %s17 = sadd.s32 %s10, 1
    %s18 = ssub.s32 %s10, %s17
    %p19 = scmp.eq.s32.totalorder %s18, 0
    %s21 = sadd.s32 %s20, 1
    %s22 = scalar_select %p19, %s20, %s21
    %p25 = pneg %p19
    %p26 = scmp.eq.s32.totalorder %s10, 1
    %p27 = por %p25, %p26
    %p28 = scmp.ne.s32.totalorder %s20, %s23
    %p29 = scmp.eq.s32.totalorder %s10, 0
    %p30 = por %p28, %p29
    %p31 = scmp.ne.s32.totalorder %s20, %s23
    %p32 = scmp.eq.s32.totalorder %s15, 1
    %p33 = por %p31, %p32
    %p34 = scmp.ne.s32.totalorder %s23, %s24
    %p35 = scmp.eq.s32.totalorder %s15, 0
    %p36 = por %p34, %p35
    %p37 = scmp.ne.s32.totalorder %s23, %s24
    %p38 = scmp.eq.s32.totalorder %s16, 1
    %p39 = por %p37, %p38
    %p41 = scmp.ne.s32.totalorder %s24, %s40
    %p42 = scmp.eq.s32.totalorder %s16, 0
    %p43 = por %p41, %p42
    %s45 = sadd.s32 %s44, 1
    %p48 = scmp.eq.s32.totalorder %s10, 1
    %p49 = scmp.ne.s32.totalorder %s44, %s46
    %p50 = scmp.eq.s32.totalorder %s10, 0
    %p51 = por %p49, %p50
    %p52 = scmp.ne.s32.totalorder %s44, %s46
    %p53 = scmp.eq.s32.totalorder %s15, 1
    %p54 = por %p52, %p53
    %p55 = scmp.ne.s32.totalorder %s46, %s47
    %p56 = scmp.eq.s32.totalorder %s15, 0
    %p57 = por %p55, %p56
    %p58 = scmp.ne.s32.totalorder %s46, %s47
    %p59 = scmp.eq.s32.totalorder %s16, 1
    %p60 = por %p58, %p59
    %p62 = scmp.ne.s32.totalorder %s47, %s61
    %p63 = scmp.eq.s32.totalorder %s16, 0
    %p64 = por %p62, %p63
    %s65 = ssub.s32 %s10, %s17
    %p66 = scmp.eq.s32.totalorder %s65, 0
    %s68 = sadd.s32 %s67, 1
    %s69 = scalar_select %p66, %s67, %s68
    %p72 = pneg %p66
    %p73 = scmp.eq.s32.totalorder %s10, 1
    %p74 = por %p72, %p73
    %p75 = scmp.ne.s32.totalorder %s67, %s70
    %p76 = scmp.eq.s32.totalorder %s10, 0
    %p77 = por %p75, %p76
    %p78 = scmp.ne.s32.totalorder %s67, %s70
    %p79 = scmp.eq.s32.totalorder %s15, 1
    %p80 = por %p78, %p79
    %p81 = scmp.ne.s32.totalorder %s70, %s71
    %p82 = scmp.eq.s32.totalorder %s15, 0
    %p83 = por %p81, %p82
    %p84 = scmp.ne.s32.totalorder %s70, %s71
    %p85 = scmp.eq.s32.totalorder %s16, 1
    %p86 = por %p84, %p85
    %p88 = scmp.ne.s32.totalorder %s71, %s87
    %p89 = scmp.eq.s32.totalorder %s16, 0
    %p90 = por %p88, %p89
    %s91 = ssub.s32 %s10, %s17
    %p92 = scmp.eq.s32.totalorder %s91, 0
    %s94 = sadd.s32 %s93, 1
    %s95 = scalar_select %p92, %s93, %s94
    %p98 = pneg %p92
    %p99 = scmp.eq.s32.totalorder %s10, 1
    %p100 = por %p98, %p99
    %p101 = scmp.ne.s32.totalorder %s93, %s96
    %p102 = scmp.eq.s32.totalorder %s10, 0
    %p103 = por %p101, %p102
    %p104 = scmp.ne.s32.totalorder %s93, %s96
    %p105 = scmp.eq.s32.totalorder %s15, 1
    %p106 = por %p104, %p105
    %p107 = scmp.ne.s32.totalorder %s96, %s97
    %p108 = scmp.eq.s32.totalorder %s15, 0
    %p109 = por %p107, %p108
    %p110 = scmp.ne.s32.totalorder %s96, %s97
    %p111 = scmp.eq.s32.totalorder %s16, 1
    %p112 = por %p110, %p111
    %p114 = scmp.ne.s32.totalorder %s97, %s113
    %p115 = scmp.eq.s32.totalorder %s16, 0
    %p116 = por %p114, %p115
    %p117 = scmp.le.s32.totalorder 1, %s10
    %p118 = scmp.lt.s32.totalorder %s10, 3
    %p119 = pnand %p117, %p118
    %p120 = pneg %p119
    // Predicated region
    $region9: #{basic_block_forward.3} parent=5 // pred_check
      _
    $region10: #{basic_block_forward.3} parent=5 // pred_check_branch
      %122 = sbr.rel (%p119) target = $region12
    $region11: #{basic_block_forward.3} parent=5 // pred_region
      %s123 = ssub.s32 %s10, 1
      // Predicated region
      $region13: #{basic_block_forward.3} parent=11 // pred_check
        %p124 = pneg %p57
      $region14: #{basic_block_forward.3} parent=11 // pred_check_branch
        %126 = sbr.rel (%p124) target = $region16
      $region15: #{basic_block_forward.3} parent=11 // pred_region
        _
      $region16: #{basic_block_forward.3} parent=11 // pred_fallthru
        _
    $region12: #{basic_block_forward.3} parent=5 // pred_fallthru
      _
    %p127 = scmp.lt.s32.totalorder %s10, 2
    // Predicated region
    $region17: #{basic_block_forward.3} parent=5 // pred_check
      %p128 = pneg %p127
    $region18: #{basic_block_forward.3} parent=5 // pred_check_branch
      %130 = sbr.rel (%p128) target = $region20
    $region19: #{basic_block_forward.3} parent=5 // pred_region
      // Predicated region
      $region21: #{basic_block_forward.3} parent=19 // pred_check
        %p131 = pneg %p30
      $region22: #{basic_block_forward.3} parent=19 // pred_check_branch
        %133 = sbr.rel (%p131) target = $region24
      $region23: #{basic_block_forward.3} parent=19 // pred_region
        %p134 = scmp.lt.s32.totalorder %s10, 1
        %s135 = scalar_select %p134, %s10, 1
        %s136 = smul.addr %s135, 32
        %s137 = smul.addr %s136, 4
        %s138 = scalar_lea.vmem %s0, %s137
      $region24: #{basic_block_forward.3} parent=19 // pred_fallthru
        _
    $region20: #{basic_block_forward.3} parent=5 // pred_fallthru
      _
    %p139 = scmp.le.s32.totalorder 1, %s10
    %p140 = scmp.lt.s32.totalorder %s10, 3
    %p141 = pnand %p139, %p140
    %p142 = pneg %p141
    // Predicated region
    $region25: #{basic_block_forward.3} parent=5 // pred_check
      _
    $region26: #{basic_block_forward.3} parent=5 // pred_check_branch
      %144 = sbr.rel (%p141) target = $region28
    $region27: #{basic_block_forward.3} parent=5 // pred_region
      %s145 = ssub.s32 %s10, 1
      %p146 = scmp.lt.s32.totalorder %s15, 1
      %s147 = scalar_select %p146, %s15, 1
      %s148 = smul.addr %s147, 32
      %s149 = smul.addr %s148, 4
      %s150 = scalar_lea.vmem %s0, %s149
      %p151 = pneg %p36
      %p152 = pneg %p33
      %p153 = pneg %p57
      %p154 = pneg %p54
      %p155 = pneg %p83
      %p156 = pneg %p80
      %p157 = scmp.lt.s32.totalorder %s15, 1
      %s158 = scalar_select %p157, %s15, 1
      %s159 = smul.addr %s158, 32
      %s160 = smul.addr %s159, 4
      %s161 = scalar_lea.vmem %s2, %s160
      %p162 = pneg %p109
      %p163 = pneg %p106
      %p164 = scmp.lt.s32.totalorder %s15, 1
      %s165 = scalar_select %p164, %s15, 1
      %s166 = smul.addr %s165, 2
      %s167 = scalar_lea.vmem %s3, %s166
      %p168 = scmp.lt.s32.totalorder %s15, 1
      %s169 = scalar_select %p168, %s15, 1
      %s170 = smul.addr %s169, 32
      %s171 = smul.addr %s170, 4
      %s172 = scalar_lea.vmem %s0, %s171
      %p173 = scmp.lt.s32.totalorder %s15, 1
      %s174 = scalar_select %p173, %s15, 1
      %s175 = smul.addr %s174, 32
      %s176 = smul.addr %s175, 4
      %s177 = scalar_lea.vmem %s2, %s176
      %p178 = scmp.lt.s32.totalorder %s15, 1
      %s179 = scalar_select %p178, %s15, 1
      %s180 = smul.addr %s179, 2
      %s181 = scalar_lea.vmem %s3, %s180
      %v183 = vld [vmem:[%s172] sm:$0xf]
      %v184 = vld [vmem:[%s172 + $0x4] sm:$0xf]
      %v185 = vld [vmem:[%s172 + $0x8] sm:$0xf]
      %v186 = vld [vmem:[%s172 + $0xc] sm:$0xf]
      %v187 = vld [vmem:[%s172 + $0x10] sm:$0xf]
      %v188 = vld [vmem:[%s172 + $0x14] sm:$0xf]
      %v189 = vld [vmem:[%s172 + $0x18] sm:$0xf]
      %v190 = vld [vmem:[%s172 + $0x1c] sm:$0xf]
      %v191 = vld [vmem:[%s172 + $0x20] sm:$0xf]
      %v192 = vld [vmem:[%s172 + $0x24] sm:$0xf]
      %v193 = vld [vmem:[%s172 + $0x28] sm:$0xf]
      %v194 = vld [vmem:[%s172 + $0x2c] sm:$0xf]
      %v195 = vld [vmem:[%s172 + $0x30] sm:$0xf]
      %v196 = vld [vmem:[%s172 + $0x34] sm:$0xf]
      %v197 = vld [vmem:[%s172 + $0x38] sm:$0xf]
      %v198 = vld [vmem:[%s172 + $0x3c] sm:$0xf]
      %v199 = vld [vmem:[%s172 + $0x40] sm:$0xf]
      %v200 = vld [vmem:[%s172 + $0x44] sm:$0xf]
      %v201 = vld [vmem:[%s172 + $0x48] sm:$0xf]
      %v202 = vld [vmem:[%s172 + $0x4c] sm:$0xf]
      %v203 = vld [vmem:[%s172 + $0x50] sm:$0xf]
      %v204 = vld [vmem:[%s172 + $0x54] sm:$0xf]
      %v205 = vld [vmem:[%s172 + $0x58] sm:$0xf]
      %v206 = vld [vmem:[%s172 + $0x5c] sm:$0xf]
      %v207 = vld [vmem:[%s172 + $0x60] sm:$0xf]
      %v208 = vld [vmem:[%s172 + $0x64] sm:$0xf]
      %v209 = vld [vmem:[%s172 + $0x68] sm:$0xf]
      %v210 = vld [vmem:[%s172 + $0x6c] sm:$0xf]
      %v211 = vld [vmem:[%s172 + $0x70] sm:$0xf]
      %v212 = vld [vmem:[%s172 + $0x74] sm:$0xf]
      %v213 = vld [vmem:[%s172 + $0x78] sm:$0xf]
      %v214 = vld [vmem:[%s172 + $0x7c] sm:$0xf]
      %vm215 = vcmask 60416
      %216 = vst.msk [vmem:[#allocation2] sm:$0xf] %vm215, 0
      %217 = vst.msk [vmem:[#allocation2 + $0x4] sm:$0xf] %vm215, 0
      %vm218 = vcmask 57344
      %219 = vst.msk [vmem:[#allocation2 + $0x8] sm:$0x1] %vm218, 0
      %220 = vst.msk [vmem:[#allocation2 + $0xc] sm:$0xf] %vm215, 0
      %221 = vst.msk [vmem:[#allocation2 + $0x10] sm:$0xf] %vm215, 0
      %222 = vst.msk [vmem:[#allocation2 + $0x14] sm:$0x1] %vm218, 0
      %223 = vst.msk [vmem:[#allocation2 + $0x18] sm:$0xf] %vm215, 0
      %224 = vst.msk [vmem:[#allocation2 + $0x1c] sm:$0xf] %vm215, 0
      %225 = vst.msk [vmem:[#allocation2 + $0x20] sm:$0x1] %vm218, 0
      %226 = vst.msk [vmem:[#allocation2 + $0x24] sm:$0xf] %vm215, 0
      %227 = vst.msk [vmem:[#allocation2 + $0x28] sm:$0xf] %vm215, 0
      %228 = vst.msk [vmem:[#allocation2 + $0x2c] sm:$0x1] %vm218, 0
      %229 = vst.msk [vmem:[#allocation2 + $0x30] sm:$0xf] %vm215, 0
      %230 = vst.msk [vmem:[#allocation2 + $0x34] sm:$0xf] %vm215, 0
      %231 = vst.msk [vmem:[#allocation2 + $0x38] sm:$0x1] %vm218, 0
      %232 = vst.msk [vmem:[#allocation2 + $0x3c] sm:$0xf] %vm215, 0
      %233 = vst.msk [vmem:[#allocation2 + $0x40] sm:$0xf] %vm215, 0
      %234 = vst.msk [vmem:[#allocation2 + $0x44] sm:$0x1] %vm218, 0
      %235 = vst.msk [vmem:[#allocation2 + $0x48] sm:$0xf] %vm215, 0
      %236 = vst.msk [vmem:[#allocation2 + $0x4c] sm:$0xf] %vm215, 0
      %237 = vst.msk [vmem:[#allocation2 + $0x50] sm:$0x1] %vm218, 0
      %238 = vst.msk [vmem:[#allocation2 + $0x54] sm:$0xf] %vm215, 0
      %239 = vst.msk [vmem:[#allocation2 + $0x58] sm:$0xf] %vm215, 0
      %240 = vst.msk [vmem:[#allocation2 + $0x5c] sm:$0x1] %vm218, 0
      %241 = vst.msk [vmem:[#allocation2 + $0x60] sm:$0xf] %vm215, 0
      %242 = vst.msk [vmem:[#allocation2 + $0x64] sm:$0xf] %vm215, 0
      %243 = vst.msk [vmem:[#allocation2 + $0x68] sm:$0x1] %vm218, 0
      %244 = vst.msk [vmem:[#allocation2 + $0x6c] sm:$0xf] %vm215, 0
      %245 = vst.msk [vmem:[#allocation2 + $0x70] sm:$0xf] %vm215, 0
      %246 = vst.msk [vmem:[#allocation2 + $0x74] sm:$0x1] %vm218, 0
      %247 = vst.msk [vmem:[#allocation2 + $0x78] sm:$0xf] %vm215, 0
      %248 = vst.msk [vmem:[#allocation2 + $0x7c] sm:$0xf] %vm215, 0
      %249 = vst.msk [vmem:[#allocation2 + $0x80] sm:$0x1] %vm218, 0
      %250 = vst.msk [vmem:[#allocation2 + $0x84] sm:$0xf] %vm215, 0
      %251 = vst.msk [vmem:[#allocation2 + $0x88] sm:$0xf] %vm215, 0
      %252 = vst.msk [vmem:[#allocation2 + $0x8c] sm:$0x1] %vm218, 0
      %253 = vst.msk [vmem:[#allocation2 + $0x90] sm:$0xf] %vm215, 0
      %254 = vst.msk [vmem:[#allocation2 + $0x94] sm:$0xf] %vm215, 0
      %255 = vst.msk [vmem:[#allocation2 + $0x98] sm:$0x1] %vm218, 0
      %256 = vst.msk [vmem:[#allocation2 + $0x9c] sm:$0xf] %vm215, 0
      %257 = vst.msk [vmem:[#allocation2 + $0xa0] sm:$0xf] %vm215, 0
      %258 = vst.msk [vmem:[#allocation2 + $0xa4] sm:$0x1] %vm218, 0
      %259 = vst.msk [vmem:[#allocation2 + $0xa8] sm:$0xf] %vm215, 0
      %260 = vst.msk [vmem:[#allocation2 + $0xac] sm:$0xf] %vm215, 0
      %261 = vst.msk [vmem:[#allocation2 + $0xb0] sm:$0x1] %vm218, 0
      %262 = vst.msk [vmem:[#allocation2 + $0xb4] sm:$0xf] %vm215, 0
      %263 = vst.msk [vmem:[#allocation2 + $0xb8] sm:$0xf] %vm215, 0
      %264 = vst.msk [vmem:[#allocation2 + $0xbc] sm:$0x1] %vm218, 0
      %265 = vst.msk [vmem:[#allocation2 + $0xc0] sm:$0xf] %vm215, 0
      %266 = vst.msk [vmem:[#allocation2 + $0xc4] sm:$0xf] %vm215, 0
      %267 = vst.msk [vmem:[#allocation2 + $0xc8] sm:$0x1] %vm218, 0
      %268 = vst.msk [vmem:[#allocation2 + $0xcc] sm:$0xf] %vm215, 0
      %269 = vst.msk [vmem:[#allocation2 + $0xd0] sm:$0xf] %vm215, 0
      %270 = vst.msk [vmem:[#allocation2 + $0xd4] sm:$0x1] %vm218, 0
      %vm271 = vsmask.f32 256
      %vm272 = vsmask.f32 4368
      %vm273 = vmor %vm271, %vm272
      %v275 = vshrl.u32 %v183, 16
      %v277 = vrot.slane %v275, 7
      %v278 = vshll.u32 %v183, 16
      %v280 = vor.u32 %v277, %v278
      %v281 = vrot.slane %v277, 4
      %v283 = vshrl.u32 %v184, 16
      %v285 = vrot.slane %v283, 7
      %v286 = vshll.u32 %v184, 16
      %v288 = vor.u32 %v285, %v286
      %v289 = vsel %vm273, %v281, %v288
      %v290 = vrot.slane %v285, 4
      %v292 = vshrl.u32 %v185, 16
      %v294 = vrot.slane %v292, 7
      %v295 = vshll.u32 %v185, 16
      %v297 = vor.u32 %v294, %v295
      %v298 = vrot.slane %v294, 4
      %v300 = vshrl.u32 %v186, 16
      %v302 = vrot.slane %v300, 7
      %v303 = vshll.u32 %v186, 16
      %v305 = vor.u32 %v302, %v303
      %v306 = vsel %vm273, %v298, %v305
      %v307 = vrot.slane %v302, 4
      %v309 = vshrl.u32 %v187, 16
      %v311 = vrot.slane %v309, 7
      %v312 = vshll.u32 %v187, 16
      %v314 = vor.u32 %v311, %v312
      %v315 = vrot.slane %v311, 4
      %v317 = vshrl.u32 %v188, 16
      %v319 = vrot.slane %v317, 7
      %v320 = vshll.u32 %v188, 16
      %v322 = vor.u32 %v319, %v320
      %v323 = vsel %vm273, %v315, %v322
      %v324 = vrot.slane %v319, 4
      %v326 = vshrl.u32 %v189, 16
      %v328 = vrot.slane %v326, 7
      %v329 = vshll.u32 %v189, 16
      %v331 = vor.u32 %v328, %v329
      %v332 = vrot.slane %v328, 4
      %v334 = vshrl.u32 %v190, 16
      %v336 = vrot.slane %v334, 7
      %v337 = vshll.u32 %v190, 16
      %v339 = vor.u32 %v336, %v337
      %v340 = vsel %vm273, %v332, %v339
      %v341 = vrot.slane %v336, 4
      %v343 = vshrl.u32 %v191, 16
      %v345 = vrot.slane %v343, 7
      %v346 = vshll.u32 %v191, 16
      %v348 = vor.u32 %v345, %v346
      %v349 = vrot.slane %v345, 4
      %v351 = vshrl.u32 %v192, 16
      %v353 = vrot.slane %v351, 7
      %v354 = vshll.u32 %v192, 16
      %v356 = vor.u32 %v353, %v354
      %v357 = vsel %vm273, %v349, %v356
      %v358 = vrot.slane %v353, 4
      %v360 = vshrl.u32 %v193, 16
      %v362 = vrot.slane %v360, 7
      %v363 = vshll.u32 %v193, 16
      %v365 = vor.u32 %v362, %v363
      %v366 = vrot.slane %v362, 4
      %v368 = vshrl.u32 %v194, 16
      %v370 = vrot.slane %v368, 7
      %v371 = vshll.u32 %v194, 16
      %v373 = vor.u32 %v370, %v371
      %v374 = vsel %vm273, %v366, %v373
      %v375 = vrot.slane %v370, 4
      %v377 = vshrl.u32 %v195, 16
      %v379 = vrot.slane %v377, 7
      %v380 = vshll.u32 %v195, 16
      %v382 = vor.u32 %v379, %v380
      %v383 = vrot.slane %v379, 4
      %v385 = vshrl.u32 %v196, 16
      %v387 = vrot.slane %v385, 7
      %v388 = vshll.u32 %v196, 16
      %v390 = vor.u32 %v387, %v388
      %v391 = vsel %vm273, %v383, %v390
      %v392 = vrot.slane %v387, 4
      %v394 = vshrl.u32 %v197, 16
      %v396 = vrot.slane %v394, 7
      %v397 = vshll.u32 %v197, 16
      %v399 = vor.u32 %v396, %v397
      %v400 = vrot.slane %v396, 4
      %v402 = vshrl.u32 %v198, 16
      %v404 = vrot.slane %v402, 7
      %v405 = vshll.u32 %v198, 16
      %v407 = vor.u32 %v404, %v405
      %v408 = vsel %vm273, %v400, %v407
      %v409 = vrot.slane %v404, 4
      %v411 = vshrl.u32 %v199, 16
      %v413 = vrot.slane %v411, 7
      %v414 = vshll.u32 %v199, 16
      %v416 = vor.u32 %v413, %v414
      %v417 = vrot.slane %v413, 4
      %v419 = vshrl.u32 %v200, 16
      %v421 = vrot.slane %v419, 7
      %v422 = vshll.u32 %v200, 16
      %v424 = vor.u32 %v421, %v422
      %v425 = vsel %vm273, %v417, %v424
      %v426 = vrot.slane %v421, 4
      %v428 = vshrl.u32 %v201, 16
      %v430 = vrot.slane %v428, 7
      %v431 = vshll.u32 %v201, 16
      %v433 = vor.u32 %v430, %v431
      %v434 = vrot.slane %v430, 4
      %v436 = vshrl.u32 %v202, 16
      %v438 = vrot.slane %v436, 7
      %v439 = vshll.u32 %v202, 16
      %v441 = vor.u32 %v438, %v439
      %v442 = vsel %vm273, %v434, %v441
      %v443 = vrot.slane %v438, 4
      %v445 = vshrl.u32 %v203, 16
      %v447 = vrot.slane %v445, 7
      %v448 = vshll.u32 %v203, 16
      %v450 = vor.u32 %v447, %v448
      %v451 = vrot.slane %v447, 4
      %v453 = vshrl.u32 %v204, 16
      %v455 = vrot.slane %v453, 7
      %v456 = vshll.u32 %v204, 16
      %v458 = vor.u32 %v455, %v456
      %v459 = vsel %vm273, %v451, %v458
      %v460 = vrot.slane %v455, 4
      %v462 = vshrl.u32 %v205, 16
      %v464 = vrot.slane %v462, 7
      %v465 = vshll.u32 %v205, 16
      %v467 = vor.u32 %v464, %v465
      %v468 = vrot.slane %v464, 4
      %v470 = vshrl.u32 %v206, 16
      %v472 = vrot.slane %v470, 7
      %v473 = vshll.u32 %v206, 16
      %v475 = vor.u32 %v472, %v473
      %v476 = vsel %vm273, %v468, %v475
      %v477 = vrot.slane %v472, 4
      %v479 = vshrl.u32 %v207, 16
      %v481 = vrot.slane %v479, 7
      %v482 = vshll.u32 %v207, 16
      %v484 = vor.u32 %v481, %v482
      %v485 = vrot.slane %v481, 4
      %v487 = vshrl.u32 %v208, 16
      %v489 = vrot.slane %v487, 7
      %v490 = vshll.u32 %v208, 16
      %v492 = vor.u32 %v489, %v490
      %v493 = vsel %vm273, %v485, %v492
      %v494 = vrot.slane %v489, 4
      %v496 = vshrl.u32 %v209, 16
      %v498 = vrot.slane %v496, 7
      %v499 = vshll.u32 %v209, 16
      %v501 = vor.u32 %v498, %v499
      %v502 = vrot.slane %v498, 4
      %v504 = vshrl.u32 %v210, 16
      %v506 = vrot.slane %v504, 7
      %v507 = vshll.u32 %v210, 16
      %v509 = vor.u32 %v506, %v507
      %v510 = vsel %vm273, %v502, %v509
      %v511 = vrot.slane %v506, 4
      %v513 = vshrl.u32 %v211, 16
      %v515 = vrot.slane %v513, 7
      %v516 = vshll.u32 %v211, 16
      %v518 = vor.u32 %v515, %v516
      %v519 = vrot.slane %v515, 4
      %v521 = vshrl.u32 %v212, 16
      %v523 = vrot.slane %v521, 7
      %v524 = vshll.u32 %v212, 16
      %v526 = vor.u32 %v523, %v524
      %v527 = vsel %vm273, %v519, %v526
      %v528 = vrot.slane %v523, 4
      %v530 = vshrl.u32 %v213, 16
      %v532 = vrot.slane %v530, 7
      %v533 = vshll.u32 %v213, 16
      %v535 = vor.u32 %v532, %v533
      %v536 = vrot.slane %v532, 4
      %v538 = vshrl.u32 %v214, 16
      %v540 = vrot.slane %v538, 7
      %v541 = vshll.u32 %v214, 16
      %v543 = vor.u32 %v540, %v541
      %v544 = vsel %vm273, %v536, %v543
      %v545 = vrot.slane %v540, 4
      %s594 = scalar_lea.vmem [#allocation2], 12
      %vm595 = vcmask 60416
      %vm596 = vsmask.f32 7938
      %vm597 = vmand %vm595, %vm596
      %v598 = vld [vmem:[%s594] sm:$0xf]
      %v599 = vsel %vm597, %v280, %v598
      %600 = vst [vmem:[%s594] sm:$0xf] %v599
      %601 = vst.msk [vmem:[%s594 + $0x4] sm:$0xf] %vm215, %v289
      %vm602 = vcmask 57344
      %vm603 = vmand %vm602, %vm271
      %v604 = vld [vmem:[%s594 + $0x8] sm:$0x1]
      %v605 = vsel %vm603, %v290, %v604
      %606 = vst [vmem:[%s594 + $0x8] sm:$0x1] %v605
      %v607 = vld [vmem:[%s594 + $0xc] sm:$0xf]
      %v608 = vsel %vm597, %v297, %v607
      %609 = vst [vmem:[%s594 + $0xc] sm:$0xf] %v608
      %610 = vst.msk [vmem:[%s594 + $0x10] sm:$0xf] %vm215, %v306
      %v611 = vld [vmem:[%s594 + $0x14] sm:$0x1]
      %v612 = vsel %vm603, %v307, %v611
      %613 = vst [vmem:[%s594 + $0x14] sm:$0x1] %v612
      %v614 = vld [vmem:[%s594 + $0x18] sm:$0xf]
      %v615 = vsel %vm597, %v314, %v614
      %616 = vst [vmem:[%s594 + $0x18] sm:$0xf] %v615
      %617 = vst.msk [vmem:[%s594 + $0x1c] sm:$0xf] %vm215, %v323
      %v618 = vld [vmem:[%s594 + $0x20] sm:$0x1]
      %v619 = vsel %vm603, %v324, %v618
      %620 = vst [vmem:[%s594 + $0x20] sm:$0x1] %v619
      %v621 = vld [vmem:[%s594 + $0x24] sm:$0xf]
      %v622 = vsel %vm597, %v331, %v621
      %623 = vst [vmem:[%s594 + $0x24] sm:$0xf] %v622
      %624 = vst.msk [vmem:[%s594 + $0x28] sm:$0xf] %vm215, %v340
      %v625 = vld [vmem:[%s594 + $0x2c] sm:$0x1]
      %v626 = vsel %vm603, %v341, %v625
      %627 = vst [vmem:[%s594 + $0x2c] sm:$0x1] %v626
      %v628 = vld [vmem:[%s594 + $0x30] sm:$0xf]
      %v629 = vsel %vm597, %v348, %v628
      %630 = vst [vmem:[%s594 + $0x30] sm:$0xf] %v629
      %631 = vst.msk [vmem:[%s594 + $0x34] sm:$0xf] %vm215, %v357
      %v632 = vld [vmem:[%s594 + $0x38] sm:$0x1]
      %v633 = vsel %vm603, %v358, %v632
      %634 = vst [vmem:[%s594 + $0x38] sm:$0x1] %v633
      %v635 = vld [vmem:[%s594 + $0x3c] sm:$0xf]
      %v636 = vsel %vm597, %v365, %v635
      %637 = vst [vmem:[%s594 + $0x3c] sm:$0xf] %v636
      %638 = vst.msk [vmem:[%s594 + $0x40] sm:$0xf] %vm215, %v374
      %v639 = vld [vmem:[%s594 + $0x44] sm:$0x1]
      %v640 = vsel %vm603, %v375, %v639
      %641 = vst [vmem:[%s594 + $0x44] sm:$0x1] %v640
      %v642 = vld [vmem:[%s594 + $0x48] sm:$0xf]
      %v643 = vsel %vm597, %v382, %v642
      %644 = vst [vmem:[%s594 + $0x48] sm:$0xf] %v643
      %645 = vst.msk [vmem:[%s594 + $0x4c] sm:$0xf] %vm215, %v391
      %v646 = vld [vmem:[%s594 + $0x50] sm:$0x1]
      %v647 = vsel %vm603, %v392, %v646
      %648 = vst [vmem:[%s594 + $0x50] sm:$0x1] %v647
      %v649 = vld [vmem:[%s594 + $0x54] sm:$0xf]
      %v650 = vsel %vm597, %v399, %v649
      %651 = vst [vmem:[%s594 + $0x54] sm:$0xf] %v650
      %652 = vst.msk [vmem:[%s594 + $0x58] sm:$0xf] %vm215, %v408
      %v653 = vld [vmem:[%s594 + $0x5c] sm:$0x1]
      %v654 = vsel %vm603, %v409, %v653
      %655 = vst [vmem:[%s594 + $0x5c] sm:$0x1] %v654
      %v656 = vld [vmem:[%s594 + $0x60] sm:$0xf]
      %v657 = vsel %vm597, %v416, %v656
      %658 = vst [vmem:[%s594 + $0x60] sm:$0xf] %v657
      %659 = vst.msk [vmem:[%s594 + $0x64] sm:$0xf] %vm215, %v425
      %v660 = vld [vmem:[%s594 + $0x68] sm:$0x1]
      %v661 = vsel %vm603, %v426, %v660
      %662 = vst [vmem:[%s594 + $0x68] sm:$0x1] %v661
      %v663 = vld [vmem:[%s594 + $0x6c] sm:$0xf]
      %v664 = vsel %vm597, %v433, %v663
      %665 = vst [vmem:[%s594 + $0x6c] sm:$0xf] %v664
      %666 = vst.msk [vmem:[%s594 + $0x70] sm:$0xf] %vm215, %v442
      %v667 = vld [vmem:[%s594 + $0x74] sm:$0x1]
      %v668 = vsel %vm603, %v443, %v667
      %669 = vst [vmem:[%s594 + $0x74] sm:$0x1] %v668
      %v670 = vld [vmem:[%s594 + $0x78] sm:$0xf]
      %v671 = vsel %vm597, %v450, %v670
      %672 = vst [vmem:[%s594 + $0x78] sm:$0xf] %v671
      %673 = vst.msk [vmem:[%s594 + $0x7c] sm:$0xf] %vm215, %v459
      %v674 = vld [vmem:[%s594 + $0x80] sm:$0x1]
      %v675 = vsel %vm603, %v460, %v674
      %676 = vst [vmem:[%s594 + $0x80] sm:$0x1] %v675
      %v677 = vld [vmem:[%s594 + $0x84] sm:$0xf]
      %v678 = vsel %vm597, %v467, %v677
      %679 = vst [vmem:[%s594 + $0x84] sm:$0xf] %v678
      %680 = vst.msk [vmem:[%s594 + $0x88] sm:$0xf] %vm215, %v476
      %v681 = vld [vmem:[%s594 + $0x8c] sm:$0x1]
      %v682 = vsel %vm603, %v477, %v681
      %683 = vst [vmem:[%s594 + $0x8c] sm:$0x1] %v682
      %v684 = vld [vmem:[%s594 + $0x90] sm:$0xf]
      %v685 = vsel %vm597, %v484, %v684
      %686 = vst [vmem:[%s594 + $0x90] sm:$0xf] %v685
      %687 = vst.msk [vmem:[%s594 + $0x94] sm:$0xf] %vm215, %v493
      %v688 = vld [vmem:[%s594 + $0x98] sm:$0x1]
      %v689 = vsel %vm603, %v494, %v688
      %690 = vst [vmem:[%s594 + $0x98] sm:$0x1] %v689
      %v691 = vld [vmem:[%s594 + $0x9c] sm:$0xf]
      %v692 = vsel %vm597, %v501, %v691
      %693 = vst [vmem:[%s594 + $0x9c] sm:$0xf] %v692
      %694 = vst.msk [vmem:[%s594 + $0xa0] sm:$0xf] %vm215, %v510
      %v695 = vld [vmem:[%s594 + $0xa4] sm:$0x1]
      %v696 = vsel %vm603, %v511, %v695
      %697 = vst [vmem:[%s594 + $0xa4] sm:$0x1] %v696
      %v698 = vld [vmem:[%s594 + $0xa8] sm:$0xf]
      %v699 = vsel %vm597, %v518, %v698
      %700 = vst [vmem:[%s594 + $0xa8] sm:$0xf] %v699
      %701 = vst.msk [vmem:[%s594 + $0xac] sm:$0xf] %vm215, %v527
      %v702 = vld [vmem:[%s594 + $0xb0] sm:$0x1]
      %v703 = vsel %vm603, %v528, %v702
      %704 = vst [vmem:[%s594 + $0xb0] sm:$0x1] %v703
      %v705 = vld [vmem:[%s594 + $0xb4] sm:$0xf]
      %v706 = vsel %vm597, %v535, %v705
      %707 = vst [vmem:[%s594 + $0xb4] sm:$0xf] %v706
      %708 = vst.msk [vmem:[%s594 + $0xb8] sm:$0xf] %vm215, %v544
      %v709 = vld [vmem:[%s594 + $0xbc] sm:$0x1]
      %v710 = vsel %vm603, %v545, %v709
      %711 = vst [vmem:[%s594 + $0xbc] sm:$0x1] %v710
      %v712 = vld [vmem:[#allocation2] sm:$0xf]
      %v713 = vld [vmem:[#allocation2 + $0x4] sm:$0xf]
      %v714 = vld [vmem:[#allocation2 + $0x8] sm:$0x1]
      %v715 = vld [vmem:[#allocation2 + $0xc] sm:$0xf]
      %v716 = vld [vmem:[#allocation2 + $0x10] sm:$0xf]
      %v717 = vld [vmem:[#allocation2 + $0x14] sm:$0x1]
      %v718 = vld [vmem:[#allocation2 + $0x18] sm:$0xf]
      %v719 = vld [vmem:[#allocation2 + $0x1c] sm:$0xf]
      %v720 = vld [vmem:[#allocation2 + $0x20] sm:$0x1]
      %v721 = vld [vmem:[#allocation2 + $0x24] sm:$0xf]
      %v722 = vld [vmem:[#allocation2 + $0x28] sm:$0xf]
      %v723 = vld [vmem:[#allocation2 + $0x2c] sm:$0x1]
      %v724 = vld [vmem:[#allocation2 + $0x30] sm:$0xf]
      %v725 = vld [vmem:[#allocation2 + $0x34] sm:$0xf]
      %v726 = vld [vmem:[#allocation2 + $0x38] sm:$0x1]
      %v727 = vld [vmem:[#allocation2 + $0x3c] sm:$0xf]
      %v728 = vld [vmem:[#allocation2 + $0x40] sm:$0xf]
      %v729 = vld [vmem:[#allocation2 + $0x44] sm:$0x1]
      %v730 = vld [vmem:[#allocation2 + $0x48] sm:$0xf]
      %v731 = vld [vmem:[#allocation2 + $0x4c] sm:$0xf]
      %v732 = vld [vmem:[#allocation2 + $0x50] sm:$0x1]
      %v733 = vld [vmem:[#allocation2 + $0x54] sm:$0xf]
      %v734 = vld [vmem:[#allocation2 + $0x58] sm:$0xf]
      %v735 = vld [vmem:[#allocation2 + $0x5c] sm:$0x1]
      %v736 = vld [vmem:[#allocation2 + $0x60] sm:$0xf]
      %v737 = vld [vmem:[#allocation2 + $0x64] sm:$0xf]
      %v738 = vld [vmem:[#allocation2 + $0x68] sm:$0x1]
      %v739 = vld [vmem:[#allocation2 + $0x6c] sm:$0xf]
      %v740 = vld [vmem:[#allocation2 + $0x70] sm:$0xf]
      %v741 = vld [vmem:[#allocation2 + $0x74] sm:$0x1]
      %v742 = vld [vmem:[#allocation2 + $0x78] sm:$0xf]
      %v743 = vld [vmem:[#allocation2 + $0x7c] sm:$0xf]
      %v744 = vld [vmem:[#allocation2 + $0x80] sm:$0x1]
      %v745 = vld [vmem:[#allocation2 + $0x84] sm:$0xf]
      %v746 = vld [vmem:[#allocation2 + $0x88] sm:$0xf]
      %v747 = vld [vmem:[#allocation2 + $0x8c] sm:$0x1]
      %v748 = vld [vmem:[#allocation2 + $0x90] sm:$0xf]
      %v749 = vld [vmem:[#allocation2 + $0x94] sm:$0xf]
      %v750 = vld [vmem:[#allocation2 + $0x98] sm:$0x1]
      %v751 = vld [vmem:[#allocation2 + $0x9c] sm:$0xf]
      %v752 = vld [vmem:[#allocation2 + $0xa0] sm:$0xf]
      %v753 = vld [vmem:[#allocation2 + $0xa4] sm:$0x1]
      %v754 = vld [vmem:[#allocation2 + $0xa8] sm:$0xf]
      %v755 = vld [vmem:[#allocation2 + $0xac] sm:$0xf]
      %v756 = vld [vmem:[#allocation2 + $0xb0] sm:$0x1]
      %v757 = vld [vmem:[#allocation2 + $0xb4] sm:$0xf]
      %v758 = vld [vmem:[#allocation2 + $0xb8] sm:$0xf]
      %v759 = vld [vmem:[#allocation2 + $0xbc] sm:$0x1]
      %v760 = vld [vmem:[#allocation2 + $0xc0] sm:$0xf]
      %v761 = vld [vmem:[#allocation2 + $0xc4] sm:$0xf]
      %v762 = vld [vmem:[#allocation2 + $0xc8] sm:$0x1]
      %v763 = vld [vmem:[#allocation2 + $0xcc] sm:$0xf]
      %v764 = vld [vmem:[#allocation2 + $0xd0] sm:$0xf]
      %v765 = vld [vmem:[#allocation2 + $0xd4] sm:$0x1]
      %v798 = vunpack.c.l.b16 %v712
      %v799 = vunpack.c.l.b16 %v713
      %v800 = vunpack.c.l.b16 %v715
      %v801 = vunpack.c.l.b16 %v716
      %v802 = vunpack.c.l.b16 %v718
      %v803 = vunpack.c.l.b16 %v719
      %v804 = vunpack.c.l.b16 %v721
      %v805 = vunpack.c.l.b16 %v722
      %v806 = vunpack.c.l.b16 %v724
      %v807 = vunpack.c.l.b16 %v725
      %v808 = vunpack.c.l.b16 %v727
      %v809 = vunpack.c.l.b16 %v728
      %v810 = vunpack.c.l.b16 %v730
      %v811 = vunpack.c.l.b16 %v731
      %v812 = vunpack.c.l.b16 %v733
      %v813 = vunpack.c.l.b16 %v734
      %v814 = vunpack.c.l.b16 %v736
      %v815 = vunpack.c.l.b16 %v737
      %v816 = vunpack.c.l.b16 %v739
      %v817 = vunpack.c.l.b16 %v740
      %v818 = vunpack.c.l.b16 %v742
      %v819 = vunpack.c.l.b16 %v743
      %v820 = vunpack.c.l.b16 %v745
      %v821 = vunpack.c.l.b16 %v746
      %v822 = vunpack.c.l.b16 %v748
      %v823 = vunpack.c.l.b16 %v749
      %v824 = vunpack.c.l.b16 %v751
      %v825 = vunpack.c.l.b16 %v752
      %v826 = vunpack.c.l.b16 %v754
      %v827 = vunpack.c.l.b16 %v755
      %v828 = vunpack.c.l.b16 %v757
      %v829 = vunpack.c.l.b16 %v758
      %v830 = vpack.c.b16 %v799, %v798
      %v831 = vpack.c.b16 %v801, %v800
      %v832 = vpack.c.b16 %v803, %v802
      %v833 = vpack.c.b16 %v805, %v804
      %v834 = vpack.c.b16 %v807, %v806
      %v835 = vpack.c.b16 %v809, %v808
      %v836 = vpack.c.b16 %v811, %v810
      %v837 = vpack.c.b16 %v813, %v812
      %v838 = vpack.c.b16 %v815, %v814
      %v839 = vpack.c.b16 %v817, %v816
      %v840 = vpack.c.b16 %v819, %v818
      %v841 = vpack.c.b16 %v821, %v820
      %v842 = vpack.c.b16 %v823, %v822
      %v843 = vpack.c.b16 %v825, %v824
      %v844 = vpack.c.b16 %v827, %v826
      %v845 = vpack.c.b16 %v829, %v828
      %v862 = vunpack.c.l.b16 %v714
      %v863 = vunpack.c.l.b16 %v717
      %v864 = vunpack.c.l.b16 %v720
      %v865 = vunpack.c.l.b16 %v723
      %v866 = vunpack.c.l.b16 %v726
      %v867 = vunpack.c.l.b16 %v729
      %v868 = vunpack.c.l.b16 %v732
      %v869 = vunpack.c.l.b16 %v735
      %v870 = vunpack.c.l.b16 %v738
      %v871 = vunpack.c.l.b16 %v741
      %v872 = vunpack.c.l.b16 %v744
      %v873 = vunpack.c.l.b16 %v747
      %v874 = vunpack.c.l.b16 %v750
      %v875 = vunpack.c.l.b16 %v753
      %v876 = vunpack.c.l.b16 %v756
      %v877 = vunpack.c.l.b16 %v759
      %v878 = vpack.c.b16 %v862, %v862
      %v879 = vpack.c.b16 %v863, %v863
      %v880 = vpack.c.b16 %v864, %v864
      %v881 = vpack.c.b16 %v865, %v865
      %v882 = vpack.c.b16 %v866, %v866
      %v883 = vpack.c.b16 %v867, %v867
      %v884 = vpack.c.b16 %v868, %v868
      %v885 = vpack.c.b16 %v869, %v869
      %v886 = vpack.c.b16 %v870, %v870
      %v887 = vpack.c.b16 %v871, %v871
      %v888 = vpack.c.b16 %v872, %v872
      %v889 = vpack.c.b16 %v873, %v873
      %v890 = vpack.c.b16 %v874, %v874
      %v891 = vpack.c.b16 %v875, %v875
      %v892 = vpack.c.b16 %v876, %v876
      %v893 = vpack.c.b16 %v877, %v877
      %vm894 = vsmask.f32 7424
      %v896 = vshrl.u32 %v830, 16
      %v898 = vshll.u32 %v830, 16
      %v900 = vrot.slane %v898, 1
      %v901 = vor.u32 %v896, %v900
      %v903 = vshll.u32 %v878, 16
      %v905 = vrot.slane %v903, 1
      %v906 = vsel %vm894, %v901, %v905
      %v908 = vshrl.u32 %v831, 16
      %v910 = vshll.u32 %v831, 16
      %v912 = vrot.slane %v910, 1
      %v913 = vor.u32 %v908, %v912
      %v915 = vshll.u32 %v879, 16
      %v917 = vrot.slane %v915, 1
      %v918 = vsel %vm894, %v913, %v917
      %v920 = vshrl.u32 %v832, 16
      %v922 = vshll.u32 %v832, 16
      %v924 = vrot.slane %v922, 1
      %v925 = vor.u32 %v920, %v924
      %v927 = vshll.u32 %v880, 16
      %v929 = vrot.slane %v927, 1
      %v930 = vsel %vm894, %v925, %v929
      %v932 = vshrl.u32 %v833, 16
      %v934 = vshll.u32 %v833, 16
      %v936 = vrot.slane %v934, 1
      %v937 = vor.u32 %v932, %v936
      %v939 = vshll.u32 %v881, 16
      %v941 = vrot.slane %v939, 1
      %v942 = vsel %vm894, %v937, %v941
      %v944 = vshrl.u32 %v834, 16
      %v946 = vshll.u32 %v834, 16
      %v948 = vrot.slane %v946, 1
      %v949 = vor.u32 %v944, %v948
      %v951 = vshll.u32 %v882, 16
      %v953 = vrot.slane %v951, 1
      %v954 = vsel %vm894, %v949, %v953
      %v956 = vshrl.u32 %v835, 16
      %v958 = vshll.u32 %v835, 16
      %v960 = vrot.slane %v958, 1
      %v961 = vor.u32 %v956, %v960
      %v963 = vshll.u32 %v883, 16
      %v965 = vrot.slane %v963, 1
      %v966 = vsel %vm894, %v961, %v965
      %v968 = vshrl.u32 %v836, 16
      %v970 = vshll.u32 %v836, 16
      %v972 = vrot.slane %v970, 1
      %v973 = vor.u32 %v968, %v972
      %v975 = vshll.u32 %v884, 16
      %v977 = vrot.slane %v975, 1
      %v978 = vsel %vm894, %v973, %v977
      %v980 = vshrl.u32 %v837, 16
      %v982 = vshll.u32 %v837, 16
      %v984 = vrot.slane %v982, 1
      %v985 = vor.u32 %v980, %v984
      %v987 = vshll.u32 %v885, 16
      %v989 = vrot.slane %v987, 1
      %v990 = vsel %vm894, %v985, %v989
      %v992 = vshrl.u32 %v838, 16
      %v994 = vshll.u32 %v838, 16
      %v996 = vrot.slane %v994, 1
      %v997 = vor.u32 %v992, %v996
      %v999 = vshll.u32 %v886, 16
      %v1001 = vrot.slane %v999, 1
      %v1002 = vsel %vm894, %v997, %v1001
      %v1004 = vshrl.u32 %v839, 16
      %v1006 = vshll.u32 %v839, 16
      %v1008 = vrot.slane %v1006, 1
      %v1009 = vor.u32 %v1004, %v1008
      %v1011 = vshll.u32 %v887, 16
      %v1013 = vrot.slane %v1011, 1
      %v1014 = vsel %vm894, %v1009, %v1013
      %v1016 = vshrl.u32 %v840, 16
      %v1018 = vshll.u32 %v840, 16
      %v1020 = vrot.slane %v1018, 1
      %v1021 = vor.u32 %v1016, %v1020
      %v1023 = vshll.u32 %v888, 16
      %v1025 = vrot.slane %v1023, 1
      %v1026 = vsel %vm894, %v1021, %v1025
      %v1028 = vshrl.u32 %v841, 16
      %v1030 = vshll.u32 %v841, 16
      %v1032 = vrot.slane %v1030, 1
      %v1033 = vor.u32 %v1028, %v1032
      %v1035 = vshll.u32 %v889, 16
      %v1037 = vrot.slane %v1035, 1
      %v1038 = vsel %vm894, %v1033, %v1037
      %v1040 = vshrl.u32 %v842, 16
      %v1042 = vshll.u32 %v842, 16
      %v1044 = vrot.slane %v1042, 1
      %v1045 = vor.u32 %v1040, %v1044
      %v1047 = vshll.u32 %v890, 16
      %v1049 = vrot.slane %v1047, 1
      %v1050 = vsel %vm894, %v1045, %v1049
      %v1052 = vshrl.u32 %v843, 16
      %v1054 = vshll.u32 %v843, 16
      %v1056 = vrot.slane %v1054, 1
      %v1057 = vor.u32 %v1052, %v1056
      %v1059 = vshll.u32 %v891, 16
      %v1061 = vrot.slane %v1059, 1
      %v1062 = vsel %vm894, %v1057, %v1061
      %v1064 = vshrl.u32 %v844, 16
      %v1066 = vshll.u32 %v844, 16
      %v1068 = vrot.slane %v1066, 1
      %v1069 = vor.u32 %v1064, %v1068
      %v1071 = vshll.u32 %v892, 16
      %v1073 = vrot.slane %v1071, 1
      %v1074 = vsel %vm894, %v1069, %v1073
      %v1076 = vshrl.u32 %v845, 16
      %v1078 = vshll.u32 %v845, 16
      %v1080 = vrot.slane %v1078, 1
      %v1081 = vor.u32 %v1076, %v1080
      %v1083 = vshll.u32 %v893, 16
      %v1085 = vrot.slane %v1083, 1
      %v1086 = vsel %vm894, %v1081, %v1085
      %1087 = vrot.lane.b32.xlu0 %v906, 8
      %v1088 = vpop.permute.xlu0 %1087
      %1089 = vrot.lane.b32.xlu0 %v918, 8
      %v1090 = vpop.permute.xlu0 %1089
      %1091 = vrot.lane.b32.xlu0 %v930, 8
      %v1092 = vpop.permute.xlu0 %1091
      %1093 = vrot.lane.b32.xlu0 %v942, 8
      %v1094 = vpop.permute.xlu0 %1093
      %1095 = vrot.lane.b32.xlu0 %v954, 8
      %v1096 = vpop.permute.xlu0 %1095
      %1097 = vrot.lane.b32.xlu0 %v966, 8
      %v1098 = vpop.permute.xlu0 %1097
      %1099 = vrot.lane.b32.xlu0 %v978, 8
      %v1100 = vpop.permute.xlu0 %1099
      %1101 = vrot.lane.b32.xlu0 %v990, 8
      %v1102 = vpop.permute.xlu0 %1101
      %1103 = vrot.lane.b32.xlu0 %v1002, 8
      %v1104 = vpop.permute.xlu0 %1103
      %1105 = vrot.lane.b32.xlu0 %v1014, 8
      %v1106 = vpop.permute.xlu0 %1105
      %1107 = vrot.lane.b32.xlu0 %v1026, 8
      %v1108 = vpop.permute.xlu0 %1107
      %1109 = vrot.lane.b32.xlu0 %v1038, 8
      %v1110 = vpop.permute.xlu0 %1109
      %1111 = vrot.lane.b32.xlu0 %v1050, 8
      %v1112 = vpop.permute.xlu0 %1111
      %1113 = vrot.lane.b32.xlu0 %v1062, 8
      %v1114 = vpop.permute.xlu0 %1113
      %1115 = vrot.lane.b32.xlu0 %v1074, 8
      %v1116 = vpop.permute.xlu0 %1115
      %1117 = vrot.lane.b32.xlu0 %v1086, 8
      %v1118 = vpop.permute.xlu0 %1117
      %vm1119 = vcmask 1046528
      %v1120 = vrot.slane %v830, 1
      %v1121 = vrot.slane %v878, 1
      %v1122 = vsel %vm1119, %v1120, %v1121
      %v1123 = vrot.slane %v831, 1
      %v1124 = vrot.slane %v879, 1
      %v1125 = vsel %vm1119, %v1123, %v1124
      %v1126 = vrot.slane %v832, 1
      %v1127 = vrot.slane %v880, 1
      %v1128 = vsel %vm1119, %v1126, %v1127
      %v1129 = vrot.slane %v833, 1
      %v1130 = vrot.slane %v881, 1
      %v1131 = vsel %vm1119, %v1129, %v1130
      %v1132 = vrot.slane %v834, 1
      %v1133 = vrot.slane %v882, 1
      %v1134 = vsel %vm1119, %v1132, %v1133
      %v1135 = vrot.slane %v835, 1
      %v1136 = vrot.slane %v883, 1
      %v1137 = vsel %vm1119, %v1135, %v1136
      %v1138 = vrot.slane %v836, 1
      %v1139 = vrot.slane %v884, 1
      %v1140 = vsel %vm1119, %v1138, %v1139
      %v1141 = vrot.slane %v837, 1
      %v1142 = vrot.slane %v885, 1
      %v1143 = vsel %vm1119, %v1141, %v1142
      %v1144 = vrot.slane %v838, 1
      %v1145 = vrot.slane %v886, 1
      %v1146 = vsel %vm1119, %v1144, %v1145
      %v1147 = vrot.slane %v839, 1
      %v1148 = vrot.slane %v887, 1
      %v1149 = vsel %vm1119, %v1147, %v1148
      %v1150 = vrot.slane %v840, 1
      %v1151 = vrot.slane %v888, 1
      %v1152 = vsel %vm1119, %v1150, %v1151
      %v1153 = vrot.slane %v841, 1
      %v1154 = vrot.slane %v889, 1
      %v1155 = vsel %vm1119, %v1153, %v1154
      %v1156 = vrot.slane %v842, 1
      %v1157 = vrot.slane %v890, 1
      %v1158 = vsel %vm1119, %v1156, %v1157
      %v1159 = vrot.slane %v843, 1
      %v1160 = vrot.slane %v891, 1
      %v1161 = vsel %vm1119, %v1159, %v1160
      %v1162 = vrot.slane %v844, 1
      %v1163 = vrot.slane %v892, 1
      %v1164 = vsel %vm1119, %v1162, %v1163
      %v1165 = vrot.slane %v845, 1
      %v1166 = vrot.slane %v893, 1
      %v1167 = vsel %vm1119, %v1165, %v1166
      %1168 = vrot.lane.b32.xlu0 %v1122, 16
      %v1169 = vpop.permute.xlu0 %1168
      %1170 = vrot.lane.b32.xlu0 %v1125, 16
      %v1171 = vpop.permute.xlu0 %1170
      %1172 = vrot.lane.b32.xlu0 %v1128, 16
      %v1173 = vpop.permute.xlu0 %1172
      %1174 = vrot.lane.b32.xlu0 %v1131, 16
      %v1175 = vpop.permute.xlu0 %1174
      %1176 = vrot.lane.b32.xlu0 %v1134, 16
      %v1177 = vpop.permute.xlu0 %1176
      %1178 = vrot.lane.b32.xlu0 %v1137, 16
      %v1179 = vpop.permute.xlu0 %1178
      %1180 = vrot.lane.b32.xlu0 %v1140, 16
      %v1181 = vpop.permute.xlu0 %1180
      %1182 = vrot.lane.b32.xlu0 %v1143, 16
      %v1183 = vpop.permute.xlu0 %1182
      %1184 = vrot.lane.b32.xlu0 %v1146, 16
      %v1185 = vpop.permute.xlu0 %1184
      %1186 = vrot.lane.b32.xlu0 %v1149, 16
      %v1187 = vpop.permute.xlu0 %1186
      %1188 = vrot.lane.b32.xlu0 %v1152, 16
      %v1189 = vpop.permute.xlu0 %1188
      %1190 = vrot.lane.b32.xlu0 %v1155, 16
      %v1191 = vpop.permute.xlu0 %1190
      %1192 = vrot.lane.b32.xlu0 %v1158, 16
      %v1193 = vpop.permute.xlu0 %1192
      %1194 = vrot.lane.b32.xlu0 %v1161, 16
      %v1195 = vpop.permute.xlu0 %1194
      %1196 = vrot.lane.b32.xlu0 %v1164, 16
      %v1197 = vpop.permute.xlu0 %1196
      %1198 = vrot.lane.b32.xlu0 %v1167, 16
      %v1199 = vpop.permute.xlu0 %1198
      %v1202 = vunpack.c.l.b16 %v760
      %v1203 = vunpack.c.l.b16 %v761
      %v1204 = vpack.c.b16 %v1203, %v1202
      %1205 = vrot.lane.b32.xlu0 %v831, 24
      %v1206 = vpop.permute.xlu0 %1205
      %1207 = vrot.lane.b32.xlu0 %v832, 24
      %v1208 = vpop.permute.xlu0 %1207
      %1209 = vrot.lane.b32.xlu0 %v833, 24
      %v1210 = vpop.permute.xlu0 %1209
      %1211 = vrot.lane.b32.xlu0 %v834, 24
      %v1212 = vpop.permute.xlu0 %1211
      %1213 = vrot.lane.b32.xlu0 %v835, 24
      %v1214 = vpop.permute.xlu0 %1213
      %1215 = vrot.lane.b32.xlu0 %v836, 24
      %v1216 = vpop.permute.xlu0 %1215
      %1217 = vrot.lane.b32.xlu0 %v837, 24
      %v1218 = vpop.permute.xlu0 %1217
      %1219 = vrot.lane.b32.xlu0 %v838, 24
      %v1220 = vpop.permute.xlu0 %1219
      %1221 = vrot.lane.b32.xlu0 %v839, 24
      %v1222 = vpop.permute.xlu0 %1221
      %1223 = vrot.lane.b32.xlu0 %v840, 24
      %v1224 = vpop.permute.xlu0 %1223
      %1225 = vrot.lane.b32.xlu0 %v841, 24
      %v1226 = vpop.permute.xlu0 %1225
      %1227 = vrot.lane.b32.xlu0 %v842, 24
      %v1228 = vpop.permute.xlu0 %1227
      %1229 = vrot.lane.b32.xlu0 %v843, 24
      %v1230 = vpop.permute.xlu0 %1229
      %1231 = vrot.lane.b32.xlu0 %v844, 24
      %v1232 = vpop.permute.xlu0 %1231
      %1233 = vrot.lane.b32.xlu0 %v845, 24
      %v1234 = vpop.permute.xlu0 %1233
      %1235 = vrot.lane.b32.xlu0 %v1204, 24
      %v1236 = vpop.permute.xlu0 %1235
      %v1238 = vunpack.c.l.b16 %v762
      %v1239 = vpack.c.b16 %v1238, %v1238
      %v1241 = vshrl.u32 %v1204, 16
      %v1243 = vshll.u32 %v1204, 16
      %v1245 = vrot.slane %v1243, 1
      %v1246 = vor.u32 %v1241, %v1245
      %v1248 = vshll.u32 %v1239, 16
      %v1250 = vrot.slane %v1248, 1
      %v1251 = vsel %vm894, %v1246, %v1250
      %1252 = vrot.lane.b32.xlu0 %v918, 32
      %v1253 = vpop.permute.xlu0 %1252
      %1254 = vrot.lane.b32.xlu0 %v930, 32
      %v1255 = vpop.permute.xlu0 %1254
      %1256 = vrot.lane.b32.xlu0 %v942, 32
      %v1257 = vpop.permute.xlu0 %1256
      %1258 = vrot.lane.b32.xlu0 %v954, 32
      %v1259 = vpop.permute.xlu0 %1258
      %1260 = vrot.lane.b32.xlu0 %v966, 32
      %v1261 = vpop.permute.xlu0 %1260
      %1262 = vrot.lane.b32.xlu0 %v978, 32
      %v1263 = vpop.permute.xlu0 %1262
      %1264 = vrot.lane.b32.xlu0 %v990, 32
      %v1265 = vpop.permute.xlu0 %1264
      %1266 = vrot.lane.b32.xlu0 %v1002, 32
      %v1267 = vpop.permute.xlu0 %1266
      %1268 = vrot.lane.b32.xlu0 %v1014, 32
      %v1269 = vpop.permute.xlu0 %1268
      %1270 = vrot.lane.b32.xlu0 %v1026, 32
      %v1271 = vpop.permute.xlu0 %1270
      %1272 = vrot.lane.b32.xlu0 %v1038, 32
      %v1273 = vpop.permute.xlu0 %1272
      %1274 = vrot.lane.b32.xlu0 %v1050, 32
      %v1275 = vpop.permute.xlu0 %1274
      %1276 = vrot.lane.b32.xlu0 %v1062, 32
      %v1277 = vpop.permute.xlu0 %1276
      %1278 = vrot.lane.b32.xlu0 %v1074, 32
      %v1279 = vpop.permute.xlu0 %1278
      %1280 = vrot.lane.b32.xlu0 %v1086, 32
      %v1281 = vpop.permute.xlu0 %1280
      %1282 = vrot.lane.b32.xlu0 %v1251, 32
      %v1283 = vpop.permute.xlu0 %1282
      %v1284 = vrot.slane %v1204, 1
      %v1285 = vrot.slane %v1239, 1
      %v1286 = vsel %vm1119, %v1284, %v1285
      %1287 = vrot.lane.b32.xlu0 %v1125, 40
      %v1288 = vpop.permute.xlu0 %1287
      %1289 = vrot.lane.b32.xlu0 %v1128, 40
      %v1290 = vpop.permute.xlu0 %1289
      %1291 = vrot.lane.b32.xlu0 %v1131, 40
      %v1292 = vpop.permute.xlu0 %1291
      %1293 = vrot.lane.b32.xlu0 %v1134, 40
      %v1294 = vpop.permute.xlu0 %1293
      %1295 = vrot.lane.b32.xlu0 %v1137, 40
      %v1296 = vpop.permute.xlu0 %1295
      %1297 = vrot.lane.b32.xlu0 %v1140, 40
      %v1298 = vpop.permute.xlu0 %1297
      %1299 = vrot.lane.b32.xlu0 %v1143, 40
      %v1300 = vpop.permute.xlu0 %1299
      %1301 = vrot.lane.b32.xlu0 %v1146, 40
      %v1302 = vpop.permute.xlu0 %1301
      %1303 = vrot.lane.b32.xlu0 %v1149, 40
      %v1304 = vpop.permute.xlu0 %1303
      %1305 = vrot.lane.b32.xlu0 %v1152, 40
      %v1306 = vpop.permute.xlu0 %1305
      %1307 = vrot.lane.b32.xlu0 %v1155, 40
      %v1308 = vpop.permute.xlu0 %1307
      %1309 = vrot.lane.b32.xlu0 %v1158, 40
      %v1310 = vpop.permute.xlu0 %1309
      %1311 = vrot.lane.b32.xlu0 %v1161, 40
      %v1312 = vpop.permute.xlu0 %1311
      %1313 = vrot.lane.b32.xlu0 %v1164, 40
      %v1314 = vpop.permute.xlu0 %1313
      %1315 = vrot.lane.b32.xlu0 %v1167, 40
      %v1316 = vpop.permute.xlu0 %1315
      %1317 = vrot.lane.b32.xlu0 %v1286, 40
      %v1318 = vpop.permute.xlu0 %1317
      %v1321 = vunpack.c.l.b16 %v763
      %v1322 = vunpack.c.l.b16 %v764
      %v1323 = vpack.c.b16 %v1322, %v1321
      %1324 = vrot.lane.b32.xlu0 %v832, 48
      %v1325 = vpop.permute.xlu0 %1324
      %1326 = vrot.lane.b32.xlu0 %v833, 48
      %v1327 = vpop.permute.xlu0 %1326
      %1328 = vrot.lane.b32.xlu0 %v834, 48
      %v1329 = vpop.permute.xlu0 %1328
      %1330 = vrot.lane.b32.xlu0 %v835, 48
      %v1331 = vpop.permute.xlu0 %1330
      %1332 = vrot.lane.b32.xlu0 %v836, 48
      %v1333 = vpop.permute.xlu0 %1332
      %1334 = vrot.lane.b32.xlu0 %v837, 48
      %v1335 = vpop.permute.xlu0 %1334
      %1336 = vrot.lane.b32.xlu0 %v838, 48
      %v1337 = vpop.permute.xlu0 %1336
      %1338 = vrot.lane.b32.xlu0 %v839, 48
      %v1339 = vpop.permute.xlu0 %1338
      %1340 = vrot.lane.b32.xlu0 %v840, 48
      %v1341 = vpop.permute.xlu0 %1340
      %1342 = vrot.lane.b32.xlu0 %v841, 48
      %v1343 = vpop.permute.xlu0 %1342
      %1344 = vrot.lane.b32.xlu0 %v842, 48
      %v1345 = vpop.permute.xlu0 %1344
      %1346 = vrot.lane.b32.xlu0 %v843, 48
      %v1347 = vpop.permute.xlu0 %1346
      %1348 = vrot.lane.b32.xlu0 %v844, 48
      %v1349 = vpop.permute.xlu0 %1348
      %1350 = vrot.lane.b32.xlu0 %v845, 48
      %v1351 = vpop.permute.xlu0 %1350
      %1352 = vrot.lane.b32.xlu0 %v1204, 48
      %v1353 = vpop.permute.xlu0 %1352
      %1354 = vrot.lane.b32.xlu0 %v1323, 48
      %v1355 = vpop.permute.xlu0 %1354
      %v1357 = vunpack.c.l.b16 %v765
      %v1358 = vpack.c.b16 %v1357, %v1357
      %v1360 = vshrl.u32 %v1323, 16
      %v1362 = vshll.u32 %v1323, 16
      %v1364 = vrot.slane %v1362, 1
      %v1365 = vor.u32 %v1360, %v1364
      %v1367 = vshll.u32 %v1358, 16
      %v1369 = vrot.slane %v1367, 1
      %v1370 = vsel %vm894, %v1365, %v1369
      %1371 = vrot.lane.b32.xlu0 %v930, 56
      %v1372 = vpop.permute.xlu0 %1371
      %1373 = vrot.lane.b32.xlu0 %v942, 56
      %v1374 = vpop.permute.xlu0 %1373
      %1375 = vrot.lane.b32.xlu0 %v954, 56
      %v1376 = vpop.permute.xlu0 %1375
      %1377 = vrot.lane.b32.xlu0 %v966, 56
      %v1378 = vpop.permute.xlu0 %1377
      %1379 = vrot.lane.b32.xlu0 %v978, 56
      %v1380 = vpop.permute.xlu0 %1379
      %1381 = vrot.lane.b32.xlu0 %v990, 56
      %v1382 = vpop.permute.xlu0 %1381
      %1383 = vrot.lane.b32.xlu0 %v1002, 56
      %v1384 = vpop.permute.xlu0 %1383
      %1385 = vrot.lane.b32.xlu0 %v1014, 56
      %v1386 = vpop.permute.xlu0 %1385
      %1387 = vrot.lane.b32.xlu0 %v1026, 56
      %v1388 = vpop.permute.xlu0 %1387
      %1389 = vrot.lane.b32.xlu0 %v1038, 56
      %v1390 = vpop.permute.xlu0 %1389
      %1391 = vrot.lane.b32.xlu0 %v1050, 56
      %v1392 = vpop.permute.xlu0 %1391
      %1393 = vrot.lane.b32.xlu0 %v1062, 56
      %v1394 = vpop.permute.xlu0 %1393
      %1395 = vrot.lane.b32.xlu0 %v1074, 56
      %v1396 = vpop.permute.xlu0 %1395
      %1397 = vrot.lane.b32.xlu0 %v1086, 56
      %v1398 = vpop.permute.xlu0 %1397
      %1399 = vrot.lane.b32.xlu0 %v1251, 56
      %v1400 = vpop.permute.xlu0 %1399
      %1401 = vrot.lane.b32.xlu0 %v1370, 56
      %v1402 = vpop.permute.xlu0 %1401
      %v1403 = vrot.slane %v1323, 1
      %v1404 = vrot.slane %v1358, 1
      %v1405 = vsel %vm1119, %v1403, %v1404
      %1406 = vrot.lane.b32.xlu0 %v1128, 64
      %v1407 = vpop.permute.xlu0 %1406
      %1408 = vrot.lane.b32.xlu0 %v1131, 64
      %v1409 = vpop.permute.xlu0 %1408
      %1410 = vrot.lane.b32.xlu0 %v1134, 64
      %v1411 = vpop.permute.xlu0 %1410
      %1412 = vrot.lane.b32.xlu0 %v1137, 64
      %v1413 = vpop.permute.xlu0 %1412
      %1414 = vrot.lane.b32.xlu0 %v1140, 64
      %v1415 = vpop.permute.xlu0 %1414
      %1416 = vrot.lane.b32.xlu0 %v1143, 64
      %v1417 = vpop.permute.xlu0 %1416
      %1418 = vrot.lane.b32.xlu0 %v1146, 64
      %v1419 = vpop.permute.xlu0 %1418
      %1420 = vrot.lane.b32.xlu0 %v1149, 64
      %v1421 = vpop.permute.xlu0 %1420
      %1422 = vrot.lane.b32.xlu0 %v1152, 64
      %v1423 = vpop.permute.xlu0 %1422
      %1424 = vrot.lane.b32.xlu0 %v1155, 64
      %v1425 = vpop.permute.xlu0 %1424
      %1426 = vrot.lane.b32.xlu0 %v1158, 64
      %v1427 = vpop.permute.xlu0 %1426
      %1428 = vrot.lane.b32.xlu0 %v1161, 64
      %v1429 = vpop.permute.xlu0 %1428
      %1430 = vrot.lane.b32.xlu0 %v1164, 64
      %v1431 = vpop.permute.xlu0 %1430
      %1432 = vrot.lane.b32.xlu0 %v1167, 64
      %v1433 = vpop.permute.xlu0 %1432
      %1434 = vrot.lane.b32.xlu0 %v1286, 64
      %v1435 = vpop.permute.xlu0 %1434
      %1436 = vrot.lane.b32.xlu0 %v1405, 64
      %v1437 = vpop.permute.xlu0 %1436
      %vm1438 = vcmask 64512
      %v1440 = vsel %vm1438, %v830, %v1088
      %v1442 = vsel %vm1438, %v831, %v1090
      %v1444 = vsel %vm1438, %v832, %v1092
      %v1446 = vsel %vm1438, %v833, %v1094
      %v1448 = vsel %vm1438, %v834, %v1096
      %v1450 = vsel %vm1438, %v835, %v1098
      %v1452 = vsel %vm1438, %v836, %v1100
      %v1454 = vsel %vm1438, %v837, %v1102
      %v1456 = vsel %vm1438, %v838, %v1104
      %v1458 = vsel %vm1438, %v839, %v1106
      %v1460 = vsel %vm1438, %v840, %v1108
      %v1462 = vsel %vm1438, %v841, %v1110
      %v1464 = vsel %vm1438, %v842, %v1112
      %v1466 = vsel %vm1438, %v843, %v1114
      %v1468 = vsel %vm1438, %v844, %v1116
      %v1470 = vsel %vm1438, %v845, %v1118
      %vm1471 = vcmask 130048
      %v1473 = vsel %vm1471, %v1440, %v1169
      %v1475 = vsel %vm1471, %v1442, %v1171
      %v1477 = vsel %vm1471, %v1444, %v1173
      %v1479 = vsel %vm1471, %v1446, %v1175
      %v1481 = vsel %vm1471, %v1448, %v1177
      %v1483 = vsel %vm1471, %v1450, %v1179
      %v1485 = vsel %vm1471, %v1452, %v1181
      %v1487 = vsel %vm1471, %v1454, %v1183
      %v1489 = vsel %vm1471, %v1456, %v1185
      %v1491 = vsel %vm1471, %v1458, %v1187
      %v1493 = vsel %vm1471, %v1460, %v1189
      %v1495 = vsel %vm1471, %v1462, %v1191
      %v1497 = vsel %vm1471, %v1464, %v1193
      %v1499 = vsel %vm1471, %v1466, %v1195
      %v1501 = vsel %vm1471, %v1468, %v1197
      %v1503 = vsel %vm1471, %v1470, %v1199
      %vm1504 = vcmask 195584
      %v1506 = vsel %vm1504, %v1473, %v1206
      %v1508 = vsel %vm1504, %v1475, %v1208
      %v1510 = vsel %vm1504, %v1477, %v1210
      %v1512 = vsel %vm1504, %v1479, %v1212
      %v1514 = vsel %vm1504, %v1481, %v1214
      %v1516 = vsel %vm1504, %v1483, %v1216
      %v1518 = vsel %vm1504, %v1485, %v1218
      %v1520 = vsel %vm1504, %v1487, %v1220
      %v1522 = vsel %vm1504, %v1489, %v1222
      %v1524 = vsel %vm1504, %v1491, %v1224
      %v1526 = vsel %vm1504, %v1493, %v1226
      %v1528 = vsel %vm1504, %v1495, %v1228
      %v1530 = vsel %vm1504, %v1497, %v1230
      %v1532 = vsel %vm1504, %v1499, %v1232
      %v1534 = vsel %vm1504, %v1501, %v1234
      %v1536 = vsel %vm1504, %v1503, %v1236
      %vm1537 = vcmask 261120
      %v1539 = vsel %vm1537, %v1506, %v1253
      %v1541 = vsel %vm1537, %v1508, %v1255
      %v1543 = vsel %vm1537, %v1510, %v1257
      %v1545 = vsel %vm1537, %v1512, %v1259
      %v1547 = vsel %vm1537, %v1514, %v1261
      %v1549 = vsel %vm1537, %v1516, %v1263
      %v1551 = vsel %vm1537, %v1518, %v1265
      %v1553 = vsel %vm1537, %v1520, %v1267
      %v1555 = vsel %vm1537, %v1522, %v1269
      %v1557 = vsel %vm1537, %v1524, %v1271
      %v1559 = vsel %vm1537, %v1526, %v1273
      %v1561 = vsel %vm1537, %v1528, %v1275
      %v1563 = vsel %vm1537, %v1530, %v1277
      %v1565 = vsel %vm1537, %v1532, %v1279
      %v1567 = vsel %vm1537, %v1534, %v1281
      %v1569 = vsel %vm1537, %v1536, %v1283
      %vm1570 = vcmask 326656
      %v1572 = vsel %vm1570, %v1539, %v1288
      %v1574 = vsel %vm1570, %v1541, %v1290
      %v1576 = vsel %vm1570, %v1543, %v1292
      %v1578 = vsel %vm1570, %v1545, %v1294
      %v1580 = vsel %vm1570, %v1547, %v1296
      %v1582 = vsel %vm1570, %v1549, %v1298
      %v1584 = vsel %vm1570, %v1551, %v1300
      %v1586 = vsel %vm1570, %v1553, %v1302
      %v1588 = vsel %vm1570, %v1555, %v1304
      %v1590 = vsel %vm1570, %v1557, %v1306
      %v1592 = vsel %vm1570, %v1559, %v1308
      %v1594 = vsel %vm1570, %v1561, %v1310
      %v1596 = vsel %vm1570, %v1563, %v1312
      %v1598 = vsel %vm1570, %v1565, %v1314
      %v1600 = vsel %vm1570, %v1567, %v1316
      %v1602 = vsel %vm1570, %v1569, %v1318
      %vm1603 = vcmask 392192
      %v1605 = vsel %vm1603, %v1572, %v1325
      %v1607 = vsel %vm1603, %v1574, %v1327
      %v1609 = vsel %vm1603, %v1576, %v1329
      %v1611 = vsel %vm1603, %v1578, %v1331
      %v1613 = vsel %vm1603, %v1580, %v1333
      %v1615 = vsel %vm1603, %v1582, %v1335
      %v1617 = vsel %vm1603, %v1584, %v1337
      %v1619 = vsel %vm1603, %v1586, %v1339
      %v1621 = vsel %vm1603, %v1588, %v1341
      %v1623 = vsel %vm1603, %v1590, %v1343
      %v1625 = vsel %vm1603, %v1592, %v1345
      %v1627 = vsel %vm1603, %v1594, %v1347
      %v1629 = vsel %vm1603, %v1596, %v1349
      %v1631 = vsel %vm1603, %v1598, %v1351
      %v1633 = vsel %vm1603, %v1600, %v1353
      %v1635 = vsel %vm1603, %v1602, %v1355
      %vm1636 = vcmask 457728
      %v1638 = vsel %vm1636, %v1605, %v1372
      %v1640 = vsel %vm1636, %v1607, %v1374
      %v1642 = vsel %vm1636, %v1609, %v1376
      %v1644 = vsel %vm1636, %v1611, %v1378
      %v1646 = vsel %vm1636, %v1613, %v1380
      %v1648 = vsel %vm1636, %v1615, %v1382
      %v1650 = vsel %vm1636, %v1617, %v1384
      %v1652 = vsel %vm1636, %v1619, %v1386
      %v1654 = vsel %vm1636, %v1621, %v1388
      %v1656 = vsel %vm1636, %v1623, %v1390
      %v1658 = vsel %vm1636, %v1625, %v1392
      %v1660 = vsel %vm1636, %v1627, %v1394
      %v1662 = vsel %vm1636, %v1629, %v1396
      %v1664 = vsel %vm1636, %v1631, %v1398
      %v1666 = vsel %vm1636, %v1633, %v1400
      %v1668 = vsel %vm1636, %v1635, %v1402
      %vm1669 = vcmask 523264
      %v1671 = vsel %vm1669, %v1638, %v1407
      %v1673 = vsel %vm1669, %v1640, %v1409
      %v1675 = vsel %vm1669, %v1642, %v1411
      %v1677 = vsel %vm1669, %v1644, %v1413
      %v1679 = vsel %vm1669, %v1646, %v1415
      %v1681 = vsel %vm1669, %v1648, %v1417
      %v1683 = vsel %vm1669, %v1650, %v1419
      %v1685 = vsel %vm1669, %v1652, %v1421
      %v1687 = vsel %vm1669, %v1654, %v1423
      %v1689 = vsel %vm1669, %v1656, %v1425
      %v1691 = vsel %vm1669, %v1658, %v1427
      %v1693 = vsel %vm1669, %v1660, %v1429
      %v1695 = vsel %vm1669, %v1662, %v1431
      %v1697 = vsel %vm1669, %v1664, %v1433
      %v1699 = vsel %vm1669, %v1666, %v1435
      %v1701 = vsel %vm1669, %v1668, %v1437
      %v1702 = vld [vmem:[%s1] sm:$0xf]
      %v1703 = vld [vmem:[%s1 + $0x4] sm:$0xf]
      %v1704 = vld [vmem:[%s1 + $0x8] sm:$0xf]
      %v1705 = vld [vmem:[%s1 + $0xc] sm:$0xf]
      %v1706 = vld [vmem:[%s1 + $0x10] sm:$0xf]
      %v1707 = vld [vmem:[%s1 + $0x14] sm:$0xf]
      %v1708 = vld [vmem:[%s1 + $0x18] sm:$0xf]
      %v1709 = vld [vmem:[%s1 + $0x1c] sm:$0xf]
      %v1710 = vld [vmem:[%s1 + $0x20] sm:$0xf]
      %v1720 = vunpack.c.l.b16 %v1702
      %v1721 = vunpack.c.l.b16 %v1703
      %v1722 = vunpack.c.l.b16 %v1704
      %v1723 = vunpack.c.l.b16 %v1705
      %v1724 = vunpack.c.l.b16 %v1706
      %v1725 = vunpack.c.l.b16 %v1707
      %v1726 = vunpack.c.l.b16 %v1708
      %v1727 = vunpack.c.l.b16 %v1709
      %v1728 = vunpack.c.l.b16 %v1710
      %v1729 = vpack.c.b16 %v1721, %v1720
      %v1730 = vpack.c.b16 %v1723, %v1722
      %v1731 = vpack.c.b16 %v1725, %v1724
      %v1732 = vpack.c.b16 %v1727, %v1726
      %v1733 = vpack.c.b16 %v1728, %v1728
      %vm1738 = vcmask 588800
      %v1739 = vsel %vm1738, %v1671, 0
      %v1741 = vsel %vm1738, %v1673, 0
      %v1743 = vsel %vm1738, %v1675, 0
      %v1745 = vsel %vm1738, %v1677, 0
      %v1747 = vsel %vm1738, %v1679, 0
      %v1749 = vsel %vm1738, %v1681, 0
      %v1751 = vsel %vm1738, %v1683, 0
      %v1753 = vsel %vm1738, %v1685, 0
      %v1755 = vsel %vm1738, %v1687, 0
      %v1757 = vsel %vm1738, %v1689, 0
      %v1759 = vsel %vm1738, %v1691, 0
      %v1761 = vsel %vm1738, %v1693, 0
      %v1763 = vsel %vm1738, %v1695, 0
      %v1765 = vsel %vm1738, %v1697, 0
      %v1767 = vsel %vm1738, %v1699, 0
      %v1769 = vsel %vm1738, %v1701, 0
      %vm1771 = vcmask 1043456
      %v1773 = vsel %vm1771, %v1733, 0
      %1775 = vmatprep.subr.bf16.mxu0 0
      %1776 = vmatpush1.bf16.msra.mxu0 0
      %1777 = vmatprep.subr.bf16.mxu0 0
      %1778 = vmatpush1.bf16.msra.mxu0 0
      %1779 = vmatprep.subr.bf16.mxu0 0
      %1780 = vmatpush1.bf16.msra.mxu0 0
      %1781 = vmatprep.subr.bf16.mxu0 0
      %1782 = vmatpush1.bf16.msra.mxu0 %v1773
      %1783 = vmatprep.subr.bf16.mxu0 0
      %1784 = vmatpush1.bf16.msra.mxu0 %v1732
      %1785 = vmatprep.subr.bf16.mxu0 0
      %1786 = vmatpush1.bf16.msra.mxu0 %v1731
      %1787 = vmatprep.subr.bf16.mxu0 0
      %1788 = vmatpush1.bf16.msra.mxu0 %v1730
      %1789 = vmatprep.subr.bf16.mxu0 0
      %1790 = vmatpush1.bf16.msra.mxu0 %v1729
      %1791 = vmatprep.subr.bf16.mxu0 0
      %1792 = vmatpush2.bf16.msra.mxu0 0
      %1793 = vmatprep.subr.bf16.mxu0 0
      %1794 = vmatpush2.bf16.msra.mxu0 0
      %1795 = vmatprep.subr.bf16.mxu0 0
      %1796 = vmatpush2.bf16.msra.mxu0 0
      %1797 = vmatprep.subr.bf16.mxu0 0
      %1798 = vmatpush2.bf16.msra.mxu0 0
      %1799 = vmatprep.subr.bf16.mxu0 0
      %1800 = vmatpush2.bf16.msra.mxu0 0
      %1801 = vmatprep.subr.bf16.mxu0 0
      %1802 = vmatpush2.bf16.msra.mxu0 0
      %1803 = vmatprep.subr.bf16.mxu0 0
      %1804 = vmatpush2.bf16.msra.mxu0 0
      %1805 = vmatprep.subr.bf16.mxu0 0
      %1806 = vmatpush2.bf16.msra.mxu0 0
      %1807 = vmatprep.mubr.bf16.mxu0 0
      %1808 = vmatmul.mubr.bf16.gmra.mxu0 %v1739
      %v1809 = vpop.f32.mrf.mxu0
      %v1810 = vadd.f32 0.0, %v1809
      %v1811 = vpop.f32.mrf.mxu0
      %v1812 = vpop.f32.mrf.mxu0
      %v1813 = vadd.f32 0.0, %v1812
      %v1814 = vpop.f32.mrf.mxu0
      %1815 = vmatprep.mubr.bf16.mxu0 0
      %1816 = vmatmul.mubr.bf16.gmra.mxu0 %v1741
      %v1817 = vpop.f32.mrf.mxu0
      %v1818 = vadd.f32 0.0, %v1817
      %v1819 = vpop.f32.mrf.mxu0
      %v1820 = vpop.f32.mrf.mxu0
      %v1821 = vadd.f32 0.0, %v1820
      %v1822 = vpop.f32.mrf.mxu0
      %1823 = vmatprep.mubr.bf16.mxu0 0
      %1824 = vmatmul.mubr.bf16.gmra.mxu0 %v1743
      %v1825 = vpop.f32.mrf.mxu0
      %v1826 = vadd.f32 0.0, %v1825
      %v1827 = vpop.f32.mrf.mxu0
      %v1828 = vpop.f32.mrf.mxu0
      %v1829 = vadd.f32 0.0, %v1828
      %v1830 = vpop.f32.mrf.mxu0
      %1831 = vmatprep.mubr.bf16.mxu0 0
      %1832 = vmatmul.mubr.bf16.gmra.mxu0 %v1745
      %v1833 = vpop.f32.mrf.mxu0
      %v1834 = vadd.f32 0.0, %v1833
      %v1835 = vpop.f32.mrf.mxu0
      %v1836 = vpop.f32.mrf.mxu0
      %v1837 = vadd.f32 0.0, %v1836
      %v1838 = vpop.f32.mrf.mxu0
      %1839 = vmatprep.mubr.bf16.mxu0 0
      %1840 = vmatmul.mubr.bf16.gmra.mxu0 %v1747
      %v1841 = vpop.f32.mrf.mxu0
      %v1842 = vadd.f32 0.0, %v1841
      %v1843 = vpop.f32.mrf.mxu0
      %v1844 = vpop.f32.mrf.mxu0
      %v1845 = vadd.f32 0.0, %v1844
      %v1846 = vpop.f32.mrf.mxu0
      %1847 = vmatprep.mubr.bf16.mxu0 0
      %1848 = vmatmul.mubr.bf16.gmra.mxu0 %v1749
      %v1849 = vpop.f32.mrf.mxu0
      %v1850 = vadd.f32 0.0, %v1849
      %v1851 = vpop.f32.mrf.mxu0
      %v1852 = vpop.f32.mrf.mxu0
      %v1853 = vadd.f32 0.0, %v1852
      %v1854 = vpop.f32.mrf.mxu0
      %1855 = vmatprep.mubr.bf16.mxu0 0
      %1856 = vmatmul.mubr.bf16.gmra.mxu0 %v1751
      %v1857 = vpop.f32.mrf.mxu0
      %v1858 = vadd.f32 0.0, %v1857
      %v1859 = vpop.f32.mrf.mxu0
      %v1860 = vpop.f32.mrf.mxu0
      %v1861 = vadd.f32 0.0, %v1860
      %v1862 = vpop.f32.mrf.mxu0
      %1863 = vmatprep.mubr.bf16.mxu0 0
      %1864 = vmatmul.mubr.bf16.gmra.mxu0 %v1753
      %v1865 = vpop.f32.mrf.mxu0
      %v1866 = vadd.f32 0.0, %v1865
      %v1867 = vpop.f32.mrf.mxu0
      %v1868 = vpop.f32.mrf.mxu0
      %v1869 = vadd.f32 0.0, %v1868
      %v1870 = vpop.f32.mrf.mxu0
      %1871 = vmatprep.mubr.bf16.mxu0 0
      %1872 = vmatmul.mubr.bf16.gmra.mxu0 %v1755
      %v1873 = vpop.f32.mrf.mxu0
      %v1874 = vadd.f32 0.0, %v1873
      %v1875 = vpop.f32.mrf.mxu0
      %v1876 = vpop.f32.mrf.mxu0
      %v1877 = vadd.f32 0.0, %v1876
      %v1878 = vpop.f32.mrf.mxu0
      %1879 = vmatprep.mubr.bf16.mxu0 0
      %1880 = vmatmul.mubr.bf16.gmra.mxu0 %v1757
      %v1881 = vpop.f32.mrf.mxu0
      %v1882 = vadd.f32 0.0, %v1881
      %v1883 = vpop.f32.mrf.mxu0
      %v1884 = vpop.f32.mrf.mxu0
      %v1885 = vadd.f32 0.0, %v1884
      %v1886 = vpop.f32.mrf.mxu0
      %1887 = vmatprep.mubr.bf16.mxu0 0
      %1888 = vmatmul.mubr.bf16.gmra.mxu0 %v1759
      %v1889 = vpop.f32.mrf.mxu0
      %v1890 = vadd.f32 0.0, %v1889
      %v1891 = vpop.f32.mrf.mxu0
      %v1892 = vpop.f32.mrf.mxu0
      %v1893 = vadd.f32 0.0, %v1892
      %v1894 = vpop.f32.mrf.mxu0
      %1895 = vmatprep.mubr.bf16.mxu0 0
      %1896 = vmatmul.mubr.bf16.gmra.mxu0 %v1761
      %v1897 = vpop.f32.mrf.mxu0
      %v1898 = vadd.f32 0.0, %v1897
      %v1899 = vpop.f32.mrf.mxu0
      %v1900 = vpop.f32.mrf.mxu0
      %v1901 = vadd.f32 0.0, %v1900
      %v1902 = vpop.f32.mrf.mxu0
      %1903 = vmatprep.mubr.bf16.mxu0 0
      %1904 = vmatmul.mubr.bf16.gmra.mxu0 %v1763
      %v1905 = vpop.f32.mrf.mxu0
      %v1906 = vadd.f32 0.0, %v1905
      %v1907 = vpop.f32.mrf.mxu0
      %v1908 = vpop.f32.mrf.mxu0
      %v1909 = vadd.f32 0.0, %v1908
      %v1910 = vpop.f32.mrf.mxu0
      %1911 = vmatprep.mubr.bf16.mxu0 0
      %1912 = vmatmul.mubr.bf16.gmra.mxu0 %v1765
      %v1913 = vpop.f32.mrf.mxu0
      %v1914 = vadd.f32 0.0, %v1913
      %v1915 = vpop.f32.mrf.mxu0
      %v1916 = vpop.f32.mrf.mxu0
      %v1917 = vadd.f32 0.0, %v1916
      %v1918 = vpop.f32.mrf.mxu0
      %1919 = vmatprep.mubr.bf16.mxu0 0
      %1920 = vmatmul.mubr.bf16.gmra.mxu0 %v1767
      %v1921 = vpop.f32.mrf.mxu0
      %v1922 = vadd.f32 0.0, %v1921
      %v1923 = vpop.f32.mrf.mxu0
      %v1924 = vpop.f32.mrf.mxu0
      %v1925 = vadd.f32 0.0, %v1924
      %v1926 = vpop.f32.mrf.mxu0
      %1927 = vmatprep.mubr.bf16.mxu0 0
      %1928 = vmatmul.mubr.bf16.gmra.mxu0 %v1769
      %v1929 = vpop.f32.mrf.mxu0
      %v1930 = vadd.f32 0.0, %v1929
      %v1931 = vpop.f32.mrf.mxu0
      %v1932 = vpop.f32.mrf.mxu0
      %v1933 = vadd.f32 0.0, %v1932
      %v1934 = vpop.f32.mrf.mxu0
      %1935 = vdwg.mxu0
      %v1936 = vpack.c.bf16 %v1813, %v1810
      %v1937 = vpack.c.bf16 %v1821, %v1818
      %v1938 = vpack.c.bf16 %v1829, %v1826
      %v1939 = vpack.c.bf16 %v1837, %v1834
      %v1940 = vpack.c.bf16 %v1845, %v1842
      %v1941 = vpack.c.bf16 %v1853, %v1850
      %v1942 = vpack.c.bf16 %v1861, %v1858
      %v1943 = vpack.c.bf16 %v1869, %v1866
      %v1944 = vpack.c.bf16 %v1877, %v1874
      %v1945 = vpack.c.bf16 %v1885, %v1882
      %v1946 = vpack.c.bf16 %v1893, %v1890
      %v1947 = vpack.c.bf16 %v1901, %v1898
      %v1948 = vpack.c.bf16 %v1909, %v1906
      %v1949 = vpack.c.bf16 %v1917, %v1914
      %v1950 = vpack.c.bf16 %v1925, %v1922
      %v1951 = vpack.c.bf16 %v1933, %v1930
      %v1968 = vunpack.c.l.b16 %v1936
      %v1969 = vunpack.c.h.b16 %v1936
      %v1970 = vunpack.c.l.b16 %v1937
      %v1971 = vunpack.c.h.b16 %v1937
      %v1972 = vunpack.c.l.b16 %v1938
      %v1973 = vunpack.c.h.b16 %v1938
      %v1974 = vunpack.c.l.b16 %v1939
      %v1975 = vunpack.c.h.b16 %v1939
      %v1976 = vunpack.c.l.b16 %v1940
      %v1977 = vunpack.c.h.b16 %v1940
      %v1978 = vunpack.c.l.b16 %v1941
      %v1979 = vunpack.c.h.b16 %v1941
      %v1980 = vunpack.c.l.b16 %v1942
      %v1981 = vunpack.c.h.b16 %v1942
      %v1982 = vunpack.c.l.b16 %v1943
      %v1983 = vunpack.c.h.b16 %v1943
      %v1984 = vunpack.c.l.b16 %v1944
      %v1985 = vunpack.c.h.b16 %v1944
      %v1986 = vunpack.c.l.b16 %v1945
      %v1987 = vunpack.c.h.b16 %v1945
      %v1988 = vunpack.c.l.b16 %v1946
      %v1989 = vunpack.c.h.b16 %v1946
      %v1990 = vunpack.c.l.b16 %v1947
      %v1991 = vunpack.c.h.b16 %v1947
      %v1992 = vunpack.c.l.b16 %v1948
      %v1993 = vunpack.c.h.b16 %v1948
      %v1994 = vunpack.c.l.b16 %v1949
      %v1995 = vunpack.c.h.b16 %v1949
      %v1996 = vunpack.c.l.b16 %v1950
      %v1997 = vunpack.c.h.b16 %v1950
      %v1998 = vunpack.c.l.b16 %v1951
      %v1999 = vunpack.c.h.b16 %v1951
      %v2000 = vpack.c.b16 %v1968, %v1968
      %v2001 = vpack.c.b16 %v1969, %v1969
      %v2002 = vpack.c.b16 %v1970, %v1970
      %v2003 = vpack.c.b16 %v1971, %v1971
      %v2004 = vpack.c.b16 %v1972, %v1972
      %v2005 = vpack.c.b16 %v1973, %v1973
      %v2006 = vpack.c.b16 %v1974, %v1974
      %v2007 = vpack.c.b16 %v1975, %v1975
      %v2008 = vpack.c.b16 %v1976, %v1976
      %v2009 = vpack.c.b16 %v1977, %v1977
      %v2010 = vpack.c.b16 %v1978, %v1978
      %v2011 = vpack.c.b16 %v1979, %v1979
      %v2012 = vpack.c.b16 %v1980, %v1980
      %v2013 = vpack.c.b16 %v1981, %v1981
      %v2014 = vpack.c.b16 %v1982, %v1982
      %v2015 = vpack.c.b16 %v1983, %v1983
      %v2016 = vpack.c.b16 %v1984, %v1984
      %v2017 = vpack.c.b16 %v1985, %v1985
      %v2018 = vpack.c.b16 %v1986, %v1986
      %v2019 = vpack.c.b16 %v1987, %v1987
      %v2020 = vpack.c.b16 %v1988, %v1988
      %v2021 = vpack.c.b16 %v1989, %v1989
      %v2022 = vpack.c.b16 %v1990, %v1990
      %v2023 = vpack.c.b16 %v1991, %v1991
      %v2024 = vpack.c.b16 %v1992, %v1992
      %v2025 = vpack.c.b16 %v1993, %v1993
      %v2026 = vpack.c.b16 %v1994, %v1994
      %v2027 = vpack.c.b16 %v1995, %v1995
      %v2028 = vpack.c.b16 %v1996, %v1996
      %v2029 = vpack.c.b16 %v1997, %v1997
      %v2030 = vpack.c.b16 %v1998, %v1998
      %v2031 = vpack.c.b16 %v1999, %v1999
      %2064 = vst [vmem:[%s177] sm:$0xf] %v2000
      %2065 = vst [vmem:[%s177 + $0x4] sm:$0xf] %v2001
      %2066 = vst [vmem:[%s177 + $0x8] sm:$0xf] %v2002
      %2067 = vst [vmem:[%s177 + $0xc] sm:$0xf] %v2003
      %2068 = vst [vmem:[%s177 + $0x10] sm:$0xf] %v2004
      %2069 = vst [vmem:[%s177 + $0x14] sm:$0xf] %v2005
      %2070 = vst [vmem:[%s177 + $0x18] sm:$0xf] %v2006
      %2071 = vst [vmem:[%s177 + $0x1c] sm:$0xf] %v2007
      %2072 = vst [vmem:[%s177 + $0x20] sm:$0xf] %v2008
      %2073 = vst [vmem:[%s177 + $0x24] sm:$0xf] %v2009
      %2074 = vst [vmem:[%s177 + $0x28] sm:$0xf] %v2010
      %2075 = vst [vmem:[%s177 + $0x2c] sm:$0xf] %v2011
      %2076 = vst [vmem:[%s177 + $0x30] sm:$0xf] %v2012
      %2077 = vst [vmem:[%s177 + $0x34] sm:$0xf] %v2013
      %2078 = vst [vmem:[%s177 + $0x38] sm:$0xf] %v2014
      %2079 = vst [vmem:[%s177 + $0x3c] sm:$0xf] %v2015
      %2080 = vst [vmem:[%s177 + $0x40] sm:$0xf] %v2016
      %2081 = vst [vmem:[%s177 + $0x44] sm:$0xf] %v2017
      %2082 = vst [vmem:[%s177 + $0x48] sm:$0xf] %v2018
      %2083 = vst [vmem:[%s177 + $0x4c] sm:$0xf] %v2019
      %2084 = vst [vmem:[%s177 + $0x50] sm:$0xf] %v2020
      %2085 = vst [vmem:[%s177 + $0x54] sm:$0xf] %v2021
      %2086 = vst [vmem:[%s177 + $0x58] sm:$0xf] %v2022
      %2087 = vst [vmem:[%s177 + $0x5c] sm:$0xf] %v2023
      %2088 = vst [vmem:[%s177 + $0x60] sm:$0xf] %v2024
      %2089 = vst [vmem:[%s177 + $0x64] sm:$0xf] %v2025
      %2090 = vst [vmem:[%s177 + $0x68] sm:$0xf] %v2026
      %2091 = vst [vmem:[%s177 + $0x6c] sm:$0xf] %v2027
      %2092 = vst [vmem:[%s177 + $0x70] sm:$0xf] %v2028
      %2093 = vst [vmem:[%s177 + $0x74] sm:$0xf] %v2029
      %2094 = vst [vmem:[%s177 + $0x78] sm:$0xf] %v2030
      %2095 = vst [vmem:[%s177 + $0x7c] sm:$0xf] %v2031
      %v2096 = vadd.f32 %v1810, %v1813
      %v2097 = vadd.f32 %v2096, %v1818
      %v2098 = vadd.f32 %v2097, %v1821
      %v2099 = vadd.f32 %v2098, %v1826
      %v2100 = vadd.f32 %v2099, %v1829
      %v2101 = vadd.f32 %v2100, %v1834
      %v2102 = vadd.f32 %v2101, %v1837
      %v2103 = vadd.f32 %v2102, %v1842
      %v2104 = vadd.f32 %v2103, %v1845
      %v2105 = vadd.f32 %v2104, %v1850
      %v2106 = vadd.f32 %v2105, %v1853
      %v2107 = vadd.f32 %v2106, %v1858
      %v2108 = vadd.f32 %v2107, %v1861
      %v2109 = vadd.f32 %v2108, %v1866
      %v2110 = vadd.f32 %v2109, %v1869
      %v2111 = vadd.f32 %v2110, %v1874
      %v2112 = vadd.f32 %v2111, %v1877
      %v2113 = vadd.f32 %v2112, %v1882
      %v2114 = vadd.f32 %v2113, %v1885
      %v2115 = vadd.f32 %v2114, %v1890
      %v2116 = vadd.f32 %v2115, %v1893
      %v2117 = vadd.f32 %v2116, %v1898
      %v2118 = vadd.f32 %v2117, %v1901
      %v2119 = vadd.f32 %v2118, %v1906
      %v2120 = vadd.f32 %v2119, %v1909
      %v2121 = vadd.f32 %v2120, %v1914
      %v2122 = vadd.f32 %v2121, %v1917
      %v2123 = vadd.f32 %v2122, %v1922
      %v2124 = vadd.f32 %v2123, %v1925
      %v2125 = vadd.f32 %v2124, %v1930
      %v2126 = vadd.f32 %v2125, %v1933
      %v2127 = vrot.slane %v2126, 4
      %v2128 = vadd.f32 %v2126, %v2127
      %v2129 = vrot.slane %v2128, 2
      %v2130 = vadd.f32 %v2128, %v2129
      %v2131 = vrot.slane %v2130, 1
      %v2132 = vadd.f32 %v2130, %v2131
      %v2133 = vmul.f32 %v2132, 0.00390625
      %v2134 = vsub.f32 %v1810, %v2133
      %v2135 = vsub.f32 %v1813, %v2133
      %v2136 = vsub.f32 %v1818, %v2133
      %v2137 = vsub.f32 %v1821, %v2133
      %v2138 = vsub.f32 %v1826, %v2133
      %v2139 = vsub.f32 %v1829, %v2133
      %v2140 = vsub.f32 %v1834, %v2133
      %v2141 = vsub.f32 %v1837, %v2133
      %v2142 = vsub.f32 %v1842, %v2133
      %v2143 = vsub.f32 %v1845, %v2133
      %v2144 = vsub.f32 %v1850, %v2133
      %v2145 = vsub.f32 %v1853, %v2133
      %v2146 = vsub.f32 %v1858, %v2133
      %v2147 = vsub.f32 %v1861, %v2133
      %v2148 = vsub.f32 %v1866, %v2133
      %v2149 = vsub.f32 %v1869, %v2133
      %v2150 = vsub.f32 %v1874, %v2133
      %v2151 = vsub.f32 %v1877, %v2133
      %v2152 = vsub.f32 %v1882, %v2133
      %v2153 = vsub.f32 %v1885, %v2133
      %v2154 = vsub.f32 %v1890, %v2133
      %v2155 = vsub.f32 %v1893, %v2133
      %v2156 = vsub.f32 %v1898, %v2133
      %v2157 = vsub.f32 %v1901, %v2133
      %v2158 = vsub.f32 %v1906, %v2133
      %v2159 = vsub.f32 %v1909, %v2133
      %v2160 = vsub.f32 %v1914, %v2133
      %v2161 = vsub.f32 %v1917, %v2133
      %v2162 = vsub.f32 %v1922, %v2133
      %v2163 = vsub.f32 %v1925, %v2133
      %v2164 = vsub.f32 %v1930, %v2133
      %v2165 = vsub.f32 %v1933, %v2133
      %v2166 = vmul.f32 %v2134, %v2134
      %v2167 = vmul.f32 %v2135, %v2135
      %v2168 = vmul.f32 %v2136, %v2136
      %v2169 = vmul.f32 %v2137, %v2137
      %v2170 = vmul.f32 %v2138, %v2138
      %v2171 = vmul.f32 %v2139, %v2139
      %v2172 = vmul.f32 %v2140, %v2140
      %v2173 = vmul.f32 %v2141, %v2141
      %v2174 = vmul.f32 %v2142, %v2142
      %v2175 = vmul.f32 %v2143, %v2143
      %v2176 = vmul.f32 %v2144, %v2144
      %v2177 = vmul.f32 %v2145, %v2145
      %v2178 = vmul.f32 %v2146, %v2146
      %v2179 = vmul.f32 %v2147, %v2147
      %v2180 = vmul.f32 %v2148, %v2148
      %v2181 = vmul.f32 %v2149, %v2149
      %v2182 = vmul.f32 %v2150, %v2150
      %v2183 = vmul.f32 %v2151, %v2151
      %v2184 = vmul.f32 %v2152, %v2152
      %v2185 = vmul.f32 %v2153, %v2153
      %v2186 = vmul.f32 %v2154, %v2154
      %v2187 = vmul.f32 %v2155, %v2155
      %v2188 = vmul.f32 %v2156, %v2156
      %v2189 = vmul.f32 %v2157, %v2157
      %v2190 = vmul.f32 %v2158, %v2158
      %v2191 = vmul.f32 %v2159, %v2159
      %v2192 = vmul.f32 %v2160, %v2160
      %v2193 = vmul.f32 %v2161, %v2161
      %v2194 = vmul.f32 %v2162, %v2162
      %v2195 = vmul.f32 %v2163, %v2163
      %v2196 = vmul.f32 %v2164, %v2164
      %v2197 = vmul.f32 %v2165, %v2165
      %v2198 = vadd.f32 %v2166, %v2167
      %v2199 = vadd.f32 %v2198, %v2168
      %v2200 = vadd.f32 %v2199, %v2169
      %v2201 = vadd.f32 %v2200, %v2170
      %v2202 = vadd.f32 %v2201, %v2171
      %v2203 = vadd.f32 %v2202, %v2172
      %v2204 = vadd.f32 %v2203, %v2173
      %v2205 = vadd.f32 %v2204, %v2174
      %v2206 = vadd.f32 %v2205, %v2175
      %v2207 = vadd.f32 %v2206, %v2176
      %v2208 = vadd.f32 %v2207, %v2177
      %v2209 = vadd.f32 %v2208, %v2178
      %v2210 = vadd.f32 %v2209, %v2179
      %v2211 = vadd.f32 %v2210, %v2180
      %v2212 = vadd.f32 %v2211, %v2181
      %v2213 = vadd.f32 %v2212, %v2182
      %v2214 = vadd.f32 %v2213, %v2183
      %v2215 = vadd.f32 %v2214, %v2184
      %v2216 = vadd.f32 %v2215, %v2185
      %v2217 = vadd.f32 %v2216, %v2186
      %v2218 = vadd.f32 %v2217, %v2187
      %v2219 = vadd.f32 %v2218, %v2188
      %v2220 = vadd.f32 %v2219, %v2189
      %v2221 = vadd.f32 %v2220, %v2190
      %v2222 = vadd.f32 %v2221, %v2191
      %v2223 = vadd.f32 %v2222, %v2192
      %v2224 = vadd.f32 %v2223, %v2193
      %v2225 = vadd.f32 %v2224, %v2194
      %v2226 = vadd.f32 %v2225, %v2195
      %v2227 = vadd.f32 %v2226, %v2196
      %v2228 = vadd.f32 %v2227, %v2197
      %v2229 = vrot.slane %v2228, 4
      %v2230 = vadd.f32 %v2228, %v2229
      %v2231 = vrot.slane %v2230, 2
      %v2232 = vadd.f32 %v2230, %v2231
      %v2233 = vrot.slane %v2232, 1
      %v2234 = vadd.f32 %v2232, %v2233
      %vm2235 = vcmask 1040384
      %v2236 = vsel %vm2235, %v2132, %v2234
      %2237 = vst [vmem:[%s181] sm:$0x3] %v2236
      %p2238 = scmp.lt.s32.totalorder %s15, 1
      %s2239 = scalar_select %p2238, %s15, 1
      %s2240 = smul.addr %s2239, 32
      %s2241 = smul.addr %s2240, 4
      %s2242 = scalar_lea.vmem %s2, %s2241
      %p2243 = scmp.lt.s32.totalorder %s15, 1
      %s2244 = scalar_select %p2243, %s15, 1
      %s2245 = smul.addr %s2244, 2
      %s2246 = scalar_lea.vmem %s3, %s2245
      // Predicated region
      $region29: #{basic_block_forward.3} parent=27 // pred_check
        %p2247 = pneg %p80
      $region30: #{basic_block_forward.3} parent=27 // pred_check_branch
        %2249 = sbr.rel (%p2247) target = $region32
      $region31: #{basic_block_forward.3} parent=27 // pred_region
        _
      $region32: #{basic_block_forward.3} parent=27 // pred_fallthru
        _
      // Predicated region
      $region33: #{basic_block_forward.3} parent=27 // pred_check
        %p2250 = pneg %p106
      $region34: #{basic_block_forward.3} parent=27 // pred_check_branch
        %2252 = sbr.rel (%p2250) target = $region36
      $region35: #{basic_block_forward.3} parent=27 // pred_region
        _
      $region36: #{basic_block_forward.3} parent=27 // pred_fallthru
        _
    $region28: #{basic_block_forward.3} parent=5 // pred_fallthru
      _
    %p2253 = scmp.le.s32.totalorder 2, %s10
    // Predicated region
    $region37: #{basic_block_forward.3} parent=5 // pred_check
      %p2254 = pneg %p2253
    $region38: #{basic_block_forward.3} parent=5 // pred_check_branch
      %2256 = sbr.rel (%p2254) target = $region40
    $region39: #{basic_block_forward.3} parent=5 // pred_region
      %s2257 = ssub.s32 %s10, 2
      // Predicated region
      $region41: #{basic_block_forward.3} parent=39 // pred_check
        %p2258 = pneg %p86
      $region42: #{basic_block_forward.3} parent=39 // pred_check_branch
        %2260 = sbr.rel (%p2258) target = $region44
      $region43: #{basic_block_forward.3} parent=39 // pred_region
        %p2261 = scmp.lt.s32.totalorder %s16, 1
        %s2262 = scalar_select %p2261, %s16, 1
        %s2263 = smul.addr %s2262, 32
        %s2264 = smul.addr %s2263, 4
        %s2265 = scalar_lea.vmem %s2, %s2264
      $region44: #{basic_block_forward.3} parent=39 // pred_fallthru
        _
      // Predicated region
      $region45: #{basic_block_forward.3} parent=39 // pred_check
        %p2266 = pneg %p112
      $region46: #{basic_block_forward.3} parent=39 // pred_check_branch
        %2268 = sbr.rel (%p2266) target = $region48
      $region47: #{basic_block_forward.3} parent=39 // pred_region
        %p2269 = scmp.lt.s32.totalorder %s16, 1
        %s2270 = scalar_select %p2269, %s16, 1
        %s2271 = smul.addr %s2270, 2
        %s2272 = scalar_lea.vmem %s3, %s2271
      $region48: #{basic_block_forward.3} parent=39 // pred_fallthru
        _
    $region40: #{basic_block_forward.3} parent=5 // pred_fallthru
      _
  $region6: #{basic_block_forward.3} parent=0 // loop_footer
    %s14 = sadd.s32 1, %s10
  $region7: #{basic_block_forward.3} parent=0 // loop_footer_branch
    %9 = sbr.rel target = $region3
  $region8: #{basic_block_forward.3} parent=0 // loop_exit
    _

// kernel: basic_block_forward.4
$region0: #{basic_block_forward.4}
  #allocation0 [shape = 'u32[]', space=smem, size = 0x4, offset = 0x4, fixed_abs, tag = 'smem constant byte address 0x4 - core index']
  #allocation1 [shape = 'u32[144,128]{1,0:T(1,128)}', space=vmem, size = 0x12000, scoped, tag = 'internal scratch']
  #allocation2 [shape = 'bf16[18,18,128]{2,1,0:T(8,128)(2,1)}', space=vmem, size = 0x1b000, scoped, tag = 'scratch operand']
  %s0 = inlined_call_operand.vmem [shape: bf16[2,16,16,128], index: 0, kind: input, shape index: {}]
  %s1 = inlined_call_operand.vmem [shape: f32[1,128], index: 1, kind: input, shape index: {}]
  %s2 = inlined_call_operand.vmem [shape: f32[1,128], index: 2, kind: input, shape index: {}]
  %s3 = inlined_call_operand.vmem [shape: bf16[1152,128], index: 3, kind: input, shape index: {}]
  %s4 = inlined_call_operand.vmem [shape: bf16[2,16,16,128], index: 4, kind: output, shape index: {0}]
  %s5 = inlined_call_operand.vmem [shape: f32[2,2,128], index: 5, kind: output, shape index: {1}]
  %6 = xla_tuple %s4, %s5
  %s7 = sld [smem:[#allocation0]]
  $region57: #{basic_block_forward.4} parent=0
    _
  %s9 = ssub.s32 1, %s7
  %s10 = scalar_select 0, %s9, %s7
  loop: start=0, step=1, limit=4
  $region2: #{basic_block_forward.4} parent=0 // loop_pre_header
    _
  $region3: #{basic_block_forward.4} parent=0 // loop_header
    %s12 = sphi 0, %s16
    %p13 = scmp.ge.s32.totalorder %s12, 4
    %s22 = sphi 0, %s24
    %s25 = sphi 0, %s22
    %s26 = sphi 0, %s25
    %s42 = sphi 0, %s26
    %s46 = sphi 0, %s46
    %s48 = sphi 0, %s46
    %s49 = sphi 0, %s48
    %s63 = sphi 0, %s49
    %s67 = sphi 0, %s67
    %s69 = sphi 0, %s67
    %s70 = sphi 0, %s69
    %s84 = sphi 0, %s70
    %s88 = sphi 0, %s88
    %s90 = sphi 0, %s88
    %s91 = sphi 0, %s90
    %s105 = sphi 0, %s91
    %s111 = sphi 0, %s113
    %s114 = sphi 0, %s111
    %s115 = sphi 0, %s114
    %s131 = sphi 0, %s115
    %s137 = sphi 0, %s139
    %s140 = sphi 0, %s137
    %s141 = sphi 0, %s140
    %s157 = sphi 0, %s141
  $region4: #{basic_block_forward.4} parent=0 // loop_header_branch
    %15 = sbr.rel (%p13) target = $region8
  $region5: #{basic_block_forward.4} parent=0 // loop_body
    %s17 = ssub.s32 %s12, 1
    %s18 = ssub.s32 %s12, 2
    %s19 = sadd.s32 %s12, 1
    %s20 = ssub.s32 %s12, %s19
    %p21 = scmp.eq.s32.totalorder %s20, 0
    %s23 = sadd.s32 %s22, 1
    %s24 = scalar_select %p21, %s22, %s23
    %p27 = pneg %p21
    %p28 = scmp.eq.s32.totalorder %s12, 1
    %p29 = por %p27, %p28
    %p30 = scmp.ne.s32.totalorder %s22, %s25
    %p31 = scmp.eq.s32.totalorder %s12, 0
    %p32 = por %p30, %p31
    %p33 = scmp.ne.s32.totalorder %s22, %s25
    %p34 = scmp.eq.s32.totalorder %s17, 1
    %p35 = por %p33, %p34
    %p36 = scmp.ne.s32.totalorder %s25, %s26
    %p37 = scmp.eq.s32.totalorder %s17, 0
    %p38 = por %p36, %p37
    %p39 = scmp.ne.s32.totalorder %s25, %s26
    %p40 = scmp.eq.s32.totalorder %s18, 1
    %p41 = por %p39, %p40
    %p43 = scmp.ne.s32.totalorder %s26, %s42
    %p44 = scmp.eq.s32.totalorder %s18, 0
    %p45 = por %p43, %p44
    %s47 = sadd.s32 %s46, 1
    %p50 = scmp.eq.s32.totalorder %s12, 1
    %p51 = scmp.ne.s32.totalorder %s46, %s48
    %p52 = scmp.eq.s32.totalorder %s12, 0
    %p53 = por %p51, %p52
    %p54 = scmp.ne.s32.totalorder %s46, %s48
    %p55 = scmp.eq.s32.totalorder %s17, 1
    %p56 = por %p54, %p55
    %p57 = scmp.ne.s32.totalorder %s48, %s49
    %p58 = scmp.eq.s32.totalorder %s17, 0
    %p59 = por %p57, %p58
    %p60 = scmp.ne.s32.totalorder %s48, %s49
    %p61 = scmp.eq.s32.totalorder %s18, 1
    %p62 = por %p60, %p61
    %p64 = scmp.ne.s32.totalorder %s49, %s63
    %p65 = scmp.eq.s32.totalorder %s18, 0
    %p66 = por %p64, %p65
    %s68 = sadd.s32 %s67, 1
    %p71 = scmp.eq.s32.totalorder %s12, 1
    %p72 = scmp.ne.s32.totalorder %s67, %s69
    %p73 = scmp.eq.s32.totalorder %s12, 0
    %p74 = por %p72, %p73
    %p75 = scmp.ne.s32.totalorder %s67, %s69
    %p76 = scmp.eq.s32.totalorder %s17, 1
    %p77 = por %p75, %p76
    %p78 = scmp.ne.s32.totalorder %s69, %s70
    %p79 = scmp.eq.s32.totalorder %s17, 0
    %p80 = por %p78, %p79
    %p81 = scmp.ne.s32.totalorder %s69, %s70
    %p82 = scmp.eq.s32.totalorder %s18, 1
    %p83 = por %p81, %p82
    %p85 = scmp.ne.s32.totalorder %s70, %s84
    %p86 = scmp.eq.s32.totalorder %s18, 0
    %p87 = por %p85, %p86
    %s89 = sadd.s32 %s88, 1
    %p92 = scmp.eq.s32.totalorder %s12, 1
    %p93 = scmp.ne.s32.totalorder %s88, %s90
    %p94 = scmp.eq.s32.totalorder %s12, 0
    %p95 = por %p93, %p94
    %p96 = scmp.ne.s32.totalorder %s88, %s90
    %p97 = scmp.eq.s32.totalorder %s17, 1
    %p98 = por %p96, %p97
    %p99 = scmp.ne.s32.totalorder %s90, %s91
    %p100 = scmp.eq.s32.totalorder %s17, 0
    %p101 = por %p99, %p100
    %p102 = scmp.ne.s32.totalorder %s90, %s91
    %p103 = scmp.eq.s32.totalorder %s18, 1
    %p104 = por %p102, %p103
    %p106 = scmp.ne.s32.totalorder %s91, %s105
    %p107 = scmp.eq.s32.totalorder %s18, 0
    %p108 = por %p106, %p107
    %s109 = ssub.s32 %s12, %s19
    %p110 = scmp.eq.s32.totalorder %s109, 0
    %s112 = sadd.s32 %s111, 1
    %s113 = scalar_select %p110, %s111, %s112
    %p116 = pneg %p110
    %p117 = scmp.eq.s32.totalorder %s12, 1
    %p118 = por %p116, %p117
    %p119 = scmp.ne.s32.totalorder %s111, %s114
    %p120 = scmp.eq.s32.totalorder %s12, 0
    %p121 = por %p119, %p120
    %p122 = scmp.ne.s32.totalorder %s111, %s114
    %p123 = scmp.eq.s32.totalorder %s17, 1
    %p124 = por %p122, %p123
    %p125 = scmp.ne.s32.totalorder %s114, %s115
    %p126 = scmp.eq.s32.totalorder %s17, 0
    %p127 = por %p125, %p126
    %p128 = scmp.ne.s32.totalorder %s114, %s115
    %p129 = scmp.eq.s32.totalorder %s18, 1
    %p130 = por %p128, %p129
    %p132 = scmp.ne.s32.totalorder %s115, %s131
    %p133 = scmp.eq.s32.totalorder %s18, 0
    %p134 = por %p132, %p133
    %s135 = ssub.s32 %s12, %s19
    %p136 = scmp.eq.s32.totalorder %s135, 0
    %s138 = sadd.s32 %s137, 1
    %s139 = scalar_select %p136, %s137, %s138
    %p142 = pneg %p136
    %p143 = scmp.eq.s32.totalorder %s12, 1
    %p144 = por %p142, %p143
    %p145 = scmp.ne.s32.totalorder %s137, %s140
    %p146 = scmp.eq.s32.totalorder %s12, 0
    %p147 = por %p145, %p146
    %p148 = scmp.ne.s32.totalorder %s137, %s140
    %p149 = scmp.eq.s32.totalorder %s17, 1
    %p150 = por %p148, %p149
    %p151 = scmp.ne.s32.totalorder %s140, %s141
    %p152 = scmp.eq.s32.totalorder %s17, 0
    %p153 = por %p151, %p152
    %p154 = scmp.ne.s32.totalorder %s140, %s141
    %p155 = scmp.eq.s32.totalorder %s18, 1
    %p156 = por %p154, %p155
    %p158 = scmp.ne.s32.totalorder %s141, %s157
    %p159 = scmp.eq.s32.totalorder %s18, 0
    %p160 = por %p158, %p159
    %p161 = scmp.le.s32.totalorder 1, %s12
    %p162 = scmp.lt.s32.totalorder %s12, 3
    %p163 = pnand %p161, %p162
    %p164 = pneg %p163
    // Predicated region
    $region9: #{basic_block_forward.4} parent=5 // pred_check
      _
    $region10: #{basic_block_forward.4} parent=5 // pred_check_branch
      %166 = sbr.rel (%p163) target = $region12
    $region11: #{basic_block_forward.4} parent=5 // pred_region
      %s167 = ssub.s32 %s12, 1
      // Predicated region
      $region13: #{basic_block_forward.4} parent=11 // pred_check
        %p168 = pneg %p59
      $region14: #{basic_block_forward.4} parent=11 // pred_check_branch
        %170 = sbr.rel (%p168) target = $region16
      $region15: #{basic_block_forward.4} parent=11 // pred_region
        _
      $region16: #{basic_block_forward.4} parent=11 // pred_fallthru
        _
      // Predicated region
      $region17: #{basic_block_forward.4} parent=11 // pred_check
        %p171 = pneg %p80
      $region18: #{basic_block_forward.4} parent=11 // pred_check_branch
        %173 = sbr.rel (%p171) target = $region20
      $region19: #{basic_block_forward.4} parent=11 // pred_region
        _
      $region20: #{basic_block_forward.4} parent=11 // pred_fallthru
        _
      // Predicated region
      $region21: #{basic_block_forward.4} parent=11 // pred_check
        %p174 = pneg %p101
      $region22: #{basic_block_forward.4} parent=11 // pred_check_branch
        %176 = sbr.rel (%p174) target = $region24
      $region23: #{basic_block_forward.4} parent=11 // pred_region
        _
      $region24: #{basic_block_forward.4} parent=11 // pred_fallthru
        _
    $region12: #{basic_block_forward.4} parent=5 // pred_fallthru
      _
    %p177 = scmp.lt.s32.totalorder %s12, 2
    // Predicated region
    $region25: #{basic_block_forward.4} parent=5 // pred_check
      %p178 = pneg %p177
    $region26: #{basic_block_forward.4} parent=5 // pred_check_branch
      %180 = sbr.rel (%p178) target = $region28
    $region27: #{basic_block_forward.4} parent=5 // pred_region
      // Predicated region
      $region29: #{basic_block_forward.4} parent=27 // pred_check
        %p181 = pneg %p32
      $region30: #{basic_block_forward.4} parent=27 // pred_check_branch
        %183 = sbr.rel (%p181) target = $region32
      $region31: #{basic_block_forward.4} parent=27 // pred_region
        %p184 = scmp.lt.s32.totalorder %s12, 1
        %s185 = scalar_select %p184, %s12, 1
        %s186 = smul.addr %s185, 32
        %s187 = smul.addr %s186, 4
        %s188 = scalar_lea.vmem %s0, %s187
      $region32: #{basic_block_forward.4} parent=27 // pred_fallthru
        _
    $region28: #{basic_block_forward.4} parent=5 // pred_fallthru
      _
    %p189 = scmp.le.s32.totalorder 1, %s12
    %p190 = scmp.lt.s32.totalorder %s12, 3
    %p191 = pnand %p189, %p190
    %p192 = pneg %p191
    // Predicated region
    $region33: #{basic_block_forward.4} parent=5 // pred_check
      _
    $region34: #{basic_block_forward.4} parent=5 // pred_check_branch
      %194 = sbr.rel (%p191) target = $region36
    $region35: #{basic_block_forward.4} parent=5 // pred_region
      %s195 = ssub.s32 %s12, 1
      %p196 = scmp.lt.s32.totalorder %s17, 1
      %s197 = scalar_select %p196, %s17, 1
      %s198 = smul.addr %s197, 32
      %s199 = smul.addr %s198, 4
      %s200 = scalar_lea.vmem %s0, %s199
      %p201 = pneg %p38
      %p202 = pneg %p35
      %p203 = pneg %p59
      %p204 = pneg %p56
      %p205 = pneg %p80
      %p206 = pneg %p77
      %p207 = pneg %p101
      %p208 = pneg %p98
      %p209 = pneg %p127
      %p210 = pneg %p124
      %p211 = scmp.lt.s32.totalorder %s17, 1
      %s212 = scalar_select %p211, %s17, 1
      %s213 = smul.addr %s212, 32
      %s214 = smul.addr %s213, 4
      %s215 = scalar_lea.vmem %s4, %s214
      %p216 = pneg %p153
      %p217 = pneg %p150
      %p218 = scmp.lt.s32.totalorder %s17, 1
      %s219 = scalar_select %p218, %s17, 1
      %s220 = smul.addr %s219, 2
      %s221 = scalar_lea.vmem %s5, %s220
      %p222 = scmp.lt.s32.totalorder %s17, 1
      %s223 = scalar_select %p222, %s17, 1
      %s224 = smul.addr %s223, 32
      %s225 = smul.addr %s224, 4
      %s226 = scalar_lea.vmem %s0, %s225
      %p227 = scmp.lt.s32.totalorder %s17, 1
      %s228 = scalar_select %p227, %s17, 1
      %s229 = smul.addr %s228, 32
      %s230 = smul.addr %s229, 4
      %s231 = scalar_lea.vmem %s4, %s230
      %p232 = scmp.lt.s32.totalorder %s17, 1
      %s233 = scalar_select %p232, %s17, 1
      %s234 = smul.addr %s233, 2
      %s235 = scalar_lea.vmem %s5, %s234
      %v237 = vld [vmem:[%s226] sm:$0xf]
      %v238 = vld [vmem:[%s226 + $0x4] sm:$0xf]
      %v239 = vld [vmem:[%s226 + $0x8] sm:$0xf]
      %v240 = vld [vmem:[%s226 + $0xc] sm:$0xf]
      %v241 = vld [vmem:[%s226 + $0x10] sm:$0xf]
      %v242 = vld [vmem:[%s226 + $0x14] sm:$0xf]
      %v243 = vld [vmem:[%s226 + $0x18] sm:$0xf]
      %v244 = vld [vmem:[%s226 + $0x1c] sm:$0xf]
      %v245 = vld [vmem:[%s226 + $0x20] sm:$0xf]
      %v246 = vld [vmem:[%s226 + $0x24] sm:$0xf]
      %v247 = vld [vmem:[%s226 + $0x28] sm:$0xf]
      %v248 = vld [vmem:[%s226 + $0x2c] sm:$0xf]
      %v249 = vld [vmem:[%s226 + $0x30] sm:$0xf]
      %v250 = vld [vmem:[%s226 + $0x34] sm:$0xf]
      %v251 = vld [vmem:[%s226 + $0x38] sm:$0xf]
      %v252 = vld [vmem:[%s226 + $0x3c] sm:$0xf]
      %v253 = vld [vmem:[%s226 + $0x40] sm:$0xf]
      %v254 = vld [vmem:[%s226 + $0x44] sm:$0xf]
      %v255 = vld [vmem:[%s226 + $0x48] sm:$0xf]
      %v256 = vld [vmem:[%s226 + $0x4c] sm:$0xf]
      %v257 = vld [vmem:[%s226 + $0x50] sm:$0xf]
      %v258 = vld [vmem:[%s226 + $0x54] sm:$0xf]
      %v259 = vld [vmem:[%s226 + $0x58] sm:$0xf]
      %v260 = vld [vmem:[%s226 + $0x5c] sm:$0xf]
      %v261 = vld [vmem:[%s226 + $0x60] sm:$0xf]
      %v262 = vld [vmem:[%s226 + $0x64] sm:$0xf]
      %v263 = vld [vmem:[%s226 + $0x68] sm:$0xf]
      %v264 = vld [vmem:[%s226 + $0x6c] sm:$0xf]
      %v265 = vld [vmem:[%s226 + $0x70] sm:$0xf]
      %v266 = vld [vmem:[%s226 + $0x74] sm:$0xf]
      %v267 = vld [vmem:[%s226 + $0x78] sm:$0xf]
      %v268 = vld [vmem:[%s226 + $0x7c] sm:$0xf]
      %v269 = vunpack.c.l.bf16 %v237
      %v270 = vunpack.c.l.bf16 %v238
      %v271 = vunpack.c.l.bf16 %v239
      %v272 = vunpack.c.l.bf16 %v240
      %v273 = vunpack.c.l.bf16 %v241
      %v274 = vunpack.c.l.bf16 %v242
      %v275 = vunpack.c.l.bf16 %v243
      %v276 = vunpack.c.l.bf16 %v244
      %v277 = vunpack.c.l.bf16 %v245
      %v278 = vunpack.c.l.bf16 %v246
      %v279 = vunpack.c.l.bf16 %v247
      %v280 = vunpack.c.l.bf16 %v248
      %v281 = vunpack.c.l.bf16 %v249
      %v282 = vunpack.c.l.bf16 %v250
      %v283 = vunpack.c.l.bf16 %v251
      %v284 = vunpack.c.l.bf16 %v252
      %v285 = vunpack.c.l.bf16 %v253
      %v286 = vunpack.c.l.bf16 %v254
      %v287 = vunpack.c.l.bf16 %v255
      %v288 = vunpack.c.l.bf16 %v256
      %v289 = vunpack.c.l.bf16 %v257
      %v290 = vunpack.c.l.bf16 %v258
      %v291 = vunpack.c.l.bf16 %v259
      %v292 = vunpack.c.l.bf16 %v260
      %v293 = vunpack.c.l.bf16 %v261
      %v294 = vunpack.c.l.bf16 %v262
      %v295 = vunpack.c.l.bf16 %v263
      %v296 = vunpack.c.l.bf16 %v264
      %v297 = vunpack.c.l.bf16 %v265
      %v298 = vunpack.c.l.bf16 %v266
      %v299 = vunpack.c.l.bf16 %v267
      %v300 = vunpack.c.l.bf16 %v268
      %v301 = vld [vmem:[%s1] sm:$0x1]
      %v303 = vlaneseq
      %v304 = vshrl.u32 %v303, 7
      %v305 = vsub.s32 0, %v304
      %v306 = vrot.slane %v301, %v305
      %v308 = vmul.f32 %v269, %v306
      %v309 = vmul.f32 %v270, %v306
      %v310 = vmul.f32 %v271, %v306
      %v311 = vmul.f32 %v272, %v306
      %v312 = vmul.f32 %v273, %v306
      %v313 = vmul.f32 %v274, %v306
      %v314 = vmul.f32 %v275, %v306
      %v315 = vmul.f32 %v276, %v306
      %v316 = vmul.f32 %v277, %v306
      %v317 = vmul.f32 %v278, %v306
      %v318 = vmul.f32 %v279, %v306
      %v319 = vmul.f32 %v280, %v306
      %v320 = vmul.f32 %v281, %v306
      %v321 = vmul.f32 %v282, %v306
      %v322 = vmul.f32 %v283, %v306
      %v323 = vmul.f32 %v284, %v306
      %v324 = vmul.f32 %v285, %v306
      %v325 = vmul.f32 %v286, %v306
      %v326 = vmul.f32 %v287, %v306
      %v327 = vmul.f32 %v288, %v306
      %v328 = vmul.f32 %v289, %v306
      %v329 = vmul.f32 %v290, %v306
      %v330 = vmul.f32 %v291, %v306
      %v331 = vmul.f32 %v292, %v306
      %v332 = vmul.f32 %v293, %v306
      %v333 = vmul.f32 %v294, %v306
      %v334 = vmul.f32 %v295, %v306
      %v335 = vmul.f32 %v296, %v306
      %v336 = vmul.f32 %v297, %v306
      %v337 = vmul.f32 %v298, %v306
      %v338 = vmul.f32 %v299, %v306
      %v339 = vmul.f32 %v300, %v306
      %v340 = vld [vmem:[%s2] sm:$0x1]
      %v342 = vlaneseq
      %v343 = vshrl.u32 %v342, 7
      %v344 = vsub.s32 0, %v343
      %v345 = vrot.slane %v340, %v344
      %v347 = vadd.f32 %v308, %v345
      %v348 = vadd.f32 %v309, %v345
      %v349 = vadd.f32 %v310, %v345
      %v350 = vadd.f32 %v311, %v345
      %v351 = vadd.f32 %v312, %v345
      %v352 = vadd.f32 %v313, %v345
      %v353 = vadd.f32 %v314, %v345
      %v354 = vadd.f32 %v315, %v345
      %v355 = vadd.f32 %v316, %v345
      %v356 = vadd.f32 %v317, %v345
      %v357 = vadd.f32 %v318, %v345
      %v358 = vadd.f32 %v319, %v345
      %v359 = vadd.f32 %v320, %v345
      %v360 = vadd.f32 %v321, %v345
      %v361 = vadd.f32 %v322, %v345
      %v362 = vadd.f32 %v323, %v345
      %v363 = vadd.f32 %v324, %v345
      %v364 = vadd.f32 %v325, %v345
      %v365 = vadd.f32 %v326, %v345
      %v366 = vadd.f32 %v327, %v345
      %v367 = vadd.f32 %v328, %v345
      %v368 = vadd.f32 %v329, %v345
      %v369 = vadd.f32 %v330, %v345
      %v370 = vadd.f32 %v331, %v345
      %v371 = vadd.f32 %v332, %v345
      %v372 = vadd.f32 %v333, %v345
      %v373 = vadd.f32 %v334, %v345
      %v374 = vadd.f32 %v335, %v345
      %v375 = vadd.f32 %v336, %v345
      %v376 = vadd.f32 %v337, %v345
      %v377 = vadd.f32 %v338, %v345
      %v378 = vadd.f32 %v339, %v345
      %v379 = vmax.f32 %v347, 0.0
      %v380 = vmax.f32 %v348, 0.0
      %v381 = vmax.f32 %v349, 0.0
      %v382 = vmax.f32 %v350, 0.0
      %v383 = vmax.f32 %v351, 0.0
      %v384 = vmax.f32 %v352, 0.0
      %v385 = vmax.f32 %v353, 0.0
      %v386 = vmax.f32 %v354, 0.0
      %v387 = vmax.f32 %v355, 0.0
      %v388 = vmax.f32 %v356, 0.0
      %v389 = vmax.f32 %v357, 0.0
      %v390 = vmax.f32 %v358, 0.0
      %v391 = vmax.f32 %v359, 0.0
      %v392 = vmax.f32 %v360, 0.0
      %v393 = vmax.f32 %v361, 0.0
      %v394 = vmax.f32 %v362, 0.0
      %v395 = vmax.f32 %v363, 0.0
      %v396 = vmax.f32 %v364, 0.0
      %v397 = vmax.f32 %v365, 0.0
      %v398 = vmax.f32 %v366, 0.0
      %v399 = vmax.f32 %v367, 0.0
      %v400 = vmax.f32 %v368, 0.0
      %v401 = vmax.f32 %v369, 0.0
      %v402 = vmax.f32 %v370, 0.0
      %v403 = vmax.f32 %v371, 0.0
      %v404 = vmax.f32 %v372, 0.0
      %v405 = vmax.f32 %v373, 0.0
      %v406 = vmax.f32 %v374, 0.0
      %v407 = vmax.f32 %v375, 0.0
      %v408 = vmax.f32 %v376, 0.0
      %v409 = vmax.f32 %v377, 0.0
      %v410 = vmax.f32 %v378, 0.0
      %411 = vst [vmem:[#allocation2] sm:$0xf] 0
      %412 = vst [vmem:[#allocation2 + $0x4] sm:$0xf] 0
      %413 = vst [vmem:[#allocation2 + $0x8] sm:$0x1] 0
      %414 = vst [vmem:[#allocation2 + $0xc] sm:$0xf] 0
      %415 = vst [vmem:[#allocation2 + $0x10] sm:$0xf] 0
      %416 = vst [vmem:[#allocation2 + $0x14] sm:$0x1] 0
      %417 = vst [vmem:[#allocation2 + $0x18] sm:$0xf] 0
      %418 = vst [vmem:[#allocation2 + $0x1c] sm:$0xf] 0
      %419 = vst [vmem:[#allocation2 + $0x20] sm:$0x1] 0
      %420 = vst [vmem:[#allocation2 + $0x24] sm:$0xf] 0
      %421 = vst [vmem:[#allocation2 + $0x28] sm:$0xf] 0
      %422 = vst [vmem:[#allocation2 + $0x2c] sm:$0x1] 0
      %423 = vst [vmem:[#allocation2 + $0x30] sm:$0xf] 0
      %424 = vst [vmem:[#allocation2 + $0x34] sm:$0xf] 0
      %425 = vst [vmem:[#allocation2 + $0x38] sm:$0x1] 0
      %426 = vst [vmem:[#allocation2 + $0x3c] sm:$0xf] 0
      %427 = vst [vmem:[#allocation2 + $0x40] sm:$0xf] 0
      %428 = vst [vmem:[#allocation2 + $0x44] sm:$0x1] 0
      %429 = vst [vmem:[#allocation2 + $0x48] sm:$0xf] 0
      %430 = vst [vmem:[#allocation2 + $0x4c] sm:$0xf] 0
      %431 = vst [vmem:[#allocation2 + $0x50] sm:$0x1] 0
      %432 = vst [vmem:[#allocation2 + $0x54] sm:$0xf] 0
      %433 = vst [vmem:[#allocation2 + $0x58] sm:$0xf] 0
      %434 = vst [vmem:[#allocation2 + $0x5c] sm:$0x1] 0
      %435 = vst [vmem:[#allocation2 + $0x60] sm:$0xf] 0
      %436 = vst [vmem:[#allocation2 + $0x64] sm:$0xf] 0
      %437 = vst [vmem:[#allocation2 + $0x68] sm:$0x1] 0
      %438 = vst [vmem:[#allocation2 + $0x6c] sm:$0xf] 0
      %439 = vst [vmem:[#allocation2 + $0x70] sm:$0xf] 0
      %440 = vst [vmem:[#allocation2 + $0x74] sm:$0x1] 0
      %441 = vst [vmem:[#allocation2 + $0x78] sm:$0xf] 0
      %442 = vst [vmem:[#allocation2 + $0x7c] sm:$0xf] 0
      %443 = vst [vmem:[#allocation2 + $0x80] sm:$0x1] 0
      %444 = vst [vmem:[#allocation2 + $0x84] sm:$0xf] 0
      %445 = vst [vmem:[#allocation2 + $0x88] sm:$0xf] 0
      %446 = vst [vmem:[#allocation2 + $0x8c] sm:$0x1] 0
      %447 = vst [vmem:[#allocation2 + $0x90] sm:$0xf] 0
      %448 = vst [vmem:[#allocation2 + $0x94] sm:$0xf] 0
      %449 = vst [vmem:[#allocation2 + $0x98] sm:$0x1] 0
      %450 = vst [vmem:[#allocation2 + $0x9c] sm:$0xf] 0
      %451 = vst [vmem:[#allocation2 + $0xa0] sm:$0xf] 0
      %452 = vst [vmem:[#allocation2 + $0xa4] sm:$0x1] 0
      %453 = vst [vmem:[#allocation2 + $0xa8] sm:$0xf] 0
      %454 = vst [vmem:[#allocation2 + $0xac] sm:$0xf] 0
      %455 = vst [vmem:[#allocation2 + $0xb0] sm:$0x1] 0
      %456 = vst [vmem:[#allocation2 + $0xb4] sm:$0xf] 0
      %457 = vst [vmem:[#allocation2 + $0xb8] sm:$0xf] 0
      %458 = vst [vmem:[#allocation2 + $0xbc] sm:$0x1] 0
      %459 = vst [vmem:[#allocation2 + $0xc0] sm:$0xf] 0
      %460 = vst [vmem:[#allocation2 + $0xc4] sm:$0xf] 0
      %461 = vst [vmem:[#allocation2 + $0xc8] sm:$0x1] 0
      %462 = vst [vmem:[#allocation2 + $0xcc] sm:$0xf] 0
      %463 = vst [vmem:[#allocation2 + $0xd0] sm:$0xf] 0
      %464 = vst [vmem:[#allocation2 + $0xd4] sm:$0x1] 0
      %v465 = vpack.c.bf16 %v380, %v379
      %v466 = vpack.c.bf16 %v382, %v381
      %v467 = vpack.c.bf16 %v384, %v383
      %v468 = vpack.c.bf16 %v386, %v385
      %v469 = vpack.c.bf16 %v388, %v387
      %v470 = vpack.c.bf16 %v390, %v389
      %v471 = vpack.c.bf16 %v392, %v391
      %v472 = vpack.c.bf16 %v394, %v393
      %v473 = vpack.c.bf16 %v396, %v395
      %v474 = vpack.c.bf16 %v398, %v397
      %v475 = vpack.c.bf16 %v400, %v399
      %v476 = vpack.c.bf16 %v402, %v401
      %v477 = vpack.c.bf16 %v404, %v403
      %v478 = vpack.c.bf16 %v406, %v405
      %v479 = vpack.c.bf16 %v408, %v407
      %v480 = vpack.c.bf16 %v410, %v409
      %v497 = vunpack.c.l.b16 %v465
      %v498 = vunpack.c.h.b16 %v465
      %v499 = vunpack.c.l.b16 %v466
      %v500 = vunpack.c.h.b16 %v466
      %v501 = vunpack.c.l.b16 %v467
      %v502 = vunpack.c.h.b16 %v467
      %v503 = vunpack.c.l.b16 %v468
      %v504 = vunpack.c.h.b16 %v468
      %v505 = vunpack.c.l.b16 %v469
      %v506 = vunpack.c.h.b16 %v469
      %v507 = vunpack.c.l.b16 %v470
      %v508 = vunpack.c.h.b16 %v470
      %v509 = vunpack.c.l.b16 %v471
      %v510 = vunpack.c.h.b16 %v471
      %v511 = vunpack.c.l.b16 %v472
      %v512 = vunpack.c.h.b16 %v472
      %v513 = vunpack.c.l.b16 %v473
      %v514 = vunpack.c.h.b16 %v473
      %v515 = vunpack.c.l.b16 %v474
      %v516 = vunpack.c.h.b16 %v474
      %v517 = vunpack.c.l.b16 %v475
      %v518 = vunpack.c.h.b16 %v475
      %v519 = vunpack.c.l.b16 %v476
      %v520 = vunpack.c.h.b16 %v476
      %v521 = vunpack.c.l.b16 %v477
      %v522 = vunpack.c.h.b16 %v477
      %v523 = vunpack.c.l.b16 %v478
      %v524 = vunpack.c.h.b16 %v478
      %v525 = vunpack.c.l.b16 %v479
      %v526 = vunpack.c.h.b16 %v479
      %v527 = vunpack.c.l.b16 %v480
      %v528 = vunpack.c.h.b16 %v480
      %v529 = vpack.c.b16 %v497, %v497
      %v530 = vpack.c.b16 %v498, %v498
      %v531 = vpack.c.b16 %v499, %v499
      %v532 = vpack.c.b16 %v500, %v500
      %v533 = vpack.c.b16 %v501, %v501
      %v534 = vpack.c.b16 %v502, %v502
      %v535 = vpack.c.b16 %v503, %v503
      %v536 = vpack.c.b16 %v504, %v504
      %v537 = vpack.c.b16 %v505, %v505
      %v538 = vpack.c.b16 %v506, %v506
      %v539 = vpack.c.b16 %v507, %v507
      %v540 = vpack.c.b16 %v508, %v508
      %v541 = vpack.c.b16 %v509, %v509
      %v542 = vpack.c.b16 %v510, %v510
      %v543 = vpack.c.b16 %v511, %v511
      %v544 = vpack.c.b16 %v512, %v512
      %v545 = vpack.c.b16 %v513, %v513
      %v546 = vpack.c.b16 %v514, %v514
      %v547 = vpack.c.b16 %v515, %v515
      %v548 = vpack.c.b16 %v516, %v516
      %v549 = vpack.c.b16 %v517, %v517
      %v550 = vpack.c.b16 %v518, %v518
      %v551 = vpack.c.b16 %v519, %v519
      %v552 = vpack.c.b16 %v520, %v520
      %v553 = vpack.c.b16 %v521, %v521
      %v554 = vpack.c.b16 %v522, %v522
      %v555 = vpack.c.b16 %v523, %v523
      %v556 = vpack.c.b16 %v524, %v524
      %v557 = vpack.c.b16 %v525, %v525
      %v558 = vpack.c.b16 %v526, %v526
      %v559 = vpack.c.b16 %v527, %v527
      %v560 = vpack.c.b16 %v528, %v528
      %vm561 = vsmask.f32 256
      %vm562 = vsmask.f32 4368
      %vm563 = vmor %vm561, %vm562
      %v565 = vshrl.u32 %v529, 16
      %v567 = vrot.slane %v565, 7
      %v568 = vshll.u32 %v529, 16
      %v570 = vor.u32 %v567, %v568
      %v571 = vrot.slane %v567, 4
      %v573 = vshrl.u32 %v530, 16
      %v575 = vrot.slane %v573, 7
      %v576 = vshll.u32 %v530, 16
      %v578 = vor.u32 %v575, %v576
      %v579 = vsel %vm563, %v571, %v578
      %v580 = vrot.slane %v575, 4
      %v582 = vshrl.u32 %v531, 16
      %v584 = vrot.slane %v582, 7
      %v585 = vshll.u32 %v531, 16
      %v587 = vor.u32 %v584, %v585
      %v588 = vrot.slane %v584, 4
      %v590 = vshrl.u32 %v532, 16
      %v592 = vrot.slane %v590, 7
      %v593 = vshll.u32 %v532, 16
      %v595 = vor.u32 %v592, %v593
      %v596 = vsel %vm563, %v588, %v595
      %v597 = vrot.slane %v592, 4
      %v599 = vshrl.u32 %v533, 16
      %v601 = vrot.slane %v599, 7
      %v602 = vshll.u32 %v533, 16
      %v604 = vor.u32 %v601, %v602
      %v605 = vrot.slane %v601, 4
      %v607 = vshrl.u32 %v534, 16
      %v609 = vrot.slane %v607, 7
      %v610 = vshll.u32 %v534, 16
      %v612 = vor.u32 %v609, %v610
      %v613 = vsel %vm563, %v605, %v612
      %v614 = vrot.slane %v609, 4
      %v616 = vshrl.u32 %v535, 16
      %v618 = vrot.slane %v616, 7
      %v619 = vshll.u32 %v535, 16
      %v621 = vor.u32 %v618, %v619
      %v622 = vrot.slane %v618, 4
      %v624 = vshrl.u32 %v536, 16
      %v626 = vrot.slane %v624, 7
      %v627 = vshll.u32 %v536, 16
      %v629 = vor.u32 %v626, %v627
      %v630 = vsel %vm563, %v622, %v629
      %v631 = vrot.slane %v626, 4
      %v633 = vshrl.u32 %v537, 16
      %v635 = vrot.slane %v633, 7
      %v636 = vshll.u32 %v537, 16
      %v638 = vor.u32 %v635, %v636
      %v639 = vrot.slane %v635, 4
      %v641 = vshrl.u32 %v538, 16
      %v643 = vrot.slane %v641, 7
      %v644 = vshll.u32 %v538, 16
      %v646 = vor.u32 %v643, %v644
      %v647 = vsel %vm563, %v639, %v646
      %v648 = vrot.slane %v643, 4
      %v650 = vshrl.u32 %v539, 16
      %v652 = vrot.slane %v650, 7
      %v653 = vshll.u32 %v539, 16
      %v655 = vor.u32 %v652, %v653
      %v656 = vrot.slane %v652, 4
      %v658 = vshrl.u32 %v540, 16
      %v660 = vrot.slane %v658, 7
      %v661 = vshll.u32 %v540, 16
      %v663 = vor.u32 %v660, %v661
      %v664 = vsel %vm563, %v656, %v663
      %v665 = vrot.slane %v660, 4
      %v667 = vshrl.u32 %v541, 16
      %v669 = vrot.slane %v667, 7
      %v670 = vshll.u32 %v541, 16
      %v672 = vor.u32 %v669, %v670
      %v673 = vrot.slane %v669, 4
      %v675 = vshrl.u32 %v542, 16
      %v677 = vrot.slane %v675, 7
      %v678 = vshll.u32 %v542, 16
      %v680 = vor.u32 %v677, %v678
      %v681 = vsel %vm563, %v673, %v680
      %v682 = vrot.slane %v677, 4
      %v684 = vshrl.u32 %v543, 16
      %v686 = vrot.slane %v684, 7
      %v687 = vshll.u32 %v543, 16
      %v689 = vor.u32 %v686, %v687
      %v690 = vrot.slane %v686, 4
      %v692 = vshrl.u32 %v544, 16
      %v694 = vrot.slane %v692, 7
      %v695 = vshll.u32 %v544, 16
      %v697 = vor.u32 %v694, %v695
      %v698 = vsel %vm563, %v690, %v697
      %v699 = vrot.slane %v694, 4
      %v701 = vshrl.u32 %v545, 16
      %v703 = vrot.slane %v701, 7
      %v704 = vshll.u32 %v545, 16
      %v706 = vor.u32 %v703, %v704
      %v707 = vrot.slane %v703, 4
      %v709 = vshrl.u32 %v546, 16
      %v711 = vrot.slane %v709, 7
      %v712 = vshll.u32 %v546, 16
      %v714 = vor.u32 %v711, %v712
      %v715 = vsel %vm563, %v707, %v714
      %v716 = vrot.slane %v711, 4
      %v718 = vshrl.u32 %v547, 16
      %v720 = vrot.slane %v718, 7
      %v721 = vshll.u32 %v547, 16
      %v723 = vor.u32 %v720, %v721
      %v724 = vrot.slane %v720, 4
      %v726 = vshrl.u32 %v548, 16
      %v728 = vrot.slane %v726, 7
      %v729 = vshll.u32 %v548, 16
      %v731 = vor.u32 %v728, %v729
      %v732 = vsel %vm563, %v724, %v731
      %v733 = vrot.slane %v728, 4
      %v735 = vshrl.u32 %v549, 16
      %v737 = vrot.slane %v735, 7
      %v738 = vshll.u32 %v549, 16
      %v740 = vor.u32 %v737, %v738
      %v741 = vrot.slane %v737, 4
      %v743 = vshrl.u32 %v550, 16
      %v745 = vrot.slane %v743, 7
      %v746 = vshll.u32 %v550, 16
      %v748 = vor.u32 %v745, %v746
      %v749 = vsel %vm563, %v741, %v748
      %v750 = vrot.slane %v745, 4
      %v752 = vshrl.u32 %v551, 16
      %v754 = vrot.slane %v752, 7
      %v755 = vshll.u32 %v551, 16
      %v757 = vor.u32 %v754, %v755
      %v758 = vrot.slane %v754, 4
      %v760 = vshrl.u32 %v552, 16
      %v762 = vrot.slane %v760, 7
      %v763 = vshll.u32 %v552, 16
      %v765 = vor.u32 %v762, %v763
      %v766 = vsel %vm563, %v758, %v765
      %v767 = vrot.slane %v762, 4
      %v769 = vshrl.u32 %v553, 16
      %v771 = vrot.slane %v769, 7
      %v772 = vshll.u32 %v553, 16
      %v774 = vor.u32 %v771, %v772
      %v775 = vrot.slane %v771, 4
      %v777 = vshrl.u32 %v554, 16
      %v779 = vrot.slane %v777, 7
      %v780 = vshll.u32 %v554, 16
      %v782 = vor.u32 %v779, %v780
      %v783 = vsel %vm563, %v775, %v782
      %v784 = vrot.slane %v779, 4
      %v786 = vshrl.u32 %v555, 16
      %v788 = vrot.slane %v786, 7
      %v789 = vshll.u32 %v555, 16
      %v791 = vor.u32 %v788, %v789
      %v792 = vrot.slane %v788, 4
      %v794 = vshrl.u32 %v556, 16
      %v796 = vrot.slane %v794, 7
      %v797 = vshll.u32 %v556, 16
      %v799 = vor.u32 %v796, %v797
      %v800 = vsel %vm563, %v792, %v799
      %v801 = vrot.slane %v796, 4
      %v803 = vshrl.u32 %v557, 16
      %v805 = vrot.slane %v803, 7
      %v806 = vshll.u32 %v557, 16
      %v808 = vor.u32 %v805, %v806
      %v809 = vrot.slane %v805, 4
      %v811 = vshrl.u32 %v558, 16
      %v813 = vrot.slane %v811, 7
      %v814 = vshll.u32 %v558, 16
      %v816 = vor.u32 %v813, %v814
      %v817 = vsel %vm563, %v809, %v816
      %v818 = vrot.slane %v813, 4
      %v820 = vshrl.u32 %v559, 16
      %v822 = vrot.slane %v820, 7
      %v823 = vshll.u32 %v559, 16
      %v825 = vor.u32 %v822, %v823
      %v826 = vrot.slane %v822, 4
      %v828 = vshrl.u32 %v560, 16
      %v830 = vrot.slane %v828, 7
      %v831 = vshll.u32 %v560, 16
      %v833 = vor.u32 %v830, %v831
      %v834 = vsel %vm563, %v826, %v833
      %v835 = vrot.slane %v830, 4
      %s884 = scalar_lea.vmem [#allocation2], 12
      %vm885 = vcmask 1043456
      %vm886 = vsmask.f32 7938
      %vm887 = vmand %vm885, %vm886
      %v888 = vld [vmem:[%s884] sm:$0xf]
      %v889 = vsel %vm887, %v570, %v888
      %890 = vst [vmem:[%s884] sm:$0xf] %v889
      %891 = vst [vmem:[%s884 + $0x4] sm:$0xf] %v579
      %vm892 = vcmask 1040384
      %vm893 = vmand %vm892, %vm561
      %v894 = vld [vmem:[%s884 + $0x8] sm:$0x1]
      %v895 = vsel %vm893, %v580, %v894
      %896 = vst [vmem:[%s884 + $0x8] sm:$0x1] %v895
      %v897 = vld [vmem:[%s884 + $0xc] sm:$0xf]
      %v898 = vsel %vm887, %v587, %v897
      %899 = vst [vmem:[%s884 + $0xc] sm:$0xf] %v898
      %900 = vst [vmem:[%s884 + $0x10] sm:$0xf] %v596
      %v901 = vld [vmem:[%s884 + $0x14] sm:$0x1]
      %v902 = vsel %vm893, %v597, %v901
      %903 = vst [vmem:[%s884 + $0x14] sm:$0x1] %v902
      %v904 = vld [vmem:[%s884 + $0x18] sm:$0xf]
      %v905 = vsel %vm887, %v604, %v904
      %906 = vst [vmem:[%s884 + $0x18] sm:$0xf] %v905
      %907 = vst [vmem:[%s884 + $0x1c] sm:$0xf] %v613
      %v908 = vld [vmem:[%s884 + $0x20] sm:$0x1]
      %v909 = vsel %vm893, %v614, %v908
      %910 = vst [vmem:[%s884 + $0x20] sm:$0x1] %v909
      %v911 = vld [vmem:[%s884 + $0x24] sm:$0xf]
      %v912 = vsel %vm887, %v621, %v911
      %913 = vst [vmem:[%s884 + $0x24] sm:$0xf] %v912
      %914 = vst [vmem:[%s884 + $0x28] sm:$0xf] %v630
      %v915 = vld [vmem:[%s884 + $0x2c] sm:$0x1]
      %v916 = vsel %vm893, %v631, %v915
      %917 = vst [vmem:[%s884 + $0x2c] sm:$0x1] %v916
      %v918 = vld [vmem:[%s884 + $0x30] sm:$0xf]
      %v919 = vsel %vm887, %v638, %v918
      %920 = vst [vmem:[%s884 + $0x30] sm:$0xf] %v919
      %921 = vst [vmem:[%s884 + $0x34] sm:$0xf] %v647
      %v922 = vld [vmem:[%s884 + $0x38] sm:$0x1]
      %v923 = vsel %vm893, %v648, %v922
      %924 = vst [vmem:[%s884 + $0x38] sm:$0x1] %v923
      %v925 = vld [vmem:[%s884 + $0x3c] sm:$0xf]
      %v926 = vsel %vm887, %v655, %v925
      %927 = vst [vmem:[%s884 + $0x3c] sm:$0xf] %v926
      %928 = vst [vmem:[%s884 + $0x40] sm:$0xf] %v664
      %v929 = vld [vmem:[%s884 + $0x44] sm:$0x1]
      %v930 = vsel %vm893, %v665, %v929
      %931 = vst [vmem:[%s884 + $0x44] sm:$0x1] %v930
      %v932 = vld [vmem:[%s884 + $0x48] sm:$0xf]
      %v933 = vsel %vm887, %v672, %v932
      %934 = vst [vmem:[%s884 + $0x48] sm:$0xf] %v933
      %935 = vst [vmem:[%s884 + $0x4c] sm:$0xf] %v681
      %v936 = vld [vmem:[%s884 + $0x50] sm:$0x1]
      %v937 = vsel %vm893, %v682, %v936
      %938 = vst [vmem:[%s884 + $0x50] sm:$0x1] %v937
      %v939 = vld [vmem:[%s884 + $0x54] sm:$0xf]
      %v940 = vsel %vm887, %v689, %v939
      %941 = vst [vmem:[%s884 + $0x54] sm:$0xf] %v940
      %942 = vst [vmem:[%s884 + $0x58] sm:$0xf] %v698
      %v943 = vld [vmem:[%s884 + $0x5c] sm:$0x1]
      %v944 = vsel %vm893, %v699, %v943
      %945 = vst [vmem:[%s884 + $0x5c] sm:$0x1] %v944
      %v946 = vld [vmem:[%s884 + $0x60] sm:$0xf]
      %v947 = vsel %vm887, %v706, %v946
      %948 = vst [vmem:[%s884 + $0x60] sm:$0xf] %v947
      %949 = vst [vmem:[%s884 + $0x64] sm:$0xf] %v715
      %v950 = vld [vmem:[%s884 + $0x68] sm:$0x1]
      %v951 = vsel %vm893, %v716, %v950
      %952 = vst [vmem:[%s884 + $0x68] sm:$0x1] %v951
      %v953 = vld [vmem:[%s884 + $0x6c] sm:$0xf]
      %v954 = vsel %vm887, %v723, %v953
      %955 = vst [vmem:[%s884 + $0x6c] sm:$0xf] %v954
      %956 = vst [vmem:[%s884 + $0x70] sm:$0xf] %v732
      %v957 = vld [vmem:[%s884 + $0x74] sm:$0x1]
      %v958 = vsel %vm893, %v733, %v957
      %959 = vst [vmem:[%s884 + $0x74] sm:$0x1] %v958
      %v960 = vld [vmem:[%s884 + $0x78] sm:$0xf]
      %v961 = vsel %vm887, %v740, %v960
      %962 = vst [vmem:[%s884 + $0x78] sm:$0xf] %v961
      %963 = vst [vmem:[%s884 + $0x7c] sm:$0xf] %v749
      %v964 = vld [vmem:[%s884 + $0x80] sm:$0x1]
      %v965 = vsel %vm893, %v750, %v964
      %966 = vst [vmem:[%s884 + $0x80] sm:$0x1] %v965
      %v967 = vld [vmem:[%s884 + $0x84] sm:$0xf]
      %v968 = vsel %vm887, %v757, %v967
      %969 = vst [vmem:[%s884 + $0x84] sm:$0xf] %v968
      %970 = vst [vmem:[%s884 + $0x88] sm:$0xf] %v766
      %v971 = vld [vmem:[%s884 + $0x8c] sm:$0x1]
      %v972 = vsel %vm893, %v767, %v971
      %973 = vst [vmem:[%s884 + $0x8c] sm:$0x1] %v972
      %v974 = vld [vmem:[%s884 + $0x90] sm:$0xf]
      %v975 = vsel %vm887, %v774, %v974
      %976 = vst [vmem:[%s884 + $0x90] sm:$0xf] %v975
      %977 = vst [vmem:[%s884 + $0x94] sm:$0xf] %v783
      %v978 = vld [vmem:[%s884 + $0x98] sm:$0x1]
      %v979 = vsel %vm893, %v784, %v978
      %980 = vst [vmem:[%s884 + $0x98] sm:$0x1] %v979
      %v981 = vld [vmem:[%s884 + $0x9c] sm:$0xf]
      %v982 = vsel %vm887, %v791, %v981
      %983 = vst [vmem:[%s884 + $0x9c] sm:$0xf] %v982
      %984 = vst [vmem:[%s884 + $0xa0] sm:$0xf] %v800
      %v985 = vld [vmem:[%s884 + $0xa4] sm:$0x1]
      %v986 = vsel %vm893, %v801, %v985
      %987 = vst [vmem:[%s884 + $0xa4] sm:$0x1] %v986
      %v988 = vld [vmem:[%s884 + $0xa8] sm:$0xf]
      %v989 = vsel %vm887, %v808, %v988
      %990 = vst [vmem:[%s884 + $0xa8] sm:$0xf] %v989
      %991 = vst [vmem:[%s884 + $0xac] sm:$0xf] %v817
      %v992 = vld [vmem:[%s884 + $0xb0] sm:$0x1]
      %v993 = vsel %vm893, %v818, %v992
      %994 = vst [vmem:[%s884 + $0xb0] sm:$0x1] %v993
      %v995 = vld [vmem:[%s884 + $0xb4] sm:$0xf]
      %v996 = vsel %vm887, %v825, %v995
      %997 = vst [vmem:[%s884 + $0xb4] sm:$0xf] %v996
      %998 = vst [vmem:[%s884 + $0xb8] sm:$0xf] %v834
      %v999 = vld [vmem:[%s884 + $0xbc] sm:$0x1]
      %v1000 = vsel %vm893, %v835, %v999
      %1001 = vst [vmem:[%s884 + $0xbc] sm:$0x1] %v1000
      %v1002 = vld [vmem:[#allocation2] sm:$0xf]
      %v1003 = vld [vmem:[#allocation2 + $0x4] sm:$0xf]
      %v1004 = vld [vmem:[#allocation2 + $0x8] sm:$0x1]
      %v1005 = vld [vmem:[#allocation2 + $0xc] sm:$0xf]
      %v1006 = vld [vmem:[#allocation2 + $0x10] sm:$0xf]
      %v1007 = vld [vmem:[#allocation2 + $0x14] sm:$0x1]
      %v1008 = vld [vmem:[#allocation2 + $0x18] sm:$0xf]
      %v1009 = vld [vmem:[#allocation2 + $0x1c] sm:$0xf]
      %v1010 = vld [vmem:[#allocation2 + $0x20] sm:$0x1]
      %v1011 = vld [vmem:[#allocation2 + $0x24] sm:$0xf]
      %v1012 = vld [vmem:[#allocation2 + $0x28] sm:$0xf]
      %v1013 = vld [vmem:[#allocation2 + $0x2c] sm:$0x1]
      %v1014 = vld [vmem:[#allocation2 + $0x30] sm:$0xf]
      %v1015 = vld [vmem:[#allocation2 + $0x34] sm:$0xf]
      %v1016 = vld [vmem:[#allocation2 + $0x38] sm:$0x1]
      %v1017 = vld [vmem:[#allocation2 + $0x3c] sm:$0xf]
      %v1018 = vld [vmem:[#allocation2 + $0x40] sm:$0xf]
      %v1019 = vld [vmem:[#allocation2 + $0x44] sm:$0x1]
      %v1020 = vld [vmem:[#allocation2 + $0x48] sm:$0xf]
      %v1021 = vld [vmem:[#allocation2 + $0x4c] sm:$0xf]
      %v1022 = vld [vmem:[#allocation2 + $0x50] sm:$0x1]
      %v1023 = vld [vmem:[#allocation2 + $0x54] sm:$0xf]
      %v1024 = vld [vmem:[#allocation2 + $0x58] sm:$0xf]
      %v1025 = vld [vmem:[#allocation2 + $0x5c] sm:$0x1]
      %v1026 = vld [vmem:[#allocation2 + $0x60] sm:$0xf]
      %v1027 = vld [vmem:[#allocation2 + $0x64] sm:$0xf]
      %v1028 = vld [vmem:[#allocation2 + $0x68] sm:$0x1]
      %v1029 = vld [vmem:[#allocation2 + $0x6c] sm:$0xf]
      %v1030 = vld [vmem:[#allocation2 + $0x70] sm:$0xf]
      %v1031 = vld [vmem:[#allocation2 + $0x74] sm:$0x1]
      %v1032 = vld [vmem:[#allocation2 + $0x78] sm:$0xf]
      %v1033 = vld [vmem:[#allocation2 + $0x7c] sm:$0xf]
      %v1034 = vld [vmem:[#allocation2 + $0x80] sm:$0x1]
      %v1035 = vld [vmem:[#allocation2 + $0x84] sm:$0xf]
      %v1036 = vld [vmem:[#allocation2 + $0x88] sm:$0xf]
      %v1037 = vld [vmem:[#allocation2 + $0x8c] sm:$0x1]
      %v1038 = vld [vmem:[#allocation2 + $0x90] sm:$0xf]
      %v1039 = vld [vmem:[#allocation2 + $0x94] sm:$0xf]
      %v1040 = vld [vmem:[#allocation2 + $0x98] sm:$0x1]
      %v1041 = vld [vmem:[#allocation2 + $0x9c] sm:$0xf]
      %v1042 = vld [vmem:[#allocation2 + $0xa0] sm:$0xf]
      %v1043 = vld [vmem:[#allocation2 + $0xa4] sm:$0x1]
      %v1044 = vld [vmem:[#allocation2 + $0xa8] sm:$0xf]
      %v1045 = vld [vmem:[#allocation2 + $0xac] sm:$0xf]
      %v1046 = vld [vmem:[#allocation2 + $0xb0] sm:$0x1]
      %v1047 = vld [vmem:[#allocation2 + $0xb4] sm:$0xf]
      %v1048 = vld [vmem:[#allocation2 + $0xb8] sm:$0xf]
      %v1049 = vld [vmem:[#allocation2 + $0xbc] sm:$0x1]
      %v1050 = vld [vmem:[#allocation2 + $0xc0] sm:$0xf]
      %v1051 = vld [vmem:[#allocation2 + $0xc4] sm:$0xf]
      %v1052 = vld [vmem:[#allocation2 + $0xc8] sm:$0x1]
      %v1053 = vld [vmem:[#allocation2 + $0xcc] sm:$0xf]
      %v1054 = vld [vmem:[#allocation2 + $0xd0] sm:$0xf]
      %v1055 = vld [vmem:[#allocation2 + $0xd4] sm:$0x1]
      %v1088 = vunpack.c.l.b16 %v1002
      %v1089 = vunpack.c.l.b16 %v1003
      %v1090 = vunpack.c.l.b16 %v1005
      %v1091 = vunpack.c.l.b16 %v1006
      %v1092 = vunpack.c.l.b16 %v1008
      %v1093 = vunpack.c.l.b16 %v1009
      %v1094 = vunpack.c.l.b16 %v1011
      %v1095 = vunpack.c.l.b16 %v1012
      %v1096 = vunpack.c.l.b16 %v1014
      %v1097 = vunpack.c.l.b16 %v1015
      %v1098 = vunpack.c.l.b16 %v1017
      %v1099 = vunpack.c.l.b16 %v1018
      %v1100 = vunpack.c.l.b16 %v1020
      %v1101 = vunpack.c.l.b16 %v1021
      %v1102 = vunpack.c.l.b16 %v1023
      %v1103 = vunpack.c.l.b16 %v1024
      %v1104 = vunpack.c.l.b16 %v1026
      %v1105 = vunpack.c.l.b16 %v1027
      %v1106 = vunpack.c.l.b16 %v1029
      %v1107 = vunpack.c.l.b16 %v1030
      %v1108 = vunpack.c.l.b16 %v1032
      %v1109 = vunpack.c.l.b16 %v1033
      %v1110 = vunpack.c.l.b16 %v1035
      %v1111 = vunpack.c.l.b16 %v1036
      %v1112 = vunpack.c.l.b16 %v1038
      %v1113 = vunpack.c.l.b16 %v1039
      %v1114 = vunpack.c.l.b16 %v1041
      %v1115 = vunpack.c.l.b16 %v1042
      %v1116 = vunpack.c.l.b16 %v1044
      %v1117 = vunpack.c.l.b16 %v1045
      %v1118 = vunpack.c.l.b16 %v1047
      %v1119 = vunpack.c.l.b16 %v1048
      %v1120 = vpack.c.b16 %v1089, %v1088
      %v1121 = vpack.c.b16 %v1091, %v1090
      %v1122 = vpack.c.b16 %v1093, %v1092
      %v1123 = vpack.c.b16 %v1095, %v1094
      %v1124 = vpack.c.b16 %v1097, %v1096
      %v1125 = vpack.c.b16 %v1099, %v1098
      %v1126 = vpack.c.b16 %v1101, %v1100
      %v1127 = vpack.c.b16 %v1103, %v1102
      %v1128 = vpack.c.b16 %v1105, %v1104
      %v1129 = vpack.c.b16 %v1107, %v1106
      %v1130 = vpack.c.b16 %v1109, %v1108
      %v1131 = vpack.c.b16 %v1111, %v1110
      %v1132 = vpack.c.b16 %v1113, %v1112
      %v1133 = vpack.c.b16 %v1115, %v1114
      %v1134 = vpack.c.b16 %v1117, %v1116
      %v1135 = vpack.c.b16 %v1119, %v1118
      %v1168 = vunpack.c.l.b16 %v1004
      %v1169 = vunpack.c.l.b16 %v1007
      %v1170 = vunpack.c.l.b16 %v1010
      %v1171 = vunpack.c.l.b16 %v1013
      %v1172 = vunpack.c.l.b16 %v1016
      %v1173 = vunpack.c.l.b16 %v1019
      %v1174 = vunpack.c.l.b16 %v1022
      %v1175 = vunpack.c.l.b16 %v1025
      %v1176 = vunpack.c.l.b16 %v1028
      %v1177 = vunpack.c.l.b16 %v1031
      %v1178 = vunpack.c.l.b16 %v1034
      %v1179 = vunpack.c.l.b16 %v1037
      %v1180 = vunpack.c.l.b16 %v1040
      %v1181 = vunpack.c.l.b16 %v1043
      %v1182 = vunpack.c.l.b16 %v1046
      %v1183 = vunpack.c.l.b16 %v1049
      %v1184 = vpack.c.b16 %v1168, %v1168
      %v1185 = vpack.c.b16 %v1169, %v1169
      %v1186 = vpack.c.b16 %v1170, %v1170
      %v1187 = vpack.c.b16 %v1171, %v1171
      %v1188 = vpack.c.b16 %v1172, %v1172
      %v1189 = vpack.c.b16 %v1173, %v1173
      %v1190 = vpack.c.b16 %v1174, %v1174
      %v1191 = vpack.c.b16 %v1175, %v1175
      %v1192 = vpack.c.b16 %v1176, %v1176
      %v1193 = vpack.c.b16 %v1177, %v1177
      %v1194 = vpack.c.b16 %v1178, %v1178
      %v1195 = vpack.c.b16 %v1179, %v1179
      %v1196 = vpack.c.b16 %v1180, %v1180
      %v1197 = vpack.c.b16 %v1181, %v1181
      %v1198 = vpack.c.b16 %v1182, %v1182
      %v1199 = vpack.c.b16 %v1183, %v1183
      %vm1200 = vsmask.f32 7424
      %v1202 = vshrl.u32 %v1120, 16
      %v1204 = vshll.u32 %v1120, 16
      %v1206 = vrot.slane %v1204, 1
      %v1207 = vor.u32 %v1202, %v1206
      %v1209 = vshll.u32 %v1184, 16
      %v1211 = vrot.slane %v1209, 1
      %v1212 = vsel %vm1200, %v1207, %v1211
      %v1214 = vshrl.u32 %v1121, 16
      %v1216 = vshll.u32 %v1121, 16
      %v1218 = vrot.slane %v1216, 1
      %v1219 = vor.u32 %v1214, %v1218
      %v1221 = vshll.u32 %v1185, 16
      %v1223 = vrot.slane %v1221, 1
      %v1224 = vsel %vm1200, %v1219, %v1223
      %v1226 = vshrl.u32 %v1122, 16
      %v1228 = vshll.u32 %v1122, 16
      %v1230 = vrot.slane %v1228, 1
      %v1231 = vor.u32 %v1226, %v1230
      %v1233 = vshll.u32 %v1186, 16
      %v1235 = vrot.slane %v1233, 1
      %v1236 = vsel %vm1200, %v1231, %v1235
      %v1238 = vshrl.u32 %v1123, 16
      %v1240 = vshll.u32 %v1123, 16
      %v1242 = vrot.slane %v1240, 1
      %v1243 = vor.u32 %v1238, %v1242
      %v1245 = vshll.u32 %v1187, 16
      %v1247 = vrot.slane %v1245, 1
      %v1248 = vsel %vm1200, %v1243, %v1247
      %v1250 = vshrl.u32 %v1124, 16
      %v1252 = vshll.u32 %v1124, 16
      %v1254 = vrot.slane %v1252, 1
      %v1255 = vor.u32 %v1250, %v1254
      %v1257 = vshll.u32 %v1188, 16
      %v1259 = vrot.slane %v1257, 1
      %v1260 = vsel %vm1200, %v1255, %v1259
      %v1262 = vshrl.u32 %v1125, 16
      %v1264 = vshll.u32 %v1125, 16
      %v1266 = vrot.slane %v1264, 1
      %v1267 = vor.u32 %v1262, %v1266
      %v1269 = vshll.u32 %v1189, 16
      %v1271 = vrot.slane %v1269, 1
      %v1272 = vsel %vm1200, %v1267, %v1271
      %v1274 = vshrl.u32 %v1126, 16
      %v1276 = vshll.u32 %v1126, 16
      %v1278 = vrot.slane %v1276, 1
      %v1279 = vor.u32 %v1274, %v1278
      %v1281 = vshll.u32 %v1190, 16
      %v1283 = vrot.slane %v1281, 1
      %v1284 = vsel %vm1200, %v1279, %v1283
      %v1286 = vshrl.u32 %v1127, 16
      %v1288 = vshll.u32 %v1127, 16
      %v1290 = vrot.slane %v1288, 1
      %v1291 = vor.u32 %v1286, %v1290
      %v1293 = vshll.u32 %v1191, 16
      %v1295 = vrot.slane %v1293, 1
      %v1296 = vsel %vm1200, %v1291, %v1295
      %v1298 = vshrl.u32 %v1128, 16
      %v1300 = vshll.u32 %v1128, 16
      %v1302 = vrot.slane %v1300, 1
      %v1303 = vor.u32 %v1298, %v1302
      %v1305 = vshll.u32 %v1192, 16
      %v1307 = vrot.slane %v1305, 1
      %v1308 = vsel %vm1200, %v1303, %v1307
      %v1310 = vshrl.u32 %v1129, 16
      %v1312 = vshll.u32 %v1129, 16
      %v1314 = vrot.slane %v1312, 1
      %v1315 = vor.u32 %v1310, %v1314
      %v1317 = vshll.u32 %v1193, 16
      %v1319 = vrot.slane %v1317, 1
      %v1320 = vsel %vm1200, %v1315, %v1319
      %v1322 = vshrl.u32 %v1130, 16
      %v1324 = vshll.u32 %v1130, 16
      %v1326 = vrot.slane %v1324, 1
      %v1327 = vor.u32 %v1322, %v1326
      %v1329 = vshll.u32 %v1194, 16
      %v1331 = vrot.slane %v1329, 1
      %v1332 = vsel %vm1200, %v1327, %v1331
      %v1334 = vshrl.u32 %v1131, 16
      %v1336 = vshll.u32 %v1131, 16
      %v1338 = vrot.slane %v1336, 1
      %v1339 = vor.u32 %v1334, %v1338
      %v1341 = vshll.u32 %v1195, 16
      %v1343 = vrot.slane %v1341, 1
      %v1344 = vsel %vm1200, %v1339, %v1343
      %v1346 = vshrl.u32 %v1132, 16
      %v1348 = vshll.u32 %v1132, 16
      %v1350 = vrot.slane %v1348, 1
      %v1351 = vor.u32 %v1346, %v1350
      %v1353 = vshll.u32 %v1196, 16
      %v1355 = vrot.slane %v1353, 1
      %v1356 = vsel %vm1200, %v1351, %v1355
      %v1358 = vshrl.u32 %v1133, 16
      %v1360 = vshll.u32 %v1133, 16
      %v1362 = vrot.slane %v1360, 1
      %v1363 = vor.u32 %v1358, %v1362
      %v1365 = vshll.u32 %v1197, 16
      %v1367 = vrot.slane %v1365, 1
      %v1368 = vsel %vm1200, %v1363, %v1367
      %v1370 = vshrl.u32 %v1134, 16
      %v1372 = vshll.u32 %v1134, 16
      %v1374 = vrot.slane %v1372, 1
      %v1375 = vor.u32 %v1370, %v1374
      %v1377 = vshll.u32 %v1198, 16
      %v1379 = vrot.slane %v1377, 1
      %v1380 = vsel %vm1200, %v1375, %v1379
      %v1382 = vshrl.u32 %v1135, 16
      %v1384 = vshll.u32 %v1135, 16
      %v1386 = vrot.slane %v1384, 1
      %v1387 = vor.u32 %v1382, %v1386
      %v1389 = vshll.u32 %v1199, 16
      %v1391 = vrot.slane %v1389, 1
      %v1392 = vsel %vm1200, %v1387, %v1391
      %vm1409 = vcmask 1046528
      %v1410 = vrot.slane %v1120, 1
      %v1411 = vrot.slane %v1184, 1
      %v1412 = vsel %vm1409, %v1410, %v1411
      %v1413 = vrot.slane %v1121, 1
      %v1414 = vrot.slane %v1185, 1
      %v1415 = vsel %vm1409, %v1413, %v1414
      %v1416 = vrot.slane %v1122, 1
      %v1417 = vrot.slane %v1186, 1
      %v1418 = vsel %vm1409, %v1416, %v1417
      %v1419 = vrot.slane %v1123, 1
      %v1420 = vrot.slane %v1187, 1
      %v1421 = vsel %vm1409, %v1419, %v1420
      %v1422 = vrot.slane %v1124, 1
      %v1423 = vrot.slane %v1188, 1
      %v1424 = vsel %vm1409, %v1422, %v1423
      %v1425 = vrot.slane %v1125, 1
      %v1426 = vrot.slane %v1189, 1
      %v1427 = vsel %vm1409, %v1425, %v1426
      %v1428 = vrot.slane %v1126, 1
      %v1429 = vrot.slane %v1190, 1
      %v1430 = vsel %vm1409, %v1428, %v1429
      %v1431 = vrot.slane %v1127, 1
      %v1432 = vrot.slane %v1191, 1
      %v1433 = vsel %vm1409, %v1431, %v1432
      %v1434 = vrot.slane %v1128, 1
      %v1435 = vrot.slane %v1192, 1
      %v1436 = vsel %vm1409, %v1434, %v1435
      %v1437 = vrot.slane %v1129, 1
      %v1438 = vrot.slane %v1193, 1
      %v1439 = vsel %vm1409, %v1437, %v1438
      %v1440 = vrot.slane %v1130, 1
      %v1441 = vrot.slane %v1194, 1
      %v1442 = vsel %vm1409, %v1440, %v1441
      %v1443 = vrot.slane %v1131, 1
      %v1444 = vrot.slane %v1195, 1
      %v1445 = vsel %vm1409, %v1443, %v1444
      %v1446 = vrot.slane %v1132, 1
      %v1447 = vrot.slane %v1196, 1
      %v1448 = vsel %vm1409, %v1446, %v1447
      %v1449 = vrot.slane %v1133, 1
      %v1450 = vrot.slane %v1197, 1
      %v1451 = vsel %vm1409, %v1449, %v1450
      %v1452 = vrot.slane %v1134, 1
      %v1453 = vrot.slane %v1198, 1
      %v1454 = vsel %vm1409, %v1452, %v1453
      %v1455 = vrot.slane %v1135, 1
      %v1456 = vrot.slane %v1199, 1
      %v1457 = vsel %vm1409, %v1455, %v1456
      %v1476 = vunpack.c.l.b16 %v1050
      %v1477 = vunpack.c.l.b16 %v1051
      %v1478 = vpack.c.b16 %v1477, %v1476
      %v1481 = vunpack.c.l.b16 %v1052
      %v1482 = vpack.c.b16 %v1481, %v1481
      %v1484 = vshrl.u32 %v1478, 16
      %v1486 = vshll.u32 %v1478, 16
      %v1488 = vrot.slane %v1486, 1
      %v1489 = vor.u32 %v1484, %v1488
      %v1491 = vshll.u32 %v1482, 16
      %v1493 = vrot.slane %v1491, 1
      %v1494 = vsel %vm1200, %v1489, %v1493
      %v1496 = vrot.slane %v1478, 1
      %v1497 = vrot.slane %v1482, 1
      %v1498 = vsel %vm1409, %v1496, %v1497
      %v1502 = vunpack.c.l.b16 %v1053
      %v1503 = vunpack.c.l.b16 %v1054
      %v1504 = vpack.c.b16 %v1503, %v1502
      %v1507 = vunpack.c.l.b16 %v1055
      %v1508 = vpack.c.b16 %v1507, %v1507
      %v1510 = vshrl.u32 %v1504, 16
      %v1512 = vshll.u32 %v1504, 16
      %v1514 = vrot.slane %v1512, 1
      %v1515 = vor.u32 %v1510, %v1514
      %v1517 = vshll.u32 %v1508, 16
      %v1519 = vrot.slane %v1517, 1
      %v1520 = vsel %vm1200, %v1515, %v1519
      %v1522 = vrot.slane %v1504, 1
      %v1523 = vrot.slane %v1508, 1
      %v1524 = vsel %vm1409, %v1522, %v1523
      %v1526 = vld [vmem:[%s3] sm:$0xf]
      %v1527 = vld [vmem:[%s3 + $0x4] sm:$0xf]
      %v1528 = vld [vmem:[%s3 + $0x8] sm:$0xf]
      %v1529 = vld [vmem:[%s3 + $0xc] sm:$0xf]
      %v1530 = vld [vmem:[%s3 + $0x10] sm:$0xf]
      %v1531 = vld [vmem:[%s3 + $0x14] sm:$0xf]
      %v1532 = vld [vmem:[%s3 + $0x18] sm:$0xf]
      %v1533 = vld [vmem:[%s3 + $0x1c] sm:$0xf]
      %v1534 = vld [vmem:[%s3 + $0x20] sm:$0xf]
      %v1535 = vld [vmem:[%s3 + $0x24] sm:$0xf]
      %v1536 = vld [vmem:[%s3 + $0x28] sm:$0xf]
      %v1537 = vld [vmem:[%s3 + $0x2c] sm:$0xf]
      %v1538 = vld [vmem:[%s3 + $0x30] sm:$0xf]
      %v1539 = vld [vmem:[%s3 + $0x34] sm:$0xf]
      %v1540 = vld [vmem:[%s3 + $0x38] sm:$0xf]
      %v1541 = vld [vmem:[%s3 + $0x3c] sm:$0xf]
      %v1542 = vld [vmem:[%s3 + $0x40] sm:$0xf]
      %v1543 = vld [vmem:[%s3 + $0x44] sm:$0xf]
      %v1544 = vld [vmem:[%s3 + $0x48] sm:$0xf]
      %v1545 = vld [vmem:[%s3 + $0x4c] sm:$0xf]
      %v1546 = vld [vmem:[%s3 + $0x50] sm:$0xf]
      %v1547 = vld [vmem:[%s3 + $0x54] sm:$0xf]
      %v1548 = vld [vmem:[%s3 + $0x58] sm:$0xf]
      %v1549 = vld [vmem:[%s3 + $0x5c] sm:$0xf]
      %v1550 = vld [vmem:[%s3 + $0x60] sm:$0xf]
      %v1551 = vld [vmem:[%s3 + $0x64] sm:$0xf]
      %v1552 = vld [vmem:[%s3 + $0x68] sm:$0xf]
      %v1553 = vld [vmem:[%s3 + $0x6c] sm:$0xf]
      %v1554 = vld [vmem:[%s3 + $0x70] sm:$0xf]
      %v1555 = vld [vmem:[%s3 + $0x74] sm:$0xf]
      %v1556 = vld [vmem:[%s3 + $0x78] sm:$0xf]
      %v1557 = vld [vmem:[%s3 + $0x7c] sm:$0xf]
      %v1558 = vld [vmem:[%s3 + $0x80] sm:$0xf]
      %v1559 = vld [vmem:[%s3 + $0x84] sm:$0xf]
      %v1560 = vld [vmem:[%s3 + $0x88] sm:$0xf]
      %v1561 = vld [vmem:[%s3 + $0x8c] sm:$0xf]
      %v1562 = vld [vmem:[%s3 + $0x90] sm:$0xf]
      %v1563 = vld [vmem:[%s3 + $0x94] sm:$0xf]
      %v1564 = vld [vmem:[%s3 + $0x98] sm:$0xf]
      %v1565 = vld [vmem:[%s3 + $0x9c] sm:$0xf]
      %v1566 = vld [vmem:[%s3 + $0xa0] sm:$0xf]
      %v1567 = vld [vmem:[%s3 + $0xa4] sm:$0xf]
      %v1568 = vld [vmem:[%s3 + $0xa8] sm:$0xf]
      %v1569 = vld [vmem:[%s3 + $0xac] sm:$0xf]
      %v1570 = vld [vmem:[%s3 + $0xb0] sm:$0xf]
      %v1571 = vld [vmem:[%s3 + $0xb4] sm:$0xf]
      %v1572 = vld [vmem:[%s3 + $0xb8] sm:$0xf]
      %v1573 = vld [vmem:[%s3 + $0xbc] sm:$0xf]
      %v1574 = vld [vmem:[%s3 + $0xc0] sm:$0xf]
      %v1575 = vld [vmem:[%s3 + $0xc4] sm:$0xf]
      %v1576 = vld [vmem:[%s3 + $0xc8] sm:$0xf]
      %v1577 = vld [vmem:[%s3 + $0xcc] sm:$0xf]
      %v1578 = vld [vmem:[%s3 + $0xd0] sm:$0xf]
      %v1579 = vld [vmem:[%s3 + $0xd4] sm:$0xf]
      %v1580 = vld [vmem:[%s3 + $0xd8] sm:$0xf]
      %v1581 = vld [vmem:[%s3 + $0xdc] sm:$0xf]
      %v1582 = vld [vmem:[%s3 + $0xe0] sm:$0xf]
      %v1583 = vld [vmem:[%s3 + $0xe4] sm:$0xf]
      %v1584 = vld [vmem:[%s3 + $0xe8] sm:$0xf]
      %v1585 = vld [vmem:[%s3 + $0xec] sm:$0xf]
      %v1586 = vld [vmem:[%s3 + $0xf0] sm:$0xf]
      %v1587 = vld [vmem:[%s3 + $0xf4] sm:$0xf]
      %v1588 = vld [vmem:[%s3 + $0xf8] sm:$0xf]
      %v1589 = vld [vmem:[%s3 + $0xfc] sm:$0xf]
      %v1590 = vld [vmem:[%s3 + $0x100] sm:$0xf]
      %v1591 = vld [vmem:[%s3 + $0x104] sm:$0xf]
      %v1592 = vld [vmem:[%s3 + $0x108] sm:$0xf]
      %v1593 = vld [vmem:[%s3 + $0x10c] sm:$0xf]
      %v1594 = vld [vmem:[%s3 + $0x110] sm:$0xf]
      %v1595 = vld [vmem:[%s3 + $0x114] sm:$0xf]
      %v1596 = vld [vmem:[%s3 + $0x118] sm:$0xf]
      %v1597 = vld [vmem:[%s3 + $0x11c] sm:$0xf]
      %v1598 = vld [vmem:[%s3 + $0x120] sm:$0xf]
      %v1599 = vld [vmem:[%s3 + $0x124] sm:$0xf]
      %v1600 = vld [vmem:[%s3 + $0x128] sm:$0xf]
      %v1601 = vld [vmem:[%s3 + $0x12c] sm:$0xf]
      %v1602 = vld [vmem:[%s3 + $0x130] sm:$0xf]
      %v1603 = vld [vmem:[%s3 + $0x134] sm:$0xf]
      %v1604 = vld [vmem:[%s3 + $0x138] sm:$0xf]
      %v1605 = vld [vmem:[%s3 + $0x13c] sm:$0xf]
      %v1606 = vld [vmem:[%s3 + $0x140] sm:$0xf]
      %v1607 = vld [vmem:[%s3 + $0x144] sm:$0xf]
      %v1608 = vld [vmem:[%s3 + $0x148] sm:$0xf]
      %v1609 = vld [vmem:[%s3 + $0x14c] sm:$0xf]
      %v1610 = vld [vmem:[%s3 + $0x150] sm:$0xf]
      %v1611 = vld [vmem:[%s3 + $0x154] sm:$0xf]
      %v1612 = vld [vmem:[%s3 + $0x158] sm:$0xf]
      %v1613 = vld [vmem:[%s3 + $0x15c] sm:$0xf]
      %v1614 = vld [vmem:[%s3 + $0x160] sm:$0xf]
      %v1615 = vld [vmem:[%s3 + $0x164] sm:$0xf]
      %v1616 = vld [vmem:[%s3 + $0x168] sm:$0xf]
      %v1617 = vld [vmem:[%s3 + $0x16c] sm:$0xf]
      %v1618 = vld [vmem:[%s3 + $0x170] sm:$0xf]
      %v1619 = vld [vmem:[%s3 + $0x174] sm:$0xf]
      %v1620 = vld [vmem:[%s3 + $0x178] sm:$0xf]
      %v1621 = vld [vmem:[%s3 + $0x17c] sm:$0xf]
      %v1622 = vld [vmem:[%s3 + $0x180] sm:$0xf]
      %v1623 = vld [vmem:[%s3 + $0x184] sm:$0xf]
      %v1624 = vld [vmem:[%s3 + $0x188] sm:$0xf]
      %v1625 = vld [vmem:[%s3 + $0x18c] sm:$0xf]
      %v1626 = vld [vmem:[%s3 + $0x190] sm:$0xf]
      %v1627 = vld [vmem:[%s3 + $0x194] sm:$0xf]
      %v1628 = vld [vmem:[%s3 + $0x198] sm:$0xf]
      %v1629 = vld [vmem:[%s3 + $0x19c] sm:$0xf]
      %v1630 = vld [vmem:[%s3 + $0x1a0] sm:$0xf]
      %v1631 = vld [vmem:[%s3 + $0x1a4] sm:$0xf]
      %v1632 = vld [vmem:[%s3 + $0x1a8] sm:$0xf]
      %v1633 = vld [vmem:[%s3 + $0x1ac] sm:$0xf]
      %v1634 = vld [vmem:[%s3 + $0x1b0] sm:$0xf]
      %v1635 = vld [vmem:[%s3 + $0x1b4] sm:$0xf]
      %v1636 = vld [vmem:[%s3 + $0x1b8] sm:$0xf]
      %v1637 = vld [vmem:[%s3 + $0x1bc] sm:$0xf]
      %v1638 = vld [vmem:[%s3 + $0x1c0] sm:$0xf]
      %v1639 = vld [vmem:[%s3 + $0x1c4] sm:$0xf]
      %v1640 = vld [vmem:[%s3 + $0x1c8] sm:$0xf]
      %v1641 = vld [vmem:[%s3 + $0x1cc] sm:$0xf]
      %v1642 = vld [vmem:[%s3 + $0x1d0] sm:$0xf]
      %v1643 = vld [vmem:[%s3 + $0x1d4] sm:$0xf]
      %v1644 = vld [vmem:[%s3 + $0x1d8] sm:$0xf]
      %v1645 = vld [vmem:[%s3 + $0x1dc] sm:$0xf]
      %v1646 = vld [vmem:[%s3 + $0x1e0] sm:$0xf]
      %v1647 = vld [vmem:[%s3 + $0x1e4] sm:$0xf]
      %v1648 = vld [vmem:[%s3 + $0x1e8] sm:$0xf]
      %v1649 = vld [vmem:[%s3 + $0x1ec] sm:$0xf]
      %v1650 = vld [vmem:[%s3 + $0x1f0] sm:$0xf]
      %v1651 = vld [vmem:[%s3 + $0x1f4] sm:$0xf]
      %v1652 = vld [vmem:[%s3 + $0x1f8] sm:$0xf]
      %v1653 = vld [vmem:[%s3 + $0x1fc] sm:$0xf]
      %v1654 = vld [vmem:[%s3 + $0x200] sm:$0xf]
      %v1655 = vld [vmem:[%s3 + $0x204] sm:$0xf]
      %v1656 = vld [vmem:[%s3 + $0x208] sm:$0xf]
      %v1657 = vld [vmem:[%s3 + $0x20c] sm:$0xf]
      %v1658 = vld [vmem:[%s3 + $0x210] sm:$0xf]
      %v1659 = vld [vmem:[%s3 + $0x214] sm:$0xf]
      %v1660 = vld [vmem:[%s3 + $0x218] sm:$0xf]
      %v1661 = vld [vmem:[%s3 + $0x21c] sm:$0xf]
      %v1662 = vld [vmem:[%s3 + $0x220] sm:$0xf]
      %v1663 = vld [vmem:[%s3 + $0x224] sm:$0xf]
      %v1664 = vld [vmem:[%s3 + $0x228] sm:$0xf]
      %v1665 = vld [vmem:[%s3 + $0x22c] sm:$0xf]
      %v1666 = vld [vmem:[%s3 + $0x230] sm:$0xf]
      %v1667 = vld [vmem:[%s3 + $0x234] sm:$0xf]
      %v1668 = vld [vmem:[%s3 + $0x238] sm:$0xf]
      %v1669 = vld [vmem:[%s3 + $0x23c] sm:$0xf]
      %v1814 = vunpack.c.l.b16 %v1526
      %v1815 = vunpack.c.l.b16 %v1527
      %v1816 = vunpack.c.l.b16 %v1528
      %v1817 = vunpack.c.l.b16 %v1529
      %v1818 = vunpack.c.l.b16 %v1530
      %v1819 = vunpack.c.l.b16 %v1531
      %v1820 = vunpack.c.l.b16 %v1532
      %v1821 = vunpack.c.l.b16 %v1533
      %v1822 = vunpack.c.l.b16 %v1534
      %v1823 = vunpack.c.l.b16 %v1535
      %v1824 = vunpack.c.l.b16 %v1536
      %v1825 = vunpack.c.l.b16 %v1537
      %v1826 = vunpack.c.l.b16 %v1538
      %v1827 = vunpack.c.l.b16 %v1539
      %v1828 = vunpack.c.l.b16 %v1540
      %v1829 = vunpack.c.l.b16 %v1541
      %v1830 = vunpack.c.l.b16 %v1542
      %v1831 = vunpack.c.l.b16 %v1543
      %v1832 = vunpack.c.l.b16 %v1544
      %v1833 = vunpack.c.l.b16 %v1545
      %v1834 = vunpack.c.l.b16 %v1546
      %v1835 = vunpack.c.l.b16 %v1547
      %v1836 = vunpack.c.l.b16 %v1548
      %v1837 = vunpack.c.l.b16 %v1549
      %v1838 = vunpack.c.l.b16 %v1550
      %v1839 = vunpack.c.l.b16 %v1551
      %v1840 = vunpack.c.l.b16 %v1552
      %v1841 = vunpack.c.l.b16 %v1553
      %v1842 = vunpack.c.l.b16 %v1554
      %v1843 = vunpack.c.l.b16 %v1555
      %v1844 = vunpack.c.l.b16 %v1556
      %v1845 = vunpack.c.l.b16 %v1557
      %v1846 = vunpack.c.l.b16 %v1558
      %v1847 = vunpack.c.l.b16 %v1559
      %v1848 = vunpack.c.l.b16 %v1560
      %v1849 = vunpack.c.l.b16 %v1561
      %v1850 = vunpack.c.l.b16 %v1562
      %v1851 = vunpack.c.l.b16 %v1563
      %v1852 = vunpack.c.l.b16 %v1564
      %v1853 = vunpack.c.l.b16 %v1565
      %v1854 = vunpack.c.l.b16 %v1566
      %v1855 = vunpack.c.l.b16 %v1567
      %v1856 = vunpack.c.l.b16 %v1568
      %v1857 = vunpack.c.l.b16 %v1569
      %v1858 = vunpack.c.l.b16 %v1570
      %v1859 = vunpack.c.l.b16 %v1571
      %v1860 = vunpack.c.l.b16 %v1572
      %v1861 = vunpack.c.l.b16 %v1573
      %v1862 = vunpack.c.l.b16 %v1574
      %v1863 = vunpack.c.l.b16 %v1575
      %v1864 = vunpack.c.l.b16 %v1576
      %v1865 = vunpack.c.l.b16 %v1577
      %v1866 = vunpack.c.l.b16 %v1578
      %v1867 = vunpack.c.l.b16 %v1579
      %v1868 = vunpack.c.l.b16 %v1580
      %v1869 = vunpack.c.l.b16 %v1581
      %v1870 = vunpack.c.l.b16 %v1582
      %v1871 = vunpack.c.l.b16 %v1583
      %v1872 = vunpack.c.l.b16 %v1584
      %v1873 = vunpack.c.l.b16 %v1585
      %v1874 = vunpack.c.l.b16 %v1586
      %v1875 = vunpack.c.l.b16 %v1587
      %v1876 = vunpack.c.l.b16 %v1588
      %v1877 = vunpack.c.l.b16 %v1589
      %v1878 = vunpack.c.l.b16 %v1590
      %v1879 = vunpack.c.l.b16 %v1591
      %v1880 = vunpack.c.l.b16 %v1592
      %v1881 = vunpack.c.l.b16 %v1593
      %v1882 = vunpack.c.l.b16 %v1594
      %v1883 = vunpack.c.l.b16 %v1595
      %v1884 = vunpack.c.l.b16 %v1596
      %v1885 = vunpack.c.l.b16 %v1597
      %v1886 = vunpack.c.l.b16 %v1598
      %v1887 = vunpack.c.l.b16 %v1599
      %v1888 = vunpack.c.l.b16 %v1600
      %v1889 = vunpack.c.l.b16 %v1601
      %v1890 = vunpack.c.l.b16 %v1602
      %v1891 = vunpack.c.l.b16 %v1603
      %v1892 = vunpack.c.l.b16 %v1604
      %v1893 = vunpack.c.l.b16 %v1605
      %v1894 = vunpack.c.l.b16 %v1606
      %v1895 = vunpack.c.l.b16 %v1607
      %v1896 = vunpack.c.l.b16 %v1608
      %v1897 = vunpack.c.l.b16 %v1609
      %v1898 = vunpack.c.l.b16 %v1610
      %v1899 = vunpack.c.l.b16 %v1611
      %v1900 = vunpack.c.l.b16 %v1612
      %v1901 = vunpack.c.l.b16 %v1613
      %v1902 = vunpack.c.l.b16 %v1614
      %v1903 = vunpack.c.l.b16 %v1615
      %v1904 = vunpack.c.l.b16 %v1616
      %v1905 = vunpack.c.l.b16 %v1617
      %v1906 = vunpack.c.l.b16 %v1618
      %v1907 = vunpack.c.l.b16 %v1619
      %v1908 = vunpack.c.l.b16 %v1620
      %v1909 = vunpack.c.l.b16 %v1621
      %v1910 = vunpack.c.l.b16 %v1622
      %v1911 = vunpack.c.l.b16 %v1623
      %v1912 = vunpack.c.l.b16 %v1624
      %v1913 = vunpack.c.l.b16 %v1625
      %v1914 = vunpack.c.l.b16 %v1626
      %v1915 = vunpack.c.l.b16 %v1627
      %v1916 = vunpack.c.l.b16 %v1628
      %v1917 = vunpack.c.l.b16 %v1629
      %v1918 = vunpack.c.l.b16 %v1630
      %v1919 = vunpack.c.l.b16 %v1631
      %v1920 = vunpack.c.l.b16 %v1632
      %v1921 = vunpack.c.l.b16 %v1633
      %v1922 = vunpack.c.l.b16 %v1634
      %v1923 = vunpack.c.l.b16 %v1635
      %v1924 = vunpack.c.l.b16 %v1636
      %v1925 = vunpack.c.l.b16 %v1637
      %v1926 = vunpack.c.l.b16 %v1638
      %v1927 = vunpack.c.l.b16 %v1639
      %v1928 = vunpack.c.l.b16 %v1640
      %v1929 = vunpack.c.l.b16 %v1641
      %v1930 = vunpack.c.l.b16 %v1642
      %v1931 = vunpack.c.l.b16 %v1643
      %v1932 = vunpack.c.l.b16 %v1644
      %v1933 = vunpack.c.l.b16 %v1645
      %v1934 = vunpack.c.l.b16 %v1646
      %v1935 = vunpack.c.l.b16 %v1647
      %v1936 = vunpack.c.l.b16 %v1648
      %v1937 = vunpack.c.l.b16 %v1649
      %v1938 = vunpack.c.l.b16 %v1650
      %v1939 = vunpack.c.l.b16 %v1651
      %v1940 = vunpack.c.l.b16 %v1652
      %v1941 = vunpack.c.l.b16 %v1653
      %v1942 = vunpack.c.l.b16 %v1654
      %v1943 = vunpack.c.l.b16 %v1655
      %v1944 = vunpack.c.l.b16 %v1656
      %v1945 = vunpack.c.l.b16 %v1657
      %v1946 = vunpack.c.l.b16 %v1658
      %v1947 = vunpack.c.l.b16 %v1659
      %v1948 = vunpack.c.l.b16 %v1660
      %v1949 = vunpack.c.l.b16 %v1661
      %v1950 = vunpack.c.l.b16 %v1662
      %v1951 = vunpack.c.l.b16 %v1663
      %v1952 = vunpack.c.l.b16 %v1664
      %v1953 = vunpack.c.l.b16 %v1665
      %v1954 = vunpack.c.l.b16 %v1666
      %v1955 = vunpack.c.l.b16 %v1667
      %v1956 = vunpack.c.l.b16 %v1668
      %v1957 = vunpack.c.l.b16 %v1669
      %v1958 = vpack.c.b16 %v1815, %v1814
      %v1959 = vpack.c.b16 %v1817, %v1816
      %v1960 = vpack.c.b16 %v1819, %v1818
      %v1961 = vpack.c.b16 %v1821, %v1820
      %v1962 = vpack.c.b16 %v1823, %v1822
      %v1963 = vpack.c.b16 %v1825, %v1824
      %v1964 = vpack.c.b16 %v1827, %v1826
      %v1965 = vpack.c.b16 %v1829, %v1828
      %v1966 = vpack.c.b16 %v1831, %v1830
      %v1967 = vpack.c.b16 %v1833, %v1832
      %v1968 = vpack.c.b16 %v1835, %v1834
      %v1969 = vpack.c.b16 %v1837, %v1836
      %v1970 = vpack.c.b16 %v1839, %v1838
      %v1971 = vpack.c.b16 %v1841, %v1840
      %v1972 = vpack.c.b16 %v1843, %v1842
      %v1973 = vpack.c.b16 %v1845, %v1844
      %v1974 = vpack.c.b16 %v1847, %v1846
      %v1975 = vpack.c.b16 %v1849, %v1848
      %v1976 = vpack.c.b16 %v1851, %v1850
      %v1977 = vpack.c.b16 %v1853, %v1852
      %v1978 = vpack.c.b16 %v1855, %v1854
      %v1979 = vpack.c.b16 %v1857, %v1856
      %v1980 = vpack.c.b16 %v1859, %v1858
      %v1981 = vpack.c.b16 %v1861, %v1860
      %v1982 = vpack.c.b16 %v1863, %v1862
      %v1983 = vpack.c.b16 %v1865, %v1864
      %v1984 = vpack.c.b16 %v1867, %v1866
      %v1985 = vpack.c.b16 %v1869, %v1868
      %v1986 = vpack.c.b16 %v1871, %v1870
      %v1987 = vpack.c.b16 %v1873, %v1872
      %v1988 = vpack.c.b16 %v1875, %v1874
      %v1989 = vpack.c.b16 %v1877, %v1876
      %v1990 = vpack.c.b16 %v1879, %v1878
      %v1991 = vpack.c.b16 %v1881, %v1880
      %v1992 = vpack.c.b16 %v1883, %v1882
      %v1993 = vpack.c.b16 %v1885, %v1884
      %v1994 = vpack.c.b16 %v1887, %v1886
      %v1995 = vpack.c.b16 %v1889, %v1888
      %v1996 = vpack.c.b16 %v1891, %v1890
      %v1997 = vpack.c.b16 %v1893, %v1892
      %v1998 = vpack.c.b16 %v1895, %v1894
      %v1999 = vpack.c.b16 %v1897, %v1896
      %v2000 = vpack.c.b16 %v1899, %v1898
      %v2001 = vpack.c.b16 %v1901, %v1900
      %v2002 = vpack.c.b16 %v1903, %v1902
      %v2003 = vpack.c.b16 %v1905, %v1904
      %v2004 = vpack.c.b16 %v1907, %v1906
      %v2005 = vpack.c.b16 %v1909, %v1908
      %v2006 = vpack.c.b16 %v1911, %v1910
      %v2007 = vpack.c.b16 %v1913, %v1912
      %v2008 = vpack.c.b16 %v1915, %v1914
      %v2009 = vpack.c.b16 %v1917, %v1916
      %v2010 = vpack.c.b16 %v1919, %v1918
      %v2011 = vpack.c.b16 %v1921, %v1920
      %v2012 = vpack.c.b16 %v1923, %v1922
      %v2013 = vpack.c.b16 %v1925, %v1924
      %v2014 = vpack.c.b16 %v1927, %v1926
      %v2015 = vpack.c.b16 %v1929, %v1928
      %v2016 = vpack.c.b16 %v1931, %v1930
      %v2017 = vpack.c.b16 %v1933, %v1932
      %v2018 = vpack.c.b16 %v1935, %v1934
      %v2019 = vpack.c.b16 %v1937, %v1936
      %v2020 = vpack.c.b16 %v1939, %v1938
      %v2021 = vpack.c.b16 %v1941, %v1940
      %v2022 = vpack.c.b16 %v1943, %v1942
      %v2023 = vpack.c.b16 %v1945, %v1944
      %v2024 = vpack.c.b16 %v1947, %v1946
      %v2025 = vpack.c.b16 %v1949, %v1948
      %v2026 = vpack.c.b16 %v1951, %v1950
      %v2027 = vpack.c.b16 %v1953, %v1952
      %v2028 = vpack.c.b16 %v1955, %v1954
      %v2029 = vpack.c.b16 %v1957, %v1956
      %2102 = vmatprep.subr.bf16.mxu0 0
      %2103 = vmatpush1.bf16.msra.mxu0 %v1965
      %2104 = vmatprep.subr.bf16.mxu0 0
      %2105 = vmatpush1.bf16.msra.mxu0 %v1964
      %2106 = vmatprep.subr.bf16.mxu0 0
      %2107 = vmatpush1.bf16.msra.mxu0 %v1963
      %2108 = vmatprep.subr.bf16.mxu0 0
      %2109 = vmatpush1.bf16.msra.mxu0 %v1962
      %2110 = vmatprep.subr.bf16.mxu0 0
      %2111 = vmatpush1.bf16.msra.mxu0 %v1961
      %2112 = vmatprep.subr.bf16.mxu0 0
      %2113 = vmatpush1.bf16.msra.mxu0 %v1960
      %2114 = vmatprep.subr.bf16.mxu0 0
      %2115 = vmatpush1.bf16.msra.mxu0 %v1959
      %2116 = vmatprep.subr.bf16.mxu0 0
      %2117 = vmatpush1.bf16.msra.mxu0 %v1958
      %2118 = vmatprep.subr.bf16.mxu0 0
      %2119 = vmatpush2.bf16.msra.mxu0 %v1973
      %2120 = vmatprep.subr.bf16.mxu0 0
      %2121 = vmatpush2.bf16.msra.mxu0 %v1972
      %2122 = vmatprep.subr.bf16.mxu0 0
      %2123 = vmatpush2.bf16.msra.mxu0 %v1971
      %2124 = vmatprep.subr.bf16.mxu0 0
      %2125 = vmatpush2.bf16.msra.mxu0 %v1970
      %2126 = vmatprep.subr.bf16.mxu0 0
      %2127 = vmatpush2.bf16.msra.mxu0 %v1969
      %2128 = vmatprep.subr.bf16.mxu0 0
      %2129 = vmatpush2.bf16.msra.mxu0 %v1968
      %2130 = vmatprep.subr.bf16.mxu0 0
      %2131 = vmatpush2.bf16.msra.mxu0 %v1967
      %2132 = vmatprep.subr.bf16.mxu0 0
      %2133 = vmatpush2.bf16.msra.mxu0 %v1966
      %2134 = vmatprep.mubr.bf16.mxu0 %v1212
      %2135 = vmatmul.mubr.bf16.gmra.mxu0 %v1120
      %v2136 = vpop.f32.mrf.mxu0
      %v2137 = vadd.f32 0.0, %v2136
      %v2138 = vpop.f32.mrf.mxu0
      %v2139 = vpop.f32.mrf.mxu0
      %v2140 = vadd.f32 0.0, %v2139
      %v2141 = vpop.f32.mrf.mxu0
      %2142 = vmatprep.mubr.bf16.mxu0 %v1224
      %2143 = vmatmul.mubr.bf16.gmra.mxu0 %v1121
      %v2144 = vpop.f32.mrf.mxu0
      %v2145 = vadd.f32 0.0, %v2144
      %v2146 = vpop.f32.mrf.mxu0
      %v2147 = vpop.f32.mrf.mxu0
      %v2148 = vadd.f32 0.0, %v2147
      %v2149 = vpop.f32.mrf.mxu0
      %2150 = vmatprep.mubr.bf16.mxu0 %v1236
      %2151 = vmatmul.mubr.bf16.gmra.mxu0 %v1122
      %v2152 = vpop.f32.mrf.mxu0
      %v2153 = vadd.f32 0.0, %v2152
      %v2154 = vpop.f32.mrf.mxu0
      %v2155 = vpop.f32.mrf.mxu0
      %v2156 = vadd.f32 0.0, %v2155
      %v2157 = vpop.f32.mrf.mxu0
      %2158 = vmatprep.mubr.bf16.mxu0 %v1248
      %2159 = vmatmul.mubr.bf16.gmra.mxu0 %v1123
      %v2160 = vpop.f32.mrf.mxu0
      %v2161 = vadd.f32 0.0, %v2160
      %v2162 = vpop.f32.mrf.mxu0
      %v2163 = vpop.f32.mrf.mxu0
      %v2164 = vadd.f32 0.0, %v2163
      %v2165 = vpop.f32.mrf.mxu0
      %2166 = vmatprep.mubr.bf16.mxu0 %v1260
      %2167 = vmatmul.mubr.bf16.gmra.mxu0 %v1124
      %v2168 = vpop.f32.mrf.mxu0
      %v2169 = vadd.f32 0.0, %v2168
      %v2170 = vpop.f32.mrf.mxu0
      %v2171 = vpop.f32.mrf.mxu0
      %v2172 = vadd.f32 0.0, %v2171
      %v2173 = vpop.f32.mrf.mxu0
      %2174 = vmatprep.mubr.bf16.mxu0 %v1272
      %2175 = vmatmul.mubr.bf16.gmra.mxu0 %v1125
      %v2176 = vpop.f32.mrf.mxu0
      %v2177 = vadd.f32 0.0, %v2176
      %v2178 = vpop.f32.mrf.mxu0
      %v2179 = vpop.f32.mrf.mxu0
      %v2180 = vadd.f32 0.0, %v2179
      %v2181 = vpop.f32.mrf.mxu0
      %2182 = vmatprep.mubr.bf16.mxu0 %v1284
      %2183 = vmatmul.mubr.bf16.gmra.mxu0 %v1126
      %v2184 = vpop.f32.mrf.mxu0
      %v2185 = vadd.f32 0.0, %v2184
      %v2186 = vpop.f32.mrf.mxu0
      %v2187 = vpop.f32.mrf.mxu0
      %v2188 = vadd.f32 0.0, %v2187
      %v2189 = vpop.f32.mrf.mxu0
      %2190 = vmatprep.mubr.bf16.mxu0 %v1296
      %2191 = vmatmul.mubr.bf16.gmra.mxu0 %v1127
      %v2192 = vpop.f32.mrf.mxu0
      %v2193 = vadd.f32 0.0, %v2192
      %v2194 = vpop.f32.mrf.mxu0
      %v2195 = vpop.f32.mrf.mxu0
      %v2196 = vadd.f32 0.0, %v2195
      %v2197 = vpop.f32.mrf.mxu0
      %2198 = vmatprep.mubr.bf16.mxu0 %v1308
      %2199 = vmatmul.mubr.bf16.gmra.mxu0 %v1128
      %v2200 = vpop.f32.mrf.mxu0
      %v2201 = vadd.f32 0.0, %v2200
      %v2202 = vpop.f32.mrf.mxu0
      %v2203 = vpop.f32.mrf.mxu0
      %v2204 = vadd.f32 0.0, %v2203
      %v2205 = vpop.f32.mrf.mxu0
      %2206 = vmatprep.mubr.bf16.mxu0 %v1320
      %2207 = vmatmul.mubr.bf16.gmra.mxu0 %v1129
      %v2208 = vpop.f32.mrf.mxu0
      %v2209 = vadd.f32 0.0, %v2208
      %v2210 = vpop.f32.mrf.mxu0
      %v2211 = vpop.f32.mrf.mxu0
      %v2212 = vadd.f32 0.0, %v2211
      %v2213 = vpop.f32.mrf.mxu0
      %2214 = vmatprep.mubr.bf16.mxu0 %v1332
      %2215 = vmatmul.mubr.bf16.gmra.mxu0 %v1130
      %v2216 = vpop.f32.mrf.mxu0
      %v2217 = vadd.f32 0.0, %v2216
      %v2218 = vpop.f32.mrf.mxu0
      %v2219 = vpop.f32.mrf.mxu0
      %v2220 = vadd.f32 0.0, %v2219
      %v2221 = vpop.f32.mrf.mxu0
      %2222 = vmatprep.mubr.bf16.mxu0 %v1344
      %2223 = vmatmul.mubr.bf16.gmra.mxu0 %v1131
      %v2224 = vpop.f32.mrf.mxu0
      %v2225 = vadd.f32 0.0, %v2224
      %v2226 = vpop.f32.mrf.mxu0
      %v2227 = vpop.f32.mrf.mxu0
      %v2228 = vadd.f32 0.0, %v2227
      %v2229 = vpop.f32.mrf.mxu0
      %2230 = vmatprep.mubr.bf16.mxu0 %v1356
      %2231 = vmatmul.mubr.bf16.gmra.mxu0 %v1132
      %v2232 = vpop.f32.mrf.mxu0
      %v2233 = vadd.f32 0.0, %v2232
      %v2234 = vpop.f32.mrf.mxu0
      %v2235 = vpop.f32.mrf.mxu0
      %v2236 = vadd.f32 0.0, %v2235
      %v2237 = vpop.f32.mrf.mxu0
      %2238 = vmatprep.mubr.bf16.mxu0 %v1368
      %2239 = vmatmul.mubr.bf16.gmra.mxu0 %v1133
      %v2240 = vpop.f32.mrf.mxu0
      %v2241 = vadd.f32 0.0, %v2240
      %v2242 = vpop.f32.mrf.mxu0
      %v2243 = vpop.f32.mrf.mxu0
      %v2244 = vadd.f32 0.0, %v2243
      %v2245 = vpop.f32.mrf.mxu0
      %2246 = vmatprep.mubr.bf16.mxu0 %v1380
      %2247 = vmatmul.mubr.bf16.gmra.mxu0 %v1134
      %v2248 = vpop.f32.mrf.mxu0
      %v2249 = vadd.f32 0.0, %v2248
      %v2250 = vpop.f32.mrf.mxu0
      %v2251 = vpop.f32.mrf.mxu0
      %v2252 = vadd.f32 0.0, %v2251
      %v2253 = vpop.f32.mrf.mxu0
      %2254 = vmatprep.mubr.bf16.mxu0 %v1392
      %2255 = vmatmul.mubr.bf16.gmra.mxu0 %v1135
      %v2256 = vpop.f32.mrf.mxu0
      %v2257 = vadd.f32 0.0, %v2256
      %v2258 = vpop.f32.mrf.mxu0
      %v2259 = vpop.f32.mrf.mxu0
      %v2260 = vadd.f32 0.0, %v2259
      %v2261 = vpop.f32.mrf.mxu0
      %2262 = vdwg.mxu0
      %2263 = vmatprep.subr.bf16.mxu0 0
      %2264 = vmatpush1.bf16.msra.mxu0 %v1981
      %2265 = vmatprep.subr.bf16.mxu0 0
      %2266 = vmatpush1.bf16.msra.mxu0 %v1980
      %2267 = vmatprep.subr.bf16.mxu0 0
      %2268 = vmatpush1.bf16.msra.mxu0 %v1979
      %2269 = vmatprep.subr.bf16.mxu0 0
      %2270 = vmatpush1.bf16.msra.mxu0 %v1978
      %2271 = vmatprep.subr.bf16.mxu0 0
      %2272 = vmatpush1.bf16.msra.mxu0 %v1977
      %2273 = vmatprep.subr.bf16.mxu0 0
      %2274 = vmatpush1.bf16.msra.mxu0 %v1976
      %2275 = vmatprep.subr.bf16.mxu0 0
      %2276 = vmatpush1.bf16.msra.mxu0 %v1975
      %2277 = vmatprep.subr.bf16.mxu0 0
      %2278 = vmatpush1.bf16.msra.mxu0 %v1974
      %2279 = vmatprep.subr.bf16.mxu0 0
      %2280 = vmatpush2.bf16.msra.mxu0 %v1989
      %2281 = vmatprep.subr.bf16.mxu0 0
      %2282 = vmatpush2.bf16.msra.mxu0 %v1988
      %2283 = vmatprep.subr.bf16.mxu0 0
      %2284 = vmatpush2.bf16.msra.mxu0 %v1987
      %2285 = vmatprep.subr.bf16.mxu0 0
      %2286 = vmatpush2.bf16.msra.mxu0 %v1986
      %2287 = vmatprep.subr.bf16.mxu0 0
      %2288 = vmatpush2.bf16.msra.mxu0 %v1985
      %2289 = vmatprep.subr.bf16.mxu0 0
      %2290 = vmatpush2.bf16.msra.mxu0 %v1984
      %2291 = vmatprep.subr.bf16.mxu0 0
      %2292 = vmatpush2.bf16.msra.mxu0 %v1983
      %2293 = vmatprep.subr.bf16.mxu0 0
      %2294 = vmatpush2.bf16.msra.mxu0 %v1982
      %2295 = vmatprep.mubr.bf16.mxu0 %v1121
      %2296 = vmatmul.mubr.bf16.gmra.mxu0 %v1412
      %v2297 = vpop.f32.mrf.mxu0
      %v2298 = vadd.f32 %v2137, %v2297
      %v2299 = vpop.f32.mrf.mxu0
      %v2300 = vpop.f32.mrf.mxu0
      %v2301 = vadd.f32 %v2140, %v2300
      %v2302 = vpop.f32.mrf.mxu0
      %2303 = vmatprep.mubr.bf16.mxu0 %v1122
      %2304 = vmatmul.mubr.bf16.gmra.mxu0 %v1415
      %v2305 = vpop.f32.mrf.mxu0
      %v2306 = vadd.f32 %v2145, %v2305
      %v2307 = vpop.f32.mrf.mxu0
      %v2308 = vpop.f32.mrf.mxu0
      %v2309 = vadd.f32 %v2148, %v2308
      %v2310 = vpop.f32.mrf.mxu0
      %2311 = vmatprep.mubr.bf16.mxu0 %v1123
      %2312 = vmatmul.mubr.bf16.gmra.mxu0 %v1418
      %v2313 = vpop.f32.mrf.mxu0
      %v2314 = vadd.f32 %v2153, %v2313
      %v2315 = vpop.f32.mrf.mxu0
      %v2316 = vpop.f32.mrf.mxu0
      %v2317 = vadd.f32 %v2156, %v2316
      %v2318 = vpop.f32.mrf.mxu0
      %2319 = vmatprep.mubr.bf16.mxu0 %v1124
      %2320 = vmatmul.mubr.bf16.gmra.mxu0 %v1421
      %v2321 = vpop.f32.mrf.mxu0
      %v2322 = vadd.f32 %v2161, %v2321
      %v2323 = vpop.f32.mrf.mxu0
      %v2324 = vpop.f32.mrf.mxu0
      %v2325 = vadd.f32 %v2164, %v2324
      %v2326 = vpop.f32.mrf.mxu0
      %2327 = vmatprep.mubr.bf16.mxu0 %v1125
      %2328 = vmatmul.mubr.bf16.gmra.mxu0 %v1424
      %v2329 = vpop.f32.mrf.mxu0
      %v2330 = vadd.f32 %v2169, %v2329
      %v2331 = vpop.f32.mrf.mxu0
      %v2332 = vpop.f32.mrf.mxu0
      %v2333 = vadd.f32 %v2172, %v2332
      %v2334 = vpop.f32.mrf.mxu0
      %2335 = vmatprep.mubr.bf16.mxu0 %v1126
      %2336 = vmatmul.mubr.bf16.gmra.mxu0 %v1427
      %v2337 = vpop.f32.mrf.mxu0
      %v2338 = vadd.f32 %v2177, %v2337
      %v2339 = vpop.f32.mrf.mxu0
      %v2340 = vpop.f32.mrf.mxu0
      %v2341 = vadd.f32 %v2180, %v2340
      %v2342 = vpop.f32.mrf.mxu0
      %2343 = vmatprep.mubr.bf16.mxu0 %v1127
      %2344 = vmatmul.mubr.bf16.gmra.mxu0 %v1430
      %v2345 = vpop.f32.mrf.mxu0
      %v2346 = vadd.f32 %v2185, %v2345
      %v2347 = vpop.f32.mrf.mxu0
      %v2348 = vpop.f32.mrf.mxu0
      %v2349 = vadd.f32 %v2188, %v2348
      %v2350 = vpop.f32.mrf.mxu0
      %2351 = vmatprep.mubr.bf16.mxu0 %v1128
      %2352 = vmatmul.mubr.bf16.gmra.mxu0 %v1433
      %v2353 = vpop.f32.mrf.mxu0
      %v2354 = vadd.f32 %v2193, %v2353
      %v2355 = vpop.f32.mrf.mxu0
      %v2356 = vpop.f32.mrf.mxu0
      %v2357 = vadd.f32 %v2196, %v2356
      %v2358 = vpop.f32.mrf.mxu0
      %2359 = vmatprep.mubr.bf16.mxu0 %v1129
      %2360 = vmatmul.mubr.bf16.gmra.mxu0 %v1436
      %v2361 = vpop.f32.mrf.mxu0
      %v2362 = vadd.f32 %v2201, %v2361
      %v2363 = vpop.f32.mrf.mxu0
      %v2364 = vpop.f32.mrf.mxu0
      %v2365 = vadd.f32 %v2204, %v2364
      %v2366 = vpop.f32.mrf.mxu0
      %2367 = vmatprep.mubr.bf16.mxu0 %v1130
      %2368 = vmatmul.mubr.bf16.gmra.mxu0 %v1439
      %v2369 = vpop.f32.mrf.mxu0
      %v2370 = vadd.f32 %v2209, %v2369
      %v2371 = vpop.f32.mrf.mxu0
      %v2372 = vpop.f32.mrf.mxu0
      %v2373 = vadd.f32 %v2212, %v2372
      %v2374 = vpop.f32.mrf.mxu0
      %2375 = vmatprep.mubr.bf16.mxu0 %v1131
      %2376 = vmatmul.mubr.bf16.gmra.mxu0 %v1442
      %v2377 = vpop.f32.mrf.mxu0
      %v2378 = vadd.f32 %v2217, %v2377
      %v2379 = vpop.f32.mrf.mxu0
      %v2380 = vpop.f32.mrf.mxu0
      %v2381 = vadd.f32 %v2220, %v2380
      %v2382 = vpop.f32.mrf.mxu0
      %2383 = vmatprep.mubr.bf16.mxu0 %v1132
      %2384 = vmatmul.mubr.bf16.gmra.mxu0 %v1445
      %v2385 = vpop.f32.mrf.mxu0
      %v2386 = vadd.f32 %v2225, %v2385
      %v2387 = vpop.f32.mrf.mxu0
      %v2388 = vpop.f32.mrf.mxu0
      %v2389 = vadd.f32 %v2228, %v2388
      %v2390 = vpop.f32.mrf.mxu0
      %2391 = vmatprep.mubr.bf16.mxu0 %v1133
      %2392 = vmatmul.mubr.bf16.gmra.mxu0 %v1448
      %v2393 = vpop.f32.mrf.mxu0
      %v2394 = vadd.f32 %v2233, %v2393
      %v2395 = vpop.f32.mrf.mxu0
      %v2396 = vpop.f32.mrf.mxu0
      %v2397 = vadd.f32 %v2236, %v2396
      %v2398 = vpop.f32.mrf.mxu0
      %2399 = vmatprep.mubr.bf16.mxu0 %v1134
      %2400 = vmatmul.mubr.bf16.gmra.mxu0 %v1451
      %v2401 = vpop.f32.mrf.mxu0
      %v2402 = vadd.f32 %v2241, %v2401
      %v2403 = vpop.f32.mrf.mxu0
      %v2404 = vpop.f32.mrf.mxu0
      %v2405 = vadd.f32 %v2244, %v2404
      %v2406 = vpop.f32.mrf.mxu0
      %2407 = vmatprep.mubr.bf16.mxu0 %v1135
      %2408 = vmatmul.mubr.bf16.gmra.mxu0 %v1454
      %v2409 = vpop.f32.mrf.mxu0
      %v2410 = vadd.f32 %v2249, %v2409
      %v2411 = vpop.f32.mrf.mxu0
      %v2412 = vpop.f32.mrf.mxu0
      %v2413 = vadd.f32 %v2252, %v2412
      %v2414 = vpop.f32.mrf.mxu0
      %2415 = vmatprep.mubr.bf16.mxu0 %v1478
      %2416 = vmatmul.mubr.bf16.gmra.mxu0 %v1457
      %v2417 = vpop.f32.mrf.mxu0
      %v2418 = vadd.f32 %v2257, %v2417
      %v2419 = vpop.f32.mrf.mxu0
      %v2420 = vpop.f32.mrf.mxu0
      %v2421 = vadd.f32 %v2260, %v2420
      %v2422 = vpop.f32.mrf.mxu0
      %2423 = vdwg.mxu0
      %2424 = vmatprep.subr.bf16.mxu0 0
      %2425 = vmatpush1.bf16.msra.mxu0 %v1997
      %2426 = vmatprep.subr.bf16.mxu0 0
      %2427 = vmatpush1.bf16.msra.mxu0 %v1996
      %2428 = vmatprep.subr.bf16.mxu0 0
      %2429 = vmatpush1.bf16.msra.mxu0 %v1995
      %2430 = vmatprep.subr.bf16.mxu0 0
      %2431 = vmatpush1.bf16.msra.mxu0 %v1994
      %2432 = vmatprep.subr.bf16.mxu0 0
      %2433 = vmatpush1.bf16.msra.mxu0 %v1993
      %2434 = vmatprep.subr.bf16.mxu0 0
      %2435 = vmatpush1.bf16.msra.mxu0 %v1992
      %2436 = vmatprep.subr.bf16.mxu0 0
      %2437 = vmatpush1.bf16.msra.mxu0 %v1991
      %2438 = vmatprep.subr.bf16.mxu0 0
      %2439 = vmatpush1.bf16.msra.mxu0 %v1990
      %2440 = vmatprep.subr.bf16.mxu0 0
      %2441 = vmatpush2.bf16.msra.mxu0 %v2005
      %2442 = vmatprep.subr.bf16.mxu0 0
      %2443 = vmatpush2.bf16.msra.mxu0 %v2004
      %2444 = vmatprep.subr.bf16.mxu0 0
      %2445 = vmatpush2.bf16.msra.mxu0 %v2003
      %2446 = vmatprep.subr.bf16.mxu0 0
      %2447 = vmatpush2.bf16.msra.mxu0 %v2002
      %2448 = vmatprep.subr.bf16.mxu0 0
      %2449 = vmatpush2.bf16.msra.mxu0 %v2001
      %2450 = vmatprep.subr.bf16.mxu0 0
      %2451 = vmatpush2.bf16.msra.mxu0 %v2000
      %2452 = vmatprep.subr.bf16.mxu0 0
      %2453 = vmatpush2.bf16.msra.mxu0 %v1999
      %2454 = vmatprep.subr.bf16.mxu0 0
      %2455 = vmatpush2.bf16.msra.mxu0 %v1998
      %2456 = vmatprep.mubr.bf16.mxu0 %v1415
      %2457 = vmatmul.mubr.bf16.gmra.mxu0 %v1224
      %v2458 = vpop.f32.mrf.mxu0
      %v2459 = vadd.f32 %v2298, %v2458
      %v2460 = vpop.f32.mrf.mxu0
      %v2461 = vpop.f32.mrf.mxu0
      %v2462 = vadd.f32 %v2301, %v2461
      %v2463 = vpop.f32.mrf.mxu0
      %2464 = vmatprep.mubr.bf16.mxu0 %v1418
      %2465 = vmatmul.mubr.bf16.gmra.mxu0 %v1236
      %v2466 = vpop.f32.mrf.mxu0
      %v2467 = vadd.f32 %v2306, %v2466
      %v2468 = vpop.f32.mrf.mxu0
      %v2469 = vpop.f32.mrf.mxu0
      %v2470 = vadd.f32 %v2309, %v2469
      %v2471 = vpop.f32.mrf.mxu0
      %2472 = vmatprep.mubr.bf16.mxu0 %v1421
      %2473 = vmatmul.mubr.bf16.gmra.mxu0 %v1248
      %v2474 = vpop.f32.mrf.mxu0
      %v2475 = vadd.f32 %v2314, %v2474
      %v2476 = vpop.f32.mrf.mxu0
      %v2477 = vpop.f32.mrf.mxu0
      %v2478 = vadd.f32 %v2317, %v2477
      %v2479 = vpop.f32.mrf.mxu0
      %2480 = vmatprep.mubr.bf16.mxu0 %v1424
      %2481 = vmatmul.mubr.bf16.gmra.mxu0 %v1260
      %v2482 = vpop.f32.mrf.mxu0
      %v2483 = vadd.f32 %v2322, %v2482
      %v2484 = vpop.f32.mrf.mxu0
      %v2485 = vpop.f32.mrf.mxu0
      %v2486 = vadd.f32 %v2325, %v2485
      %v2487 = vpop.f32.mrf.mxu0
      %2488 = vmatprep.mubr.bf16.mxu0 %v1427
      %2489 = vmatmul.mubr.bf16.gmra.mxu0 %v1272
      %v2490 = vpop.f32.mrf.mxu0
      %v2491 = vadd.f32 %v2330, %v2490
      %v2492 = vpop.f32.mrf.mxu0
      %v2493 = vpop.f32.mrf.mxu0
      %v2494 = vadd.f32 %v2333, %v2493
      %v2495 = vpop.f32.mrf.mxu0
      %2496 = vmatprep.mubr.bf16.mxu0 %v1430
      %2497 = vmatmul.mubr.bf16.gmra.mxu0 %v1284
      %v2498 = vpop.f32.mrf.mxu0
      %v2499 = vadd.f32 %v2338, %v2498
      %v2500 = vpop.f32.mrf.mxu0
      %v2501 = vpop.f32.mrf.mxu0
      %v2502 = vadd.f32 %v2341, %v2501
      %v2503 = vpop.f32.mrf.mxu0
      %2504 = vmatprep.mubr.bf16.mxu0 %v1433
      %2505 = vmatmul.mubr.bf16.gmra.mxu0 %v1296
      %v2506 = vpop.f32.mrf.mxu0
      %v2507 = vadd.f32 %v2346, %v2506
      %v2508 = vpop.f32.mrf.mxu0
      %v2509 = vpop.f32.mrf.mxu0
      %v2510 = vadd.f32 %v2349, %v2509
      %v2511 = vpop.f32.mrf.mxu0
      %2512 = vmatprep.mubr.bf16.mxu0 %v1436
      %2513 = vmatmul.mubr.bf16.gmra.mxu0 %v1308
      %v2514 = vpop.f32.mrf.mxu0
      %v2515 = vadd.f32 %v2354, %v2514
      %v2516 = vpop.f32.mrf.mxu0
      %v2517 = vpop.f32.mrf.mxu0
      %v2518 = vadd.f32 %v2357, %v2517
      %v2519 = vpop.f32.mrf.mxu0
      %2520 = vmatprep.mubr.bf16.mxu0 %v1439
      %2521 = vmatmul.mubr.bf16.gmra.mxu0 %v1320
      %v2522 = vpop.f32.mrf.mxu0
      %v2523 = vadd.f32 %v2362, %v2522
      %v2524 = vpop.f32.mrf.mxu0
      %v2525 = vpop.f32.mrf.mxu0
      %v2526 = vadd.f32 %v2365, %v2525
      %v2527 = vpop.f32.mrf.mxu0
      %2528 = vmatprep.mubr.bf16.mxu0 %v1442
      %2529 = vmatmul.mubr.bf16.gmra.mxu0 %v1332
      %v2530 = vpop.f32.mrf.mxu0
      %v2531 = vadd.f32 %v2370, %v2530
      %v2532 = vpop.f32.mrf.mxu0
      %v2533 = vpop.f32.mrf.mxu0
      %v2534 = vadd.f32 %v2373, %v2533
      %v2535 = vpop.f32.mrf.mxu0
      %2536 = vmatprep.mubr.bf16.mxu0 %v1445
      %2537 = vmatmul.mubr.bf16.gmra.mxu0 %v1344
      %v2538 = vpop.f32.mrf.mxu0
      %v2539 = vadd.f32 %v2378, %v2538
      %v2540 = vpop.f32.mrf.mxu0
      %v2541 = vpop.f32.mrf.mxu0
      %v2542 = vadd.f32 %v2381, %v2541
      %v2543 = vpop.f32.mrf.mxu0
      %2544 = vmatprep.mubr.bf16.mxu0 %v1448
      %2545 = vmatmul.mubr.bf16.gmra.mxu0 %v1356
      %v2546 = vpop.f32.mrf.mxu0
      %v2547 = vadd.f32 %v2386, %v2546
      %v2548 = vpop.f32.mrf.mxu0
      %v2549 = vpop.f32.mrf.mxu0
      %v2550 = vadd.f32 %v2389, %v2549
      %v2551 = vpop.f32.mrf.mxu0
      %2552 = vmatprep.mubr.bf16.mxu0 %v1451
      %2553 = vmatmul.mubr.bf16.gmra.mxu0 %v1368
      %v2554 = vpop.f32.mrf.mxu0
      %v2555 = vadd.f32 %v2394, %v2554
      %v2556 = vpop.f32.mrf.mxu0
      %v2557 = vpop.f32.mrf.mxu0
      %v2558 = vadd.f32 %v2397, %v2557
      %v2559 = vpop.f32.mrf.mxu0
      %2560 = vmatprep.mubr.bf16.mxu0 %v1454
      %2561 = vmatmul.mubr.bf16.gmra.mxu0 %v1380
      %v2562 = vpop.f32.mrf.mxu0
      %v2563 = vadd.f32 %v2402, %v2562
      %v2564 = vpop.f32.mrf.mxu0
      %v2565 = vpop.f32.mrf.mxu0
      %v2566 = vadd.f32 %v2405, %v2565
      %v2567 = vpop.f32.mrf.mxu0
      %2568 = vmatprep.mubr.bf16.mxu0 %v1457
      %2569 = vmatmul.mubr.bf16.gmra.mxu0 %v1392
      %v2570 = vpop.f32.mrf.mxu0
      %v2571 = vadd.f32 %v2410, %v2570
      %v2572 = vpop.f32.mrf.mxu0
      %v2573 = vpop.f32.mrf.mxu0
      %v2574 = vadd.f32 %v2413, %v2573
      %v2575 = vpop.f32.mrf.mxu0
      %2576 = vmatprep.mubr.bf16.mxu0 %v1498
      %2577 = vmatmul.mubr.bf16.gmra.mxu0 %v1494
      %v2578 = vpop.f32.mrf.mxu0
      %v2579 = vadd.f32 %v2418, %v2578
      %v2580 = vpop.f32.mrf.mxu0
      %v2581 = vpop.f32.mrf.mxu0
      %v2582 = vadd.f32 %v2421, %v2581
      %v2583 = vpop.f32.mrf.mxu0
      %2584 = vdwg.mxu0
      %2585 = vmatprep.subr.bf16.mxu0 0
      %2586 = vmatpush1.bf16.msra.mxu0 %v2013
      %2587 = vmatprep.subr.bf16.mxu0 0
      %2588 = vmatpush1.bf16.msra.mxu0 %v2012
      %2589 = vmatprep.subr.bf16.mxu0 0
      %2590 = vmatpush1.bf16.msra.mxu0 %v2011
      %2591 = vmatprep.subr.bf16.mxu0 0
      %2592 = vmatpush1.bf16.msra.mxu0 %v2010
      %2593 = vmatprep.subr.bf16.mxu0 0
      %2594 = vmatpush1.bf16.msra.mxu0 %v2009
      %2595 = vmatprep.subr.bf16.mxu0 0
      %2596 = vmatpush1.bf16.msra.mxu0 %v2008
      %2597 = vmatprep.subr.bf16.mxu0 0
      %2598 = vmatpush1.bf16.msra.mxu0 %v2007
      %2599 = vmatprep.subr.bf16.mxu0 0
      %2600 = vmatpush1.bf16.msra.mxu0 %v2006
      %2601 = vmatprep.subr.bf16.mxu0 0
      %2602 = vmatpush2.bf16.msra.mxu0 %v2021
      %2603 = vmatprep.subr.bf16.mxu0 0
      %2604 = vmatpush2.bf16.msra.mxu0 %v2020
      %2605 = vmatprep.subr.bf16.mxu0 0
      %2606 = vmatpush2.bf16.msra.mxu0 %v2019
      %2607 = vmatprep.subr.bf16.mxu0 0
      %2608 = vmatpush2.bf16.msra.mxu0 %v2018
      %2609 = vmatprep.subr.bf16.mxu0 0
      %2610 = vmatpush2.bf16.msra.mxu0 %v2017
      %2611 = vmatprep.subr.bf16.mxu0 0
      %2612 = vmatpush2.bf16.msra.mxu0 %v2016
      %2613 = vmatprep.subr.bf16.mxu0 0
      %2614 = vmatpush2.bf16.msra.mxu0 %v2015
      %2615 = vmatprep.subr.bf16.mxu0 0
      %2616 = vmatpush2.bf16.msra.mxu0 %v2014
      %2617 = vmatprep.mubr.bf16.mxu0 %v1236
      %2618 = vmatmul.mubr.bf16.gmra.mxu0 %v1122
      %v2619 = vpop.f32.mrf.mxu0
      %v2620 = vadd.f32 %v2459, %v2619
      %v2621 = vpop.f32.mrf.mxu0
      %v2622 = vpop.f32.mrf.mxu0
      %v2623 = vadd.f32 %v2462, %v2622
      %v2624 = vpop.f32.mrf.mxu0
      %2625 = vmatprep.mubr.bf16.mxu0 %v1248
      %2626 = vmatmul.mubr.bf16.gmra.mxu0 %v1123
      %v2627 = vpop.f32.mrf.mxu0
      %v2628 = vadd.f32 %v2467, %v2627
      %v2629 = vpop.f32.mrf.mxu0
      %v2630 = vpop.f32.mrf.mxu0
      %v2631 = vadd.f32 %v2470, %v2630
      %v2632 = vpop.f32.mrf.mxu0
      %2633 = vmatprep.mubr.bf16.mxu0 %v1260
      %2634 = vmatmul.mubr.bf16.gmra.mxu0 %v1124
      %v2635 = vpop.f32.mrf.mxu0
      %v2636 = vadd.f32 %v2475, %v2635
      %v2637 = vpop.f32.mrf.mxu0
      %v2638 = vpop.f32.mrf.mxu0
      %v2639 = vadd.f32 %v2478, %v2638
      %v2640 = vpop.f32.mrf.mxu0
      %2641 = vmatprep.mubr.bf16.mxu0 %v1272
      %2642 = vmatmul.mubr.bf16.gmra.mxu0 %v1125
      %v2643 = vpop.f32.mrf.mxu0
      %v2644 = vadd.f32 %v2483, %v2643
      %v2645 = vpop.f32.mrf.mxu0
      %v2646 = vpop.f32.mrf.mxu0
      %v2647 = vadd.f32 %v2486, %v2646
      %v2648 = vpop.f32.mrf.mxu0
      %2649 = vmatprep.mubr.bf16.mxu0 %v1284
      %2650 = vmatmul.mubr.bf16.gmra.mxu0 %v1126
      %v2651 = vpop.f32.mrf.mxu0
      %v2652 = vadd.f32 %v2491, %v2651
      %v2653 = vpop.f32.mrf.mxu0
      %v2654 = vpop.f32.mrf.mxu0
      %v2655 = vadd.f32 %v2494, %v2654
      %v2656 = vpop.f32.mrf.mxu0
      %2657 = vmatprep.mubr.bf16.mxu0 %v1296
      %2658 = vmatmul.mubr.bf16.gmra.mxu0 %v1127
      %v2659 = vpop.f32.mrf.mxu0
      %v2660 = vadd.f32 %v2499, %v2659
      %v2661 = vpop.f32.mrf.mxu0
      %v2662 = vpop.f32.mrf.mxu0
      %v2663 = vadd.f32 %v2502, %v2662
      %v2664 = vpop.f32.mrf.mxu0
      %2665 = vmatprep.mubr.bf16.mxu0 %v1308
      %2666 = vmatmul.mubr.bf16.gmra.mxu0 %v1128
      %v2667 = vpop.f32.mrf.mxu0
      %v2668 = vadd.f32 %v2507, %v2667
      %v2669 = vpop.f32.mrf.mxu0
      %v2670 = vpop.f32.mrf.mxu0
      %v2671 = vadd.f32 %v2510, %v2670
      %v2672 = vpop.f32.mrf.mxu0
      %2673 = vmatprep.mubr.bf16.mxu0 %v1320
      %2674 = vmatmul.mubr.bf16.gmra.mxu0 %v1129
      %v2675 = vpop.f32.mrf.mxu0
      %v2676 = vadd.f32 %v2515, %v2675
      %v2677 = vpop.f32.mrf.mxu0
      %v2678 = vpop.f32.mrf.mxu0
      %v2679 = vadd.f32 %v2518, %v2678
      %v2680 = vpop.f32.mrf.mxu0
      %2681 = vmatprep.mubr.bf16.mxu0 %v1332
      %2682 = vmatmul.mubr.bf16.gmra.mxu0 %v1130
      %v2683 = vpop.f32.mrf.mxu0
      %v2684 = vadd.f32 %v2523, %v2683
      %v2685 = vpop.f32.mrf.mxu0
      %v2686 = vpop.f32.mrf.mxu0
      %v2687 = vadd.f32 %v2526, %v2686
      %v2688 = vpop.f32.mrf.mxu0
      %2689 = vmatprep.mubr.bf16.mxu0 %v1344
      %2690 = vmatmul.mubr.bf16.gmra.mxu0 %v1131
      %v2691 = vpop.f32.mrf.mxu0
      %v2692 = vadd.f32 %v2531, %v2691
      %v2693 = vpop.f32.mrf.mxu0
      %v2694 = vpop.f32.mrf.mxu0
      %v2695 = vadd.f32 %v2534, %v2694
      %v2696 = vpop.f32.mrf.mxu0
      %2697 = vmatprep.mubr.bf16.mxu0 %v1356
      %2698 = vmatmul.mubr.bf16.gmra.mxu0 %v1132
      %v2699 = vpop.f32.mrf.mxu0
      %v2700 = vadd.f32 %v2539, %v2699
      %v2701 = vpop.f32.mrf.mxu0
      %v2702 = vpop.f32.mrf.mxu0
      %v2703 = vadd.f32 %v2542, %v2702
      %v2704 = vpop.f32.mrf.mxu0
      %2705 = vmatprep.mubr.bf16.mxu0 %v1368
      %2706 = vmatmul.mubr.bf16.gmra.mxu0 %v1133
      %v2707 = vpop.f32.mrf.mxu0
      %v2708 = vadd.f32 %v2547, %v2707
      %v2709 = vpop.f32.mrf.mxu0
      %v2710 = vpop.f32.mrf.mxu0
      %v2711 = vadd.f32 %v2550, %v2710
      %v2712 = vpop.f32.mrf.mxu0
      %2713 = vmatprep.mubr.bf16.mxu0 %v1380
      %2714 = vmatmul.mubr.bf16.gmra.mxu0 %v1134
      %v2715 = vpop.f32.mrf.mxu0
      %v2716 = vadd.f32 %v2555, %v2715
      %v2717 = vpop.f32.mrf.mxu0
      %v2718 = vpop.f32.mrf.mxu0
      %v2719 = vadd.f32 %v2558, %v2718
      %v2720 = vpop.f32.mrf.mxu0
      %2721 = vmatprep.mubr.bf16.mxu0 %v1392
      %2722 = vmatmul.mubr.bf16.gmra.mxu0 %v1135
      %v2723 = vpop.f32.mrf.mxu0
      %v2724 = vadd.f32 %v2563, %v2723
      %v2725 = vpop.f32.mrf.mxu0
      %v2726 = vpop.f32.mrf.mxu0
      %v2727 = vadd.f32 %v2566, %v2726
      %v2728 = vpop.f32.mrf.mxu0
      %2729 = vmatprep.mubr.bf16.mxu0 %v1494
      %2730 = vmatmul.mubr.bf16.gmra.mxu0 %v1478
      %v2731 = vpop.f32.mrf.mxu0
      %v2732 = vadd.f32 %v2571, %v2731
      %v2733 = vpop.f32.mrf.mxu0
      %v2734 = vpop.f32.mrf.mxu0
      %v2735 = vadd.f32 %v2574, %v2734
      %v2736 = vpop.f32.mrf.mxu0
      %2737 = vmatprep.mubr.bf16.mxu0 %v1520
      %2738 = vmatmul.mubr.bf16.gmra.mxu0 %v1504
      %v2739 = vpop.f32.mrf.mxu0
      %v2740 = vadd.f32 %v2579, %v2739
      %v2741 = vpop.f32.mrf.mxu0
      %v2742 = vpop.f32.mrf.mxu0
      %v2743 = vadd.f32 %v2582, %v2742
      %v2744 = vpop.f32.mrf.mxu0
      %2745 = vdwg.mxu0
      %2746 = vmatprep.subr.bf16.mxu0 0
      %2747 = vmatpush1.bf16.msra.mxu0 %v2029
      %2748 = vmatprep.subr.bf16.mxu0 0
      %2749 = vmatpush1.bf16.msra.mxu0 %v2028
      %2750 = vmatprep.subr.bf16.mxu0 0
      %2751 = vmatpush1.bf16.msra.mxu0 %v2027
      %2752 = vmatprep.subr.bf16.mxu0 0
      %2753 = vmatpush1.bf16.msra.mxu0 %v2026
      %2754 = vmatprep.subr.bf16.mxu0 0
      %2755 = vmatpush1.bf16.msra.mxu0 %v2025
      %2756 = vmatprep.subr.bf16.mxu0 0
      %2757 = vmatpush1.bf16.msra.mxu0 %v2024
      %2758 = vmatprep.subr.bf16.mxu0 0
      %2759 = vmatpush1.bf16.msra.mxu0 %v2023
      %2760 = vmatprep.subr.bf16.mxu0 0
      %2761 = vmatpush1.bf16.msra.mxu0 %v2022
      %2762 = vmatprep.subr.bf16.mxu0 0
      %2763 = vmatpush2.bf16.msra.mxu0 0
      %2764 = vmatprep.subr.bf16.mxu0 0
      %2765 = vmatpush2.bf16.msra.mxu0 0
      %2766 = vmatprep.subr.bf16.mxu0 0
      %2767 = vmatpush2.bf16.msra.mxu0 0
      %2768 = vmatprep.subr.bf16.mxu0 0
      %2769 = vmatpush2.bf16.msra.mxu0 0
      %2770 = vmatprep.subr.bf16.mxu0 0
      %2771 = vmatpush2.bf16.msra.mxu0 0
      %2772 = vmatprep.subr.bf16.mxu0 0
      %2773 = vmatpush2.bf16.msra.mxu0 0
      %2774 = vmatprep.subr.bf16.mxu0 0
      %2775 = vmatpush2.bf16.msra.mxu0 0
      %2776 = vmatprep.subr.bf16.mxu0 0
      %2777 = vmatpush2.bf16.msra.mxu0 0
      %2778 = vmatprep.mubr.bf16.mxu0 0
      %2779 = vmatmul.mubr.bf16.gmra.mxu0 %v1418
      %v2780 = vpop.f32.mrf.mxu0
      %v2781 = vadd.f32 %v2620, %v2780
      %v2782 = vpop.f32.mrf.mxu0
      %v2783 = vpop.f32.mrf.mxu0
      %v2784 = vadd.f32 %v2623, %v2783
      %v2785 = vpop.f32.mrf.mxu0
      %2786 = vmatprep.mubr.bf16.mxu0 0
      %2787 = vmatmul.mubr.bf16.gmra.mxu0 %v1421
      %v2788 = vpop.f32.mrf.mxu0
      %v2789 = vadd.f32 %v2628, %v2788
      %v2790 = vpop.f32.mrf.mxu0
      %v2791 = vpop.f32.mrf.mxu0
      %v2792 = vadd.f32 %v2631, %v2791
      %v2793 = vpop.f32.mrf.mxu0
      %2794 = vmatprep.mubr.bf16.mxu0 0
      %2795 = vmatmul.mubr.bf16.gmra.mxu0 %v1424
      %v2796 = vpop.f32.mrf.mxu0
      %v2797 = vadd.f32 %v2636, %v2796
      %v2798 = vpop.f32.mrf.mxu0
      %v2799 = vpop.f32.mrf.mxu0
      %v2800 = vadd.f32 %v2639, %v2799
      %v2801 = vpop.f32.mrf.mxu0
      %2802 = vmatprep.mubr.bf16.mxu0 0
      %2803 = vmatmul.mubr.bf16.gmra.mxu0 %v1427
      %v2804 = vpop.f32.mrf.mxu0
      %v2805 = vadd.f32 %v2644, %v2804
      %v2806 = vpop.f32.mrf.mxu0
      %v2807 = vpop.f32.mrf.mxu0
      %v2808 = vadd.f32 %v2647, %v2807
      %v2809 = vpop.f32.mrf.mxu0
      %2810 = vmatprep.mubr.bf16.mxu0 0
      %2811 = vmatmul.mubr.bf16.gmra.mxu0 %v1430
      %v2812 = vpop.f32.mrf.mxu0
      %v2813 = vadd.f32 %v2652, %v2812
      %v2814 = vpop.f32.mrf.mxu0
      %v2815 = vpop.f32.mrf.mxu0
      %v2816 = vadd.f32 %v2655, %v2815
      %v2817 = vpop.f32.mrf.mxu0
      %2818 = vmatprep.mubr.bf16.mxu0 0
      %2819 = vmatmul.mubr.bf16.gmra.mxu0 %v1433
      %v2820 = vpop.f32.mrf.mxu0
      %v2821 = vadd.f32 %v2660, %v2820
      %v2822 = vpop.f32.mrf.mxu0
      %v2823 = vpop.f32.mrf.mxu0
      %v2824 = vadd.f32 %v2663, %v2823
      %v2825 = vpop.f32.mrf.mxu0
      %2826 = vmatprep.mubr.bf16.mxu0 0
      %2827 = vmatmul.mubr.bf16.gmra.mxu0 %v1436
      %v2828 = vpop.f32.mrf.mxu0
      %v2829 = vadd.f32 %v2668, %v2828
      %v2830 = vpop.f32.mrf.mxu0
      %v2831 = vpop.f32.mrf.mxu0
      %v2832 = vadd.f32 %v2671, %v2831
      %v2833 = vpop.f32.mrf.mxu0
      %2834 = vmatprep.mubr.bf16.mxu0 0
      %2835 = vmatmul.mubr.bf16.gmra.mxu0 %v1439
      %v2836 = vpop.f32.mrf.mxu0
      %v2837 = vadd.f32 %v2676, %v2836
      %v2838 = vpop.f32.mrf.mxu0
      %v2839 = vpop.f32.mrf.mxu0
      %v2840 = vadd.f32 %v2679, %v2839
      %v2841 = vpop.f32.mrf.mxu0
      %2842 = vmatprep.mubr.bf16.mxu0 0
      %2843 = vmatmul.mubr.bf16.gmra.mxu0 %v1442
      %v2844 = vpop.f32.mrf.mxu0
      %v2845 = vadd.f32 %v2684, %v2844
      %v2846 = vpop.f32.mrf.mxu0
      %v2847 = vpop.f32.mrf.mxu0
      %v2848 = vadd.f32 %v2687, %v2847
      %v2849 = vpop.f32.mrf.mxu0
      %2850 = vmatprep.mubr.bf16.mxu0 0
      %2851 = vmatmul.mubr.bf16.gmra.mxu0 %v1445
      %v2852 = vpop.f32.mrf.mxu0
      %v2853 = vadd.f32 %v2692, %v2852
      %v2854 = vpop.f32.mrf.mxu0
      %v2855 = vpop.f32.mrf.mxu0
      %v2856 = vadd.f32 %v2695, %v2855
      %v2857 = vpop.f32.mrf.mxu0
      %2858 = vmatprep.mubr.bf16.mxu0 0
      %2859 = vmatmul.mubr.bf16.gmra.mxu0 %v1448
      %v2860 = vpop.f32.mrf.mxu0
      %v2861 = vadd.f32 %v2700, %v2860
      %v2862 = vpop.f32.mrf.mxu0
      %v2863 = vpop.f32.mrf.mxu0
      %v2864 = vadd.f32 %v2703, %v2863
      %v2865 = vpop.f32.mrf.mxu0
      %2866 = vmatprep.mubr.bf16.mxu0 0
      %2867 = vmatmul.mubr.bf16.gmra.mxu0 %v1451
      %v2868 = vpop.f32.mrf.mxu0
      %v2869 = vadd.f32 %v2708, %v2868
      %v2870 = vpop.f32.mrf.mxu0
      %v2871 = vpop.f32.mrf.mxu0
      %v2872 = vadd.f32 %v2711, %v2871
      %v2873 = vpop.f32.mrf.mxu0
      %2874 = vmatprep.mubr.bf16.mxu0 0
      %2875 = vmatmul.mubr.bf16.gmra.mxu0 %v1454
      %v2876 = vpop.f32.mrf.mxu0
      %v2877 = vadd.f32 %v2716, %v2876
      %v2878 = vpop.f32.mrf.mxu0
      %v2879 = vpop.f32.mrf.mxu0
      %v2880 = vadd.f32 %v2719, %v2879
      %v2881 = vpop.f32.mrf.mxu0
      %2882 = vmatprep.mubr.bf16.mxu0 0
      %2883 = vmatmul.mubr.bf16.gmra.mxu0 %v1457
      %v2884 = vpop.f32.mrf.mxu0
      %v2885 = vadd.f32 %v2724, %v2884
      %v2886 = vpop.f32.mrf.mxu0
      %v2887 = vpop.f32.mrf.mxu0
      %v2888 = vadd.f32 %v2727, %v2887
      %v2889 = vpop.f32.mrf.mxu0
      %2890 = vmatprep.mubr.bf16.mxu0 0
      %2891 = vmatmul.mubr.bf16.gmra.mxu0 %v1498
      %v2892 = vpop.f32.mrf.mxu0
      %v2893 = vadd.f32 %v2732, %v2892
      %v2894 = vpop.f32.mrf.mxu0
      %v2895 = vpop.f32.mrf.mxu0
      %v2896 = vadd.f32 %v2735, %v2895
      %v2897 = vpop.f32.mrf.mxu0
      %2898 = vmatprep.mubr.bf16.mxu0 0
      %2899 = vmatmul.mubr.bf16.gmra.mxu0 %v1524
      %v2900 = vpop.f32.mrf.mxu0
      %v2901 = vadd.f32 %v2740, %v2900
      %v2902 = vpop.f32.mrf.mxu0
      %v2903 = vpop.f32.mrf.mxu0
      %v2904 = vadd.f32 %v2743, %v2903
      %v2905 = vpop.f32.mrf.mxu0
      %2906 = vdwg.mxu0
      %v2907 = vpack.c.bf16 %v2784, %v2781
      %v2908 = vpack.c.bf16 %v2792, %v2789
      %v2909 = vpack.c.bf16 %v2800, %v2797
      %v2910 = vpack.c.bf16 %v2808, %v2805
      %v2911 = vpack.c.bf16 %v2816, %v2813
      %v2912 = vpack.c.bf16 %v2824, %v2821
      %v2913 = vpack.c.bf16 %v2832, %v2829
      %v2914 = vpack.c.bf16 %v2840, %v2837
      %v2915 = vpack.c.bf16 %v2848, %v2845
      %v2916 = vpack.c.bf16 %v2856, %v2853
      %v2917 = vpack.c.bf16 %v2864, %v2861
      %v2918 = vpack.c.bf16 %v2872, %v2869
      %v2919 = vpack.c.bf16 %v2880, %v2877
      %v2920 = vpack.c.bf16 %v2888, %v2885
      %v2921 = vpack.c.bf16 %v2896, %v2893
      %v2922 = vpack.c.bf16 %v2904, %v2901
      %v2939 = vunpack.c.l.b16 %v2907
      %v2940 = vunpack.c.h.b16 %v2907
      %v2941 = vunpack.c.l.b16 %v2908
      %v2942 = vunpack.c.h.b16 %v2908
      %v2943 = vunpack.c.l.b16 %v2909
      %v2944 = vunpack.c.h.b16 %v2909
      %v2945 = vunpack.c.l.b16 %v2910
      %v2946 = vunpack.c.h.b16 %v2910
      %v2947 = vunpack.c.l.b16 %v2911
      %v2948 = vunpack.c.h.b16 %v2911
      %v2949 = vunpack.c.l.b16 %v2912
      %v2950 = vunpack.c.h.b16 %v2912
      %v2951 = vunpack.c.l.b16 %v2913
      %v2952 = vunpack.c.h.b16 %v2913
      %v2953 = vunpack.c.l.b16 %v2914
      %v2954 = vunpack.c.h.b16 %v2914
      %v2955 = vunpack.c.l.b16 %v2915
      %v2956 = vunpack.c.h.b16 %v2915
      %v2957 = vunpack.c.l.b16 %v2916
      %v2958 = vunpack.c.h.b16 %v2916
      %v2959 = vunpack.c.l.b16 %v2917
      %v2960 = vunpack.c.h.b16 %v2917
      %v2961 = vunpack.c.l.b16 %v2918
      %v2962 = vunpack.c.h.b16 %v2918
      %v2963 = vunpack.c.l.b16 %v2919
      %v2964 = vunpack.c.h.b16 %v2919
      %v2965 = vunpack.c.l.b16 %v2920
      %v2966 = vunpack.c.h.b16 %v2920
      %v2967 = vunpack.c.l.b16 %v2921
      %v2968 = vunpack.c.h.b16 %v2921
      %v2969 = vunpack.c.l.b16 %v2922
      %v2970 = vunpack.c.h.b16 %v2922
      %v2971 = vpack.c.b16 %v2939, %v2939
      %v2972 = vpack.c.b16 %v2940, %v2940
      %v2973 = vpack.c.b16 %v2941, %v2941
      %v2974 = vpack.c.b16 %v2942, %v2942
      %v2975 = vpack.c.b16 %v2943, %v2943
      %v2976 = vpack.c.b16 %v2944, %v2944
      %v2977 = vpack.c.b16 %v2945, %v2945
      %v2978 = vpack.c.b16 %v2946, %v2946
      %v2979 = vpack.c.b16 %v2947, %v2947
      %v2980 = vpack.c.b16 %v2948, %v2948
      %v2981 = vpack.c.b16 %v2949, %v2949
      %v2982 = vpack.c.b16 %v2950, %v2950
      %v2983 = vpack.c.b16 %v2951, %v2951
      %v2984 = vpack.c.b16 %v2952, %v2952
      %v2985 = vpack.c.b16 %v2953, %v2953
      %v2986 = vpack.c.b16 %v2954, %v2954
      %v2987 = vpack.c.b16 %v2955, %v2955
      %v2988 = vpack.c.b16 %v2956, %v2956
      %v2989 = vpack.c.b16 %v2957, %v2957
      %v2990 = vpack.c.b16 %v2958, %v2958
      %v2991 = vpack.c.b16 %v2959, %v2959
      %v2992 = vpack.c.b16 %v2960, %v2960
      %v2993 = vpack.c.b16 %v2961, %v2961
      %v2994 = vpack.c.b16 %v2962, %v2962
      %v2995 = vpack.c.b16 %v2963, %v2963
      %v2996 = vpack.c.b16 %v2964, %v2964
      %v2997 = vpack.c.b16 %v2965, %v2965
      %v2998 = vpack.c.b16 %v2966, %v2966
      %v2999 = vpack.c.b16 %v2967, %v2967
      %v3000 = vpack.c.b16 %v2968, %v2968
      %v3001 = vpack.c.b16 %v2969, %v2969
      %v3002 = vpack.c.b16 %v2970, %v2970
      %3035 = vst [vmem:[%s231] sm:$0xf] %v2971
      %3036 = vst [vmem:[%s231 + $0x4] sm:$0xf] %v2972
      %3037 = vst [vmem:[%s231 + $0x8] sm:$0xf] %v2973
      %3038 = vst [vmem:[%s231 + $0xc] sm:$0xf] %v2974
      %3039 = vst [vmem:[%s231 + $0x10] sm:$0xf] %v2975
      %3040 = vst [vmem:[%s231 + $0x14] sm:$0xf] %v2976
      %3041 = vst [vmem:[%s231 + $0x18] sm:$0xf] %v2977
      %3042 = vst [vmem:[%s231 + $0x1c] sm:$0xf] %v2978
      %3043 = vst [vmem:[%s231 + $0x20] sm:$0xf] %v2979
      %3044 = vst [vmem:[%s231 + $0x24] sm:$0xf] %v2980
      %3045 = vst [vmem:[%s231 + $0x28] sm:$0xf] %v2981
      %3046 = vst [vmem:[%s231 + $0x2c] sm:$0xf] %v2982
      %3047 = vst [vmem:[%s231 + $0x30] sm:$0xf] %v2983
      %3048 = vst [vmem:[%s231 + $0x34] sm:$0xf] %v2984
      %3049 = vst [vmem:[%s231 + $0x38] sm:$0xf] %v2985
      %3050 = vst [vmem:[%s231 + $0x3c] sm:$0xf] %v2986
      %3051 = vst [vmem:[%s231 + $0x40] sm:$0xf] %v2987
      %3052 = vst [vmem:[%s231 + $0x44] sm:$0xf] %v2988
      %3053 = vst [vmem:[%s231 + $0x48] sm:$0xf] %v2989
      %3054 = vst [vmem:[%s231 + $0x4c] sm:$0xf] %v2990
      %3055 = vst [vmem:[%s231 + $0x50] sm:$0xf] %v2991
      %3056 = vst [vmem:[%s231 + $0x54] sm:$0xf] %v2992
      %3057 = vst [vmem:[%s231 + $0x58] sm:$0xf] %v2993
      %3058 = vst [vmem:[%s231 + $0x5c] sm:$0xf] %v2994
      %3059 = vst [vmem:[%s231 + $0x60] sm:$0xf] %v2995
      %3060 = vst [vmem:[%s231 + $0x64] sm:$0xf] %v2996
      %3061 = vst [vmem:[%s231 + $0x68] sm:$0xf] %v2997
      %3062 = vst [vmem:[%s231 + $0x6c] sm:$0xf] %v2998
      %3063 = vst [vmem:[%s231 + $0x70] sm:$0xf] %v2999
      %3064 = vst [vmem:[%s231 + $0x74] sm:$0xf] %v3000
      %3065 = vst [vmem:[%s231 + $0x78] sm:$0xf] %v3001
      %3066 = vst [vmem:[%s231 + $0x7c] sm:$0xf] %v3002
      %v3067 = vadd.f32 %v2781, %v2784
      %v3068 = vadd.f32 %v3067, %v2789
      %v3069 = vadd.f32 %v3068, %v2792
      %v3070 = vadd.f32 %v3069, %v2797
      %v3071 = vadd.f32 %v3070, %v2800
      %v3072 = vadd.f32 %v3071, %v2805
      %v3073 = vadd.f32 %v3072, %v2808
      %v3074 = vadd.f32 %v3073, %v2813
      %v3075 = vadd.f32 %v3074, %v2816
      %v3076 = vadd.f32 %v3075, %v2821
      %v3077 = vadd.f32 %v3076, %v2824
      %v3078 = vadd.f32 %v3077, %v2829
      %v3079 = vadd.f32 %v3078, %v2832
      %v3080 = vadd.f32 %v3079, %v2837
      %v3081 = vadd.f32 %v3080, %v2840
      %v3082 = vadd.f32 %v3081, %v2845
      %v3083 = vadd.f32 %v3082, %v2848
      %v3084 = vadd.f32 %v3083, %v2853
      %v3085 = vadd.f32 %v3084, %v2856
      %v3086 = vadd.f32 %v3085, %v2861
      %v3087 = vadd.f32 %v3086, %v2864
      %v3088 = vadd.f32 %v3087, %v2869
      %v3089 = vadd.f32 %v3088, %v2872
      %v3090 = vadd.f32 %v3089, %v2877
      %v3091 = vadd.f32 %v3090, %v2880
      %v3092 = vadd.f32 %v3091, %v2885
      %v3093 = vadd.f32 %v3092, %v2888
      %v3094 = vadd.f32 %v3093, %v2893
      %v3095 = vadd.f32 %v3094, %v2896
      %v3096 = vadd.f32 %v3095, %v2901
      %v3097 = vadd.f32 %v3096, %v2904
      %v3098 = vrot.slane %v3097, 4
      %v3099 = vadd.f32 %v3097, %v3098
      %v3100 = vrot.slane %v3099, 2
      %v3101 = vadd.f32 %v3099, %v3100
      %v3102 = vrot.slane %v3101, 1
      %v3103 = vadd.f32 %v3101, %v3102
      %v3104 = vmul.f32 %v3103, 0.00390625
      %v3105 = vsub.f32 %v2781, %v3104
      %v3106 = vsub.f32 %v2784, %v3104
      %v3107 = vsub.f32 %v2789, %v3104
      %v3108 = vsub.f32 %v2792, %v3104
      %v3109 = vsub.f32 %v2797, %v3104
      %v3110 = vsub.f32 %v2800, %v3104
      %v3111 = vsub.f32 %v2805, %v3104
      %v3112 = vsub.f32 %v2808, %v3104
      %v3113 = vsub.f32 %v2813, %v3104
      %v3114 = vsub.f32 %v2816, %v3104
      %v3115 = vsub.f32 %v2821, %v3104
      %v3116 = vsub.f32 %v2824, %v3104
      %v3117 = vsub.f32 %v2829, %v3104
      %v3118 = vsub.f32 %v2832, %v3104
      %v3119 = vsub.f32 %v2837, %v3104
      %v3120 = vsub.f32 %v2840, %v3104
      %v3121 = vsub.f32 %v2845, %v3104
      %v3122 = vsub.f32 %v2848, %v3104
      %v3123 = vsub.f32 %v2853, %v3104
      %v3124 = vsub.f32 %v2856, %v3104
      %v3125 = vsub.f32 %v2861, %v3104
      %v3126 = vsub.f32 %v2864, %v3104
      %v3127 = vsub.f32 %v2869, %v3104
      %v3128 = vsub.f32 %v2872, %v3104
      %v3129 = vsub.f32 %v2877, %v3104
      %v3130 = vsub.f32 %v2880, %v3104
      %v3131 = vsub.f32 %v2885, %v3104
      %v3132 = vsub.f32 %v2888, %v3104
      %v3133 = vsub.f32 %v2893, %v3104
      %v3134 = vsub.f32 %v2896, %v3104
      %v3135 = vsub.f32 %v2901, %v3104
      %v3136 = vsub.f32 %v2904, %v3104
      %v3137 = vmul.f32 %v3105, %v3105
      %v3138 = vmul.f32 %v3106, %v3106
      %v3139 = vmul.f32 %v3107, %v3107
      %v3140 = vmul.f32 %v3108, %v3108
      %v3141 = vmul.f32 %v3109, %v3109
      %v3142 = vmul.f32 %v3110, %v3110
      %v3143 = vmul.f32 %v3111, %v3111
      %v3144 = vmul.f32 %v3112, %v3112
      %v3145 = vmul.f32 %v3113, %v3113
      %v3146 = vmul.f32 %v3114, %v3114
      %v3147 = vmul.f32 %v3115, %v3115
      %v3148 = vmul.f32 %v3116, %v3116
      %v3149 = vmul.f32 %v3117, %v3117
      %v3150 = vmul.f32 %v3118, %v3118
      %v3151 = vmul.f32 %v3119, %v3119
      %v3152 = vmul.f32 %v3120, %v3120
      %v3153 = vmul.f32 %v3121, %v3121
      %v3154 = vmul.f32 %v3122, %v3122
      %v3155 = vmul.f32 %v3123, %v3123
      %v3156 = vmul.f32 %v3124, %v3124
      %v3157 = vmul.f32 %v3125, %v3125
      %v3158 = vmul.f32 %v3126, %v3126
      %v3159 = vmul.f32 %v3127, %v3127
      %v3160 = vmul.f32 %v3128, %v3128
      %v3161 = vmul.f32 %v3129, %v3129
      %v3162 = vmul.f32 %v3130, %v3130
      %v3163 = vmul.f32 %v3131, %v3131
      %v3164 = vmul.f32 %v3132, %v3132
      %v3165 = vmul.f32 %v3133, %v3133
      %v3166 = vmul.f32 %v3134, %v3134
      %v3167 = vmul.f32 %v3135, %v3135
      %v3168 = vmul.f32 %v3136, %v3136
      %v3169 = vadd.f32 %v3137, %v3138
      %v3170 = vadd.f32 %v3169, %v3139
      %v3171 = vadd.f32 %v3170, %v3140
      %v3172 = vadd.f32 %v3171, %v3141
      %v3173 = vadd.f32 %v3172, %v3142
      %v3174 = vadd.f32 %v3173, %v3143
      %v3175 = vadd.f32 %v3174, %v3144
      %v3176 = vadd.f32 %v3175, %v3145
      %v3177 = vadd.f32 %v3176, %v3146
      %v3178 = vadd.f32 %v3177, %v3147
      %v3179 = vadd.f32 %v3178, %v3148
      %v3180 = vadd.f32 %v3179, %v3149
      %v3181 = vadd.f32 %v3180, %v3150
      %v3182 = vadd.f32 %v3181, %v3151
      %v3183 = vadd.f32 %v3182, %v3152
      %v3184 = vadd.f32 %v3183, %v3153
      %v3185 = vadd.f32 %v3184, %v3154
      %v3186 = vadd.f32 %v3185, %v3155
      %v3187 = vadd.f32 %v3186, %v3156
      %v3188 = vadd.f32 %v3187, %v3157
      %v3189 = vadd.f32 %v3188, %v3158
      %v3190 = vadd.f32 %v3189, %v3159
      %v3191 = vadd.f32 %v3190, %v3160
      %v3192 = vadd.f32 %v3191, %v3161
      %v3193 = vadd.f32 %v3192, %v3162
      %v3194 = vadd.f32 %v3193, %v3163
      %v3195 = vadd.f32 %v3194, %v3164
      %v3196 = vadd.f32 %v3195, %v3165
      %v3197 = vadd.f32 %v3196, %v3166
      %v3198 = vadd.f32 %v3197, %v3167
      %v3199 = vadd.f32 %v3198, %v3168
      %v3200 = vrot.slane %v3199, 4
      %v3201 = vadd.f32 %v3199, %v3200
      %v3202 = vrot.slane %v3201, 2
      %v3203 = vadd.f32 %v3201, %v3202
      %v3204 = vrot.slane %v3203, 1
      %v3205 = vadd.f32 %v3203, %v3204
      %vm3206 = vcmask 1040384
      %v3207 = vsel %vm3206, %v3103, %v3205
      %3208 = vst [vmem:[%s235] sm:$0x3] %v3207
      %p3209 = scmp.lt.s32.totalorder %s17, 1
      %s3210 = scalar_select %p3209, %s17, 1
      %s3211 = smul.addr %s3210, 32
      %s3212 = smul.addr %s3211, 4
      %s3213 = scalar_lea.vmem %s4, %s3212
      %p3214 = scmp.lt.s32.totalorder %s17, 1
      %s3215 = scalar_select %p3214, %s17, 1
      %s3216 = smul.addr %s3215, 2
      %s3217 = scalar_lea.vmem %s5, %s3216
      // Predicated region
      $region37: #{basic_block_forward.4} parent=35 // pred_check
        %p3218 = pneg %p124
      $region38: #{basic_block_forward.4} parent=35 // pred_check_branch
        %3220 = sbr.rel (%p3218) target = $region40
      $region39: #{basic_block_forward.4} parent=35 // pred_region
        _
      $region40: #{basic_block_forward.4} parent=35 // pred_fallthru
        _
      // Predicated region
      $region41: #{basic_block_forward.4} parent=35 // pred_check
        %p3221 = pneg %p150
      $region42: #{basic_block_forward.4} parent=35 // pred_check_branch
        %3223 = sbr.rel (%p3221) target = $region44
      $region43: #{basic_block_forward.4} parent=35 // pred_region
        _
      $region44: #{basic_block_forward.4} parent=35 // pred_fallthru
        _
    $region36: #{basic_block_forward.4} parent=5 // pred_fallthru
      _
    %p3224 = scmp.le.s32.totalorder 2, %s12
    // Predicated region
    $region45: #{basic_block_forward.4} parent=5 // pred_check
      %p3225 = pneg %p3224
    $region46: #{basic_block_forward.4} parent=5 // pred_check_branch
      %3227 = sbr.rel (%p3225) target = $region48
    $region47: #{basic_block_forward.4} parent=5 // pred_region
      %s3228 = ssub.s32 %s12, 2
      // Predicated region
      $region49: #{basic_block_forward.4} parent=47 // pred_check
        %p3229 = pneg %p130
      $region50: #{basic_block_forward.4} parent=47 // pred_check_branch
        %3231 = sbr.rel (%p3229) target = $region52
      $region51: #{basic_block_forward.4} parent=47 // pred_region
        %p3232 = scmp.lt.s32.totalorder %s18, 1
        %s3233 = scalar_select %p3232, %s18, 1
        %s3234 = smul.addr %s3233, 32
        %s3235 = smul.addr %s3234, 4
        %s3236 = scalar_lea.vmem %s4, %s3235
      $region52: #{basic_block_forward.4} parent=47 // pred_fallthru
        _
      // Predicated region
      $region53: #{basic_block_forward.4} parent=47 // pred_check
        %p3237 = pneg %p156
      $region54: #{basic_block_forward.4} parent=47 // pred_check_branch
        %3239 = sbr.rel (%p3237) target = $region56
      $region55: #{basic_block_forward.4} parent=47 // pred_region
        %p3240 = scmp.lt.s32.totalorder %s18, 1
        %s3241 = scalar_select %p3240, %s18, 1
        %s3242 = smul.addr %s3241, 2
        %s3243 = scalar_lea.vmem %s5, %s3242
      $region56: #{basic_block_forward.4} parent=47 // pred_fallthru
        _
    $region48: #{basic_block_forward.4} parent=5 // pred_fallthru
      _
  $region6: #{basic_block_forward.4} parent=0 // loop_footer
    %s16 = sadd.s32 1, %s12
  $region7: #{basic_block_forward.4} parent=0 // loop_footer_branch
    %11 = sbr.rel target = $region3
  $region8: #{basic_block_forward.4} parent=0 // loop_exit
    _

</llo_original>
